<compile_context>
chip_gen: v6e
topology: v6e:2x2x1
jax: 0.10.0
libtpu: 0.0.40
codegen_flags: <defaults>
</compile_context>

<pallas_src>
import functools

import jax
import jax.numpy as jnp
import numpy as np
from jax import lax
from jax.experimental import pallas as pl
from jax.experimental.pallas import tpu as pltpu


# ----------------------------------------------------------------------------
# decompose_image: cv2.blur (box filter, BORDER_REFLECT_101, anchor=ksize//2)
# re-implemented in plain JAX (in the original it is CPU/numpy preprocessing).
# ----------------------------------------------------------------------------
def _box_blur(x_nhwc, k):
    a = k // 2                       # cv2 anchor for Point(-1,-1)
    pb, pa = a, k - 1 - a            # window rows: i-a .. i-a+k-1

    def blur_axis(y, axis):
        n = y.shape[axis]
        pad = [(0, 0)] * y.ndim
        pad[axis] = (pb, pa)
        yp = jnp.pad(y, pad, mode="reflect")     # == BORDER_REFLECT_101
        acc = jnp.zeros_like(y)
        for j in range(k):
            acc = acc + lax.slice_in_dim(yp, j, j + n, axis=axis)
        return acc / float(k)

    return blur_axis(blur_axis(x_nhwc, 1), 2)


def decompose_image(x_nhwc):
    """x: (B,H,W,C) -> (B,H,W,3C) = [blur8, (blur2-blur8)*15, (x-blur2)*30]."""
    b8 = _box_blur(x_nhwc, 8)
    b2 = _box_blur(x_nhwc, 2)
    return jnp.concatenate([b8, (b2 - b8) * 15.0, (x_nhwc - b2) * 30.0], axis=-1)


# ----------------------------------------------------------------------------
# Fused (im2col-matmul + bias + LeakyReLU) Pallas kernel.  BN scale is already
# folded into the weights, so the epilogue is just +bias (+ LeakyReLU).
# ----------------------------------------------------------------------------
def _make_fused_kernel(act: bool):
    def kernel(x_ref, w_ref, b_ref, o_ref):
        y = jnp.dot(x_ref[...], w_ref[...],
                    preferred_element_type=jnp.float32)   # bf16 x bf16 -> f32
        y = y + b_ref[...]
        if act:
            y = jnp.where(y > 0, y, 0.2 * y)               # LeakyReLU(0.2)
        o_ref[...] = y.astype(o_ref.dtype)
    return kernel


def _round_up(v, m):
    return ((v + m - 1) // m) * m


def _pick_tile_m(M):
    """Biggest useful tile; keep >=2 M-blocks on large layers for v7x (2 TCs)."""
    if M > 1024:
        return 512
    if M > 256:
        return _round_up((M + 1) // 2, 8)   # two blocks
    return M                                # tiny layers: one full block


def fused_matmul_bias_act(cols, w2d, bias, act, out_dtype):
    """cols:(M,K_pad) bf16 @ w2d:(K_pad,N_pad) bf16, +bias (+LeakyReLU)."""
    M, K_pad = cols.shape
    _, N_pad = w2d.shape
    tile_m = _pick_tile_m(M)
    grid_m = pl.cdiv(M, tile_m)

    return pl.pallas_call(
        _make_fused_kernel(act),
        out_shape=jax.ShapeDtypeStruct((M, N_pad), out_dtype),
        grid=(grid_m,),
        in_specs=[
            pl.BlockSpec((tile_m, K_pad), lambda i: (i, 0)),
            pl.BlockSpec((K_pad, N_pad), lambda i: (0, 0)),
            pl.BlockSpec((1, N_pad), lambda i: (0, 0)),
        ],
        out_specs=pl.BlockSpec((tile_m, N_pad), lambda i: (i, 0)),
        compiler_params=pltpu.CompilerParams(dimension_semantics=("parallel",)),
    )(cols, w2d, bias)


# ----------------------------------------------------------------------------
# Conv layer = im2col (glue, emitted directly at lane-padded K width in bf16)
#              + Pallas fused matmul.
# TODO(synk): on v5e a halo-BlockSpec 9-tap in-kernel accumulation would cut
#             the 9x im2col HBM traffic; skipped here (launch-overhead bound
#             at these shapes).
# ----------------------------------------------------------------------------
def _im2col(x_nhwc, k_pad, ksize=3, stride=1, pad=1):
    B, H, W, C = x_nhwc.shape
    xp = jnp.pad(x_nhwc, ((0, 0), (pad, pad), (pad, pad), (0, 0)))
    Ho = (H + 2 * pad - ksize) // stride + 1
    Wo = (W + 2 * pad - ksize) // stride + 1
    cols = []
    for kh in range(ksize):
        for kw in range(ksize):
            cols.append(
                xp[:, kh:kh + stride * Ho:stride, kw:kw + stride * Wo:stride, :]
            )
    extra = k_pad - ksize * ksize * C          # zero K-padding inside the concat
    if extra > 0:
        cols.append(jnp.zeros((B, Ho, Wo, extra), x_nhwc.dtype))
    cols = jnp.concatenate(cols, axis=-1)       # (B,Ho,Wo,K_pad)
    return cols.reshape(B * Ho * Wo, k_pad), (B, Ho, Wo)


def conv_bn_act(x_nhwc, p, stride=1, act=True, out_dtype=jnp.bfloat16):
    cols, (B, Ho, Wo) = _im2col(x_nhwc, p["k_pad"], stride=stride)
    y = fused_matmul_bias_act(cols, p["w"], p["b"], act, out_dtype)
    return y[:, :p["n"]].reshape(B, Ho, Wo, p["n"])


# ----------------------------------------------------------------------------
# Deterministic parameter construction.  BN (eval mode) is folded into the
# weights; weights/bias are stored pre-reshaped, pre-padded and pre-cast so
# the forward path does zero per-call weight prep.
# ----------------------------------------------------------------------------
def _fold_conv(key, c_in, c_out, norm=True):
    k1, k2, k3, k4, k5, k6 = jax.random.split(key, 6)
    w = jax.random.normal(k1, (3, 3, c_in, c_out), jnp.float32) / np.sqrt(9.0 * c_in)
    if norm:
        gamma = 1.0 + 0.1 * jax.random.normal(k2, (c_out,), jnp.float32)
        beta = 0.1 * jax.random.normal(k3, (c_out,), jnp.float32)
        mean = 0.05 * jax.random.normal(k4, (c_out,), jnp.float32)
        var = 0.5 + 0.1 * jnp.abs(jax.random.normal(k5, (c_out,), jnp.float32))
        scale = gamma / jnp.sqrt(var + 1e-5)
        bias = beta - mean * scale
    else:
        scale = jnp.ones((c_out,), jnp.float32)
        bias = 0.1 * jax.random.normal(k6, (c_out,), jnp.float32)
    w_folded = (w * scale).reshape(9 * c_in, c_out)   # BN scale folded into W
    return w_folded, bias


def _pack(w2d, bias):
    K, N = w2d.shape
    K_pad = _round_up(K, 128)
    N_pad = _round_up(N, 128)
    wp = jnp.zeros((K_pad, N_pad), jnp.bfloat16).at[:K, :N].set(
        w2d.astype(jnp.bfloat16))
    bp = jnp.zeros((1, N_pad), jnp.float32).at[0, :N].set(bias)
    return dict(w=wp, b=bp, n=N, k_pad=K_pad)


def make_discriminator_params(key, in_c, out_c):
    channels = [16, 32, 64, 96]
    keys = jax.random.split(key, 7)
    params = dict(
        stem=_pack(*_fold_conv(keys[0], in_c * 3, channels[1])),
        b1=_pack(*_fold_conv(keys[1], channels[1], channels[2])),
        b2=_pack(*_fold_conv(keys[2], channels[2], channels[3])),
        b3=_pack(*_fold_conv(keys[3], channels[3], channels[3])),
        b4=_pack(*_fold_conv(keys[4], channels[3], channels[3])),
    )
    # Block4l + Block4s fused into one matmul (shared im2col input).
    wl, bl = _fold_conv(keys[5], channels[3], out_c // 2, norm=False)
    ws, bs = _fold_conv(keys[6], channels[3], out_c // 2, norm=False)
    params["b4ls"] = _pack(jnp.concatenate([wl, ws], axis=1),
                           jnp.concatenate([bl, bs], axis=0))
    return params


# ----------------------------------------------------------------------------
# Forward pass (matches Discrinator_s.forward).
# ----------------------------------------------------------------------------
def discriminator_s_forward(x_nchw, params):
    # layout: NCHW in, NCHW out (PyTorch convention); NHWC + bf16 inside.
    x = jnp.transpose(x_nchw, (0, 2, 3, 1)).astype(jnp.float32)
    x = decompose_image(x).astype(jnp.bfloat16)               # (B,H,W,3*in_c)
    x = conv_bn_act(x, params["stem"], stride=1, act=True)    # stem_conv
    out1 = conv_bn_act(x, params["b1"], stride=2, act=True)   # Block1 (Downsample)
    out2 = conv_bn_act(out1, params["b2"], stride=2, act=True)  # Block2
    out3 = conv_bn_act(out2, params["b3"], stride=2, act=True)  # Block3
    out4 = conv_bn_act(out3, params["b4"], stride=1, act=True)  # Block4
    # Block4l + Block4s in one fused pallas_call, split along channels.
    out_ls = conv_bn_act(out4, params["b4ls"], stride=1, act=False,
                         out_dtype=jnp.float32)
    half = out_ls.shape[-1] // 2
    out_l, out_s = out_ls[..., :half], out_ls[..., half:]
    return (jnp.transpose(out_l, (0, 3, 1, 2)),
            jnp.transpose(out_s, (0, 3, 1, 2)))


if __name__ == "__main__":
    key = jax.random.PRNGKey(0)
    k_x, k_p = jax.random.split(key)

    B, in_c, H, W = 2, 3, 32, 32
    out_c = 4

    x = jax.random.normal(k_x, (B, in_c, H, W), jnp.float32)
    params = make_discriminator_params(k_p, in_c, out_c)

    # Close over params so padded bf16 weights are jit constants (no per-call
    # weight prep) and the static n / k_pad ints stay Python ints.
    fwd = jax.jit(functools.partial(discriminator_s_forward, params=params))
    out_l, out_s = fwd(x)
    jax.block_until_ready((out_l, out_s))

    assert out_l.shape == (B, out_c // 2, H // 8, W // 8), out_l.shape
    assert out_s.shape == (B, out_c // 2, H // 8, W // 8), out_s.shape
    assert jnp.all(jnp.isfinite(out_l)) and jnp.all(jnp.isfinite(out_s))
    print("KERNEL_OK")
</pallas_src>

<mosaic_0001>
module attributes {stable_mosaic.version = 11 : i64} {
  func.func @kernel(%arg0: i32, %arg1: memref<512x128xbf16, #tpu.memory_space<vmem>>, %arg2: memref<128x128xbf16, #tpu.memory_space<vmem>>, %arg3: memref<1x128xf32, #tpu.memory_space<vmem>>, %arg4: memref<512x128xbf16, #tpu.memory_space<vmem>>) attributes {dimension_semantics = [#tpu.dimension_semantics<parallel>], iteration_bounds = array<i64: 4>, scalar_prefetch = 0 : i64, scratch_operands = 0 : i64, tpu.core_type = #tpu.core_type<tc>, window_params = [{transform_indices = @transform_0, window_bounds = array<i64: 512, 128>}, {pipeline_mode = #tpu.pipeline_mode<synchronous>, transform_indices = @transform_1, window_bounds = array<i64: 128, 128>}, {pipeline_mode = #tpu.pipeline_mode<synchronous>, transform_indices = @transform_2, window_bounds = array<i64: 1, 128>}, {transform_indices = @transform_3, window_bounds = array<i64: 512, 128>}]} {
    %c0 = arith.constant 0 : index
    %c0_0 = arith.constant 0 : index
    %0 = vector.load %arg1[%c0, %c0_0] : memref<512x128xbf16, #tpu.memory_space<vmem>>, vector<512x128xbf16>
    %c0_1 = arith.constant 0 : index
    %c0_2 = arith.constant 0 : index
    %1 = vector.load %arg2[%c0_1, %c0_2] : memref<128x128xbf16, #tpu.memory_space<vmem>>, vector<128x128xbf16>
    %cst = arith.constant dense<0.000000e+00> : vector<512x128xf32>
    %2 = tpu.matmul %0, %1, %cst {dimension_numbers = #tpu.dot_dimension_numbers<[1], [0], [0], [1], [0, 0, 1, 1], [], []>} : vector<512x128xbf16>, vector<128x128xbf16>, vector<512x128xf32> -> vector<512x128xf32>
    %c0_3 = arith.constant 0 : index
    %c0_4 = arith.constant 0 : index
    %3 = vector.load %arg3[%c0_3, %c0_4] : memref<1x128xf32, #tpu.memory_space<vmem>>, vector<1x128xf32>
    %4 = vector.broadcast %3 : vector<1x128xf32> to vector<512x128xf32>
    %5 = arith.addf %2, %4 : vector<512x128xf32>
    %cst_5 = arith.constant 0.000000e+00 : f32
    %6 = vector.broadcast %cst_5 : f32 to vector<512x128xf32>
    %7 = arith.cmpf ogt, %5, %6 : vector<512x128xf32>
    %cst_6 = arith.constant 2.000000e-01 : f32
    %8 = vector.broadcast %cst_6 : f32 to vector<512x128xf32>
    %9 = arith.mulf %8, %5 : vector<512x128xf32>
    %10 = arith.select %7, %5, %9 : vector<512x128xi1>, vector<512x128xf32>
    %11 = arith.truncf %10 : vector<512x128xf32> to vector<512x128xbf16>
    %c0_7 = arith.constant 0 : index
    %c0_8 = arith.constant 0 : index
    %12 = vector.load %arg4[%c0_7, %c0_8] : memref<512x128xbf16, #tpu.memory_space<vmem>>, vector<512x128xbf16>
    tpu.vector_store %arg4[%c0_7, %c0_8], %11 {strides = array<i32>} : memref<512x128xbf16, #tpu.memory_space<vmem>>, vector<512x128xbf16>,
    return
  }
  func.func @transform_0(%arg0: i32) -> (i32, i32) {
    %c0_i32 = arith.constant 0 : i32
    %c0_i32_0 = arith.constant 0 : i32
    return %arg0, %c0_i32 : i32, i32
  }
  func.func @transform_1(%arg0: i32) -> (i32, i32) {
    %c0_i32 = arith.constant 0 : i32
    %c0_i32_0 = arith.constant 0 : i32
    %c0_i32_1 = arith.constant 0 : i32
    return %c0_i32, %c0_i32_0 : i32, i32
  }
  func.func @transform_2(%arg0: i32) -> (i32, i32) {
    %c0_i32 = arith.constant 0 : i32
    %c0_i32_0 = arith.constant 0 : i32
    %c0_i32_1 = arith.constant 0 : i32
    return %c0_i32, %c0_i32_0 : i32, i32
  }
  func.func @transform_3(%arg0: i32) -> (i32, i32) {
    %c0_i32 = arith.constant 0 : i32
    %c0_i32_0 = arith.constant 0 : i32
    return %arg0, %c0_i32 : i32, i32
  }
}

module attributes {stable_mosaic.version = 11 : i64} {
  func.func @kernel(%arg0: i32, %arg1: memref<256x384xbf16, #tpu.memory_space<vmem>>, %arg2: memref<384x128xbf16, #tpu.memory_space<vmem>>, %arg3: memref<1x128xf32, #tpu.memory_space<vmem>>, %arg4: memref<256x128xbf16, #tpu.memory_space<vmem>>) attributes {dimension_semantics = [#tpu.dimension_semantics<parallel>], iteration_bounds = array<i64: 2>, scalar_prefetch = 0 : i64, scratch_operands = 0 : i64, tpu.core_type = #tpu.core_type<tc>, window_params = [{transform_indices = @transform_0, window_bounds = array<i64: 256, 384>}, {pipeline_mode = #tpu.pipeline_mode<synchronous>, transform_indices = @transform_1, window_bounds = array<i64: 384, 128>}, {pipeline_mode = #tpu.pipeline_mode<synchronous>, transform_indices = @transform_2, window_bounds = array<i64: 1, 128>}, {transform_indices = @transform_3, window_bounds = array<i64: 256, 128>}]} {
    %c0 = arith.constant 0 : index
    %c0_0 = arith.constant 0 : index
    %0 = vector.load %arg1[%c0, %c0_0] : memref<256x384xbf16, #tpu.memory_space<vmem>>, vector<256x384xbf16>
    %c0_1 = arith.constant 0 : index
    %c0_2 = arith.constant 0 : index
    %1 = vector.load %arg2[%c0_1, %c0_2] : memref<384x128xbf16, #tpu.memory_space<vmem>>, vector<384x128xbf16>
    %cst = arith.constant dense<0.000000e+00> : vector<256x128xf32>
    %2 = tpu.matmul %0, %1, %cst {dimension_numbers = #tpu.dot_dimension_numbers<[1], [0], [0], [1], [0, 0, 1, 1], [], []>} : vector<256x384xbf16>, vector<384x128xbf16>, vector<256x128xf32> -> vector<256x128xf32>
    %c0_3 = arith.constant 0 : index
    %c0_4 = arith.constant 0 : index
    %3 = vector.load %arg3[%c0_3, %c0_4] : memref<1x128xf32, #tpu.memory_space<vmem>>, vector<1x128xf32>
    %4 = vector.broadcast %3 : vector<1x128xf32> to vector<256x128xf32>
    %5 = arith.addf %2, %4 : vector<256x128xf32>
    %cst_5 = arith.constant 0.000000e+00 : f32
    %6 = vector.broadcast %cst_5 : f32 to vector<256x128xf32>
    %7 = arith.cmpf ogt, %5, %6 : vector<256x128xf32>
    %cst_6 = arith.constant 2.000000e-01 : f32
    %8 = vector.broadcast %cst_6 : f32 to vector<256x128xf32>
    %9 = arith.mulf %8, %5 : vector<256x128xf32>
    %10 = arith.select %7, %5, %9 : vector<256x128xi1>, vector<256x128xf32>
    %11 = arith.truncf %10 : vector<256x128xf32> to vector<256x128xbf16>
    %c0_7 = arith.constant 0 : index
    %c0_8 = arith.constant 0 : index
    %12 = vector.load %arg4[%c0_7, %c0_8] : memref<256x128xbf16, #tpu.memory_space<vmem>>, vector<256x128xbf16>
    tpu.vector_store %arg4[%c0_7, %c0_8], %11 {strides = array<i32>} : memref<256x128xbf16, #tpu.memory_space<vmem>>, vector<256x128xbf16>,
    return
  }
  func.func @transform_0(%arg0: i32) -> (i32, i32) {
    %c0_i32 = arith.constant 0 : i32
    %c0_i32_0 = arith.constant 0 : i32
    return %arg0, %c0_i32 : i32, i32
  }
  func.func @transform_1(%arg0: i32) -> (i32, i32) {
    %c0_i32 = arith.constant 0 : i32
    %c0_i32_0 = arith.constant 0 : i32
    %c0_i32_1 = arith.constant 0 : i32
    return %c0_i32, %c0_i32_0 : i32, i32
  }
  func.func @transform_2(%arg0: i32) -> (i32, i32) {
    %c0_i32 = arith.constant 0 : i32
    %c0_i32_0 = arith.constant 0 : i32
    %c0_i32_1 = arith.constant 0 : i32
    return %c0_i32, %c0_i32_0 : i32, i32
  }
  func.func @transform_3(%arg0: i32) -> (i32, i32) {
    %c0_i32 = arith.constant 0 : i32
    %c0_i32_0 = arith.constant 0 : i32
    return %arg0, %c0_i32 : i32, i32
  }
}

module attributes {stable_mosaic.version = 11 : i64} {
  func.func @kernel(%arg0: i32, %arg1: memref<128x640xbf16, #tpu.memory_space<vmem>>, %arg2: memref<640x128xbf16, #tpu.memory_space<vmem>>, %arg3: memref<1x128xf32, #tpu.memory_space<vmem>>, %arg4: memref<128x128xbf16, #tpu.memory_space<vmem>>) attributes {dimension_semantics = [#tpu.dimension_semantics<parallel>], iteration_bounds = array<i64: 1>, scalar_prefetch = 0 : i64, scratch_operands = 0 : i64, tpu.core_type = #tpu.core_type<tc>, window_params = [{transform_indices = @transform_0, window_bounds = array<i64: 128, 640>}, {pipeline_mode = #tpu.pipeline_mode<synchronous>, transform_indices = @transform_1, window_bounds = array<i64: 640, 128>}, {pipeline_mode = #tpu.pipeline_mode<synchronous>, transform_indices = @transform_2, window_bounds = array<i64: 1, 128>}, {transform_indices = @transform_3, window_bounds = array<i64: 128, 128>}]} {
    %c0 = arith.constant 0 : index
    %c0_0 = arith.constant 0 : index
    %0 = vector.load %arg1[%c0, %c0_0] : memref<128x640xbf16, #tpu.memory_space<vmem>>, vector<128x640xbf16>
    %c0_1 = arith.constant 0 : index
    %c0_2 = arith.constant 0 : index
    %1 = vector.load %arg2[%c0_1, %c0_2] : memref<640x128xbf16, #tpu.memory_space<vmem>>, vector<640x128xbf16>
    %cst = arith.constant dense<0.000000e+00> : vector<128x128xf32>
    %2 = tpu.matmul %0, %1, %cst {dimension_numbers = #tpu.dot_dimension_numbers<[1], [0], [0], [1], [0, 0, 1, 1], [], []>} : vector<128x640xbf16>, vector<640x128xbf16>, vector<128x128xf32> -> vector<128x128xf32>
    %c0_3 = arith.constant 0 : index
    %c0_4 = arith.constant 0 : index
    %3 = vector.load %arg3[%c0_3, %c0_4] : memref<1x128xf32, #tpu.memory_space<vmem>>, vector<1x128xf32>
    %4 = vector.broadcast %3 : vector<1x128xf32> to vector<128x128xf32>
    %5 = arith.addf %2, %4 : vector<128x128xf32>
    %cst_5 = arith.constant 0.000000e+00 : f32
    %6 = vector.broadcast %cst_5 : f32 to vector<128x128xf32>
    %7 = arith.cmpf ogt, %5, %6 : vector<128x128xf32>
    %cst_6 = arith.constant 2.000000e-01 : f32
    %8 = vector.broadcast %cst_6 : f32 to vector<128x128xf32>
    %9 = arith.mulf %8, %5 : vector<128x128xf32>
    %10 = arith.select %7, %5, %9 : vector<128x128xi1>, vector<128x128xf32>
    %11 = arith.truncf %10 : vector<128x128xf32> to vector<128x128xbf16>
    %c0_7 = arith.constant 0 : index
    %c0_8 = arith.constant 0 : index
    %12 = vector.load %arg4[%c0_7, %c0_8] : memref<128x128xbf16, #tpu.memory_space<vmem>>, vector<128x128xbf16>
    tpu.vector_store %arg4[%c0_7, %c0_8], %11 {strides = array<i32>} : memref<128x128xbf16, #tpu.memory_space<vmem>>, vector<128x128xbf16>,
    return
  }
  func.func @transform_0(%arg0: i32) -> (i32, i32) {
    %c0_i32 = arith.constant 0 : i32
    %c0_i32_0 = arith.constant 0 : i32
    return %arg0, %c0_i32 : i32, i32
  }
  func.func @transform_1(%arg0: i32) -> (i32, i32) {
    %c0_i32 = arith.constant 0 : i32
    %c0_i32_0 = arith.constant 0 : i32
    %c0_i32_1 = arith.constant 0 : i32
    return %c0_i32, %c0_i32_0 : i32, i32
  }
  func.func @transform_2(%arg0: i32) -> (i32, i32) {
    %c0_i32 = arith.constant 0 : i32
    %c0_i32_0 = arith.constant 0 : i32
    %c0_i32_1 = arith.constant 0 : i32
    return %c0_i32, %c0_i32_0 : i32, i32
  }
  func.func @transform_3(%arg0: i32) -> (i32, i32) {
    %c0_i32 = arith.constant 0 : i32
    %c0_i32_0 = arith.constant 0 : i32
    return %arg0, %c0_i32 : i32, i32
  }
}

module attributes {stable_mosaic.version = 11 : i64} {
  func.func @kernel(%arg0: i32, %arg1: memref<32x896xbf16, #tpu.memory_space<vmem>>, %arg2: memref<896x128xbf16, #tpu.memory_space<vmem>>, %arg3: memref<1x128xf32, #tpu.memory_space<vmem>>, %arg4: memref<32x128xbf16, #tpu.memory_space<vmem>>) attributes {dimension_semantics = [#tpu.dimension_semantics<parallel>], iteration_bounds = array<i64: 1>, scalar_prefetch = 0 : i64, scratch_operands = 0 : i64, tpu.core_type = #tpu.core_type<tc>, window_params = [{transform_indices = @transform_0, window_bounds = array<i64: 32, 896>}, {pipeline_mode = #tpu.pipeline_mode<synchronous>, transform_indices = @transform_1, window_bounds = array<i64: 896, 128>}, {pipeline_mode = #tpu.pipeline_mode<synchronous>, transform_indices = @transform_2, window_bounds = array<i64: 1, 128>}, {transform_indices = @transform_3, window_bounds = array<i64: 32, 128>}]} {
    %c0 = arith.constant 0 : index
    %c0_0 = arith.constant 0 : index
    %0 = vector.load %arg1[%c0, %c0_0] : memref<32x896xbf16, #tpu.memory_space<vmem>>, vector<32x896xbf16>
    %c0_1 = arith.constant 0 : index
    %c0_2 = arith.constant 0 : index
    %1 = vector.load %arg2[%c0_1, %c0_2] : memref<896x128xbf16, #tpu.memory_space<vmem>>, vector<896x128xbf16>
    %cst = arith.constant dense<0.000000e+00> : vector<32x128xf32>
    %2 = tpu.matmul %0, %1, %cst {dimension_numbers = #tpu.dot_dimension_numbers<[1], [0], [0], [1], [0, 0, 1, 1], [], []>} : vector<32x896xbf16>, vector<896x128xbf16>, vector<32x128xf32> -> vector<32x128xf32>
    %c0_3 = arith.constant 0 : index
    %c0_4 = arith.constant 0 : index
    %3 = vector.load %arg3[%c0_3, %c0_4] : memref<1x128xf32, #tpu.memory_space<vmem>>, vector<1x128xf32>
    %4 = vector.broadcast %3 : vector<1x128xf32> to vector<32x128xf32>
    %5 = arith.addf %2, %4 : vector<32x128xf32>
    %cst_5 = arith.constant 0.000000e+00 : f32
    %6 = vector.broadcast %cst_5 : f32 to vector<32x128xf32>
    %7 = arith.cmpf ogt, %5, %6 : vector<32x128xf32>
    %cst_6 = arith.constant 2.000000e-01 : f32
    %8 = vector.broadcast %cst_6 : f32 to vector<32x128xf32>
    %9 = arith.mulf %8, %5 : vector<32x128xf32>
    %10 = arith.select %7, %5, %9 : vector<32x128xi1>, vector<32x128xf32>
    %11 = arith.truncf %10 : vector<32x128xf32> to vector<32x128xbf16>
    %c0_7 = arith.constant 0 : index
    %c0_8 = arith.constant 0 : index
    %12 = vector.load %arg4[%c0_7, %c0_8] : memref<32x128xbf16, #tpu.memory_space<vmem>>, vector<32x128xbf16>
    tpu.vector_store %arg4[%c0_7, %c0_8], %11 {strides = array<i32>} : memref<32x128xbf16, #tpu.memory_space<vmem>>, vector<32x128xbf16>,
    return
  }
  func.func @transform_0(%arg0: i32) -> (i32, i32) {
    %c0_i32 = arith.constant 0 : i32
    %c0_i32_0 = arith.constant 0 : i32
    return %arg0, %c0_i32 : i32, i32
  }
  func.func @transform_1(%arg0: i32) -> (i32, i32) {
    %c0_i32 = arith.constant 0 : i32
    %c0_i32_0 = arith.constant 0 : i32
    %c0_i32_1 = arith.constant 0 : i32
    return %c0_i32, %c0_i32_0 : i32, i32
  }
  func.func @transform_2(%arg0: i32) -> (i32, i32) {
    %c0_i32 = arith.constant 0 : i32
    %c0_i32_0 = arith.constant 0 : i32
    %c0_i32_1 = arith.constant 0 : i32
    return %c0_i32, %c0_i32_0 : i32, i32
  }
  func.func @transform_3(%arg0: i32) -> (i32, i32) {
    %c0_i32 = arith.constant 0 : i32
    %c0_i32_0 = arith.constant 0 : i32
    return %arg0, %c0_i32 : i32, i32
  }
}

module attributes {stable_mosaic.version = 11 : i64} {
  func.func @kernel(%arg0: i32, %arg1: memref<32x896xbf16, #tpu.memory_space<vmem>>, %arg2: memref<896x128xbf16, #tpu.memory_space<vmem>>, %arg3: memref<1x128xf32, #tpu.memory_space<vmem>>, %arg4: memref<32x128xf32, #tpu.memory_space<vmem>>) attributes {dimension_semantics = [#tpu.dimension_semantics<parallel>], iteration_bounds = array<i64: 1>, scalar_prefetch = 0 : i64, scratch_operands = 0 : i64, tpu.core_type = #tpu.core_type<tc>, window_params = [{transform_indices = @transform_0, window_bounds = array<i64: 32, 896>}, {pipeline_mode = #tpu.pipeline_mode<synchronous>, transform_indices = @transform_1, window_bounds = array<i64: 896, 128>}, {pipeline_mode = #tpu.pipeline_mode<synchronous>, transform_indices = @transform_2, window_bounds = array<i64: 1, 128>}, {transform_indices = @transform_3, window_bounds = array<i64: 32, 128>}]} {
    %c0 = arith.constant 0 : index
    %c0_0 = arith.constant 0 : index
    %0 = vector.load %arg1[%c0, %c0_0] : memref<32x896xbf16, #tpu.memory_space<vmem>>, vector<32x896xbf16>
    %c0_1 = arith.constant 0 : index
    %c0_2 = arith.constant 0 : index
    %1 = vector.load %arg2[%c0_1, %c0_2] : memref<896x128xbf16, #tpu.memory_space<vmem>>, vector<896x128xbf16>
    %cst = arith.constant dense<0.000000e+00> : vector<32x128xf32>
    %2 = tpu.matmul %0, %1, %cst {dimension_numbers = #tpu.dot_dimension_numbers<[1], [0], [0], [1], [0, 0, 1, 1], [], []>} : vector<32x896xbf16>, vector<896x128xbf16>, vector<32x128xf32> -> vector<32x128xf32>
    %c0_3 = arith.constant 0 : index
    %c0_4 = arith.constant 0 : index
    %3 = vector.load %arg3[%c0_3, %c0_4] : memref<1x128xf32, #tpu.memory_space<vmem>>, vector<1x128xf32>
    %4 = vector.broadcast %3 : vector<1x128xf32> to vector<32x128xf32>
    %5 = arith.addf %2, %4 : vector<32x128xf32>
    %c0_5 = arith.constant 0 : index
    %c0_6 = arith.constant 0 : index
    %6 = vector.load %arg4[%c0_5, %c0_6] : memref<32x128xf32, #tpu.memory_space<vmem>>, vector<32x128xf32>
    tpu.vector_store %arg4[%c0_5, %c0_6], %5 {strides = array<i32>} : memref<32x128xf32, #tpu.memory_space<vmem>>, vector<32x128xf32>,
    return
  }
  func.func @transform_0(%arg0: i32) -> (i32, i32) {
    %c0_i32 = arith.constant 0 : i32
    %c0_i32_0 = arith.constant 0 : i32
    return %arg0, %c0_i32 : i32, i32
  }
  func.func @transform_1(%arg0: i32) -> (i32, i32) {
    %c0_i32 = arith.constant 0 : i32
    %c0_i32_0 = arith.constant 0 : i32
    %c0_i32_1 = arith.constant 0 : i32
    return %c0_i32, %c0_i32_0 : i32, i32
  }
  func.func @transform_2(%arg0: i32) -> (i32, i32) {
    %c0_i32 = arith.constant 0 : i32
    %c0_i32_0 = arith.constant 0 : i32
    %c0_i32_1 = arith.constant 0 : i32
    return %c0_i32, %c0_i32_0 : i32, i32
  }
  func.func @transform_3(%arg0: i32) -> (i32, i32) {
    %c0_i32 = arith.constant 0 : i32
    %c0_i32_0 = arith.constant 0 : i32
    return %arg0, %c0_i32 : i32, i32
  }
}

</mosaic_0001>

<llo_original>
// kernel: discriminator_s_forward.6
$region0: #{discriminator_s_forward.6}
  #allocation0 [shape = 'u32[]', space=smem, size = 0x4, offset = 0x4, fixed_abs, tag = 'smem constant byte address 0x4 - core index']
  #allocation1 [shape = 'u32[144,128]{1,0:T(1,128)}', space=vmem, size = 0x12000, scoped, tag = 'internal scratch']
  %s0 = inlined_call_operand.vmem [shape: bf16[2048,128], index: 0, kind: input, shape index: {}]
  %s1 = inlined_call_operand.vmem [shape: bf16[128,128], index: 1, kind: input, shape index: {}]
  %s2 = inlined_call_operand.vmem [shape: f32[1,128], index: 2, kind: input, shape index: {}]
  %s3 = inlined_call_operand.vmem [shape: bf16[2048,128], index: 3, kind: output, shape index: {}]
  %s4 = sld [smem:[#allocation0]]
  $region45: #{discriminator_s_forward.6} parent=0
    _
  %s6 = ssub.s32 1, %s4
  %s7 = scalar_select 0, %s6, %s4
  loop: start=0, step=1, limit=6
  $region2: #{discriminator_s_forward.6} parent=0 // loop_pre_header
    _
  $region3: #{discriminator_s_forward.6} parent=0 // loop_header
    %s9 = sphi 0, %s13
    %p10 = scmp.ge.s32.totalorder %s9, 6
    %s19 = sphi 0, %s21
    %s22 = sphi 0, %s19
    %s23 = sphi 0, %s22
    %s39 = sphi 0, %s23
    %s43 = sphi 0, %s43
    %s45 = sphi 0, %s43
    %s46 = sphi 0, %s45
    %s60 = sphi 0, %s46
    %s64 = sphi 0, %s64
    %s66 = sphi 0, %s64
    %s67 = sphi 0, %s66
    %s81 = sphi 0, %s67
    %s87 = sphi 0, %s89
    %s90 = sphi 0, %s87
    %s91 = sphi 0, %s90
    %s107 = sphi 0, %s91
  $region4: #{discriminator_s_forward.6} parent=0 // loop_header_branch
    %12 = sbr.rel (%p10) target = $region8
  $region5: #{discriminator_s_forward.6} parent=0 // loop_body
    %s14 = ssub.s32 %s9, 1
    %s15 = ssub.s32 %s9, 2
    %s16 = sadd.s32 %s9, 1
    %s17 = ssub.s32 %s9, %s16
    %p18 = scmp.eq.s32.totalorder %s17, 0
    %s20 = sadd.s32 %s19, 1
    %s21 = scalar_select %p18, %s19, %s20
    %p24 = pneg %p18
    %p25 = scmp.eq.s32.totalorder %s9, 3
    %p26 = por %p24, %p25
    %p27 = scmp.ne.s32.totalorder %s19, %s22
    %p28 = scmp.eq.s32.totalorder %s9, 0
    %p29 = por %p27, %p28
    %p30 = scmp.ne.s32.totalorder %s19, %s22
    %p31 = scmp.eq.s32.totalorder %s14, 3
    %p32 = por %p30, %p31
    %p33 = scmp.ne.s32.totalorder %s22, %s23
    %p34 = scmp.eq.s32.totalorder %s14, 0
    %p35 = por %p33, %p34
    %p36 = scmp.ne.s32.totalorder %s22, %s23
    %p37 = scmp.eq.s32.totalorder %s15, 3
    %p38 = por %p36, %p37
    %p40 = scmp.ne.s32.totalorder %s23, %s39
    %p41 = scmp.eq.s32.totalorder %s15, 0
    %p42 = por %p40, %p41
    %s44 = sadd.s32 %s43, 1
    %p47 = scmp.eq.s32.totalorder %s9, 3
    %p48 = scmp.ne.s32.totalorder %s43, %s45
    %p49 = scmp.eq.s32.totalorder %s9, 0
    %p50 = por %p48, %p49
    %p51 = scmp.ne.s32.totalorder %s43, %s45
    %p52 = scmp.eq.s32.totalorder %s14, 3
    %p53 = por %p51, %p52
    %p54 = scmp.ne.s32.totalorder %s45, %s46
    %p55 = scmp.eq.s32.totalorder %s14, 0
    %p56 = por %p54, %p55
    %p57 = scmp.ne.s32.totalorder %s45, %s46
    %p58 = scmp.eq.s32.totalorder %s15, 3
    %p59 = por %p57, %p58
    %p61 = scmp.ne.s32.totalorder %s46, %s60
    %p62 = scmp.eq.s32.totalorder %s15, 0
    %p63 = por %p61, %p62
    %s65 = sadd.s32 %s64, 1
    %p68 = scmp.eq.s32.totalorder %s9, 3
    %p69 = scmp.ne.s32.totalorder %s64, %s66
    %p70 = scmp.eq.s32.totalorder %s9, 0
    %p71 = por %p69, %p70
    %p72 = scmp.ne.s32.totalorder %s64, %s66
    %p73 = scmp.eq.s32.totalorder %s14, 3
    %p74 = por %p72, %p73
    %p75 = scmp.ne.s32.totalorder %s66, %s67
    %p76 = scmp.eq.s32.totalorder %s14, 0
    %p77 = por %p75, %p76
    %p78 = scmp.ne.s32.totalorder %s66, %s67
    %p79 = scmp.eq.s32.totalorder %s15, 3
    %p80 = por %p78, %p79
    %p82 = scmp.ne.s32.totalorder %s67, %s81
    %p83 = scmp.eq.s32.totalorder %s15, 0
    %p84 = por %p82, %p83
    %s85 = ssub.s32 %s9, %s16
    %p86 = scmp.eq.s32.totalorder %s85, 0
    %s88 = sadd.s32 %s87, 1
    %s89 = scalar_select %p86, %s87, %s88
    %p92 = pneg %p86
    %p93 = scmp.eq.s32.totalorder %s9, 3
    %p94 = por %p92, %p93
    %p95 = scmp.ne.s32.totalorder %s87, %s90
    %p96 = scmp.eq.s32.totalorder %s9, 0
    %p97 = por %p95, %p96
    %p98 = scmp.ne.s32.totalorder %s87, %s90
    %p99 = scmp.eq.s32.totalorder %s14, 3
    %p100 = por %p98, %p99
    %p101 = scmp.ne.s32.totalorder %s90, %s91
    %p102 = scmp.eq.s32.totalorder %s14, 0
    %p103 = por %p101, %p102
    %p104 = scmp.ne.s32.totalorder %s90, %s91
    %p105 = scmp.eq.s32.totalorder %s15, 3
    %p106 = por %p104, %p105
    %p108 = scmp.ne.s32.totalorder %s91, %s107
    %p109 = scmp.eq.s32.totalorder %s15, 0
    %p110 = por %p108, %p109
    %p111 = scmp.le.s32.totalorder 1, %s9
    %p112 = scmp.lt.s32.totalorder %s9, 5
    %p113 = pnand %p111, %p112
    %p114 = pneg %p113
    // Predicated region
    $region9: #{discriminator_s_forward.6} parent=5 // pred_check
      _
    $region10: #{discriminator_s_forward.6} parent=5 // pred_check_branch
      %116 = sbr.rel (%p113) target = $region12
    $region11: #{discriminator_s_forward.6} parent=5 // pred_region
      %s117 = ssub.s32 %s9, 1
      // Predicated region
      $region13: #{discriminator_s_forward.6} parent=11 // pred_check
        %p118 = pneg %p56
      $region14: #{discriminator_s_forward.6} parent=11 // pred_check_branch
        %120 = sbr.rel (%p118) target = $region16
      $region15: #{discriminator_s_forward.6} parent=11 // pred_region
        _
      $region16: #{discriminator_s_forward.6} parent=11 // pred_fallthru
        _
      // Predicated region
      $region17: #{discriminator_s_forward.6} parent=11 // pred_check
        %p121 = pneg %p77
      $region18: #{discriminator_s_forward.6} parent=11 // pred_check_branch
        %123 = sbr.rel (%p121) target = $region20
      $region19: #{discriminator_s_forward.6} parent=11 // pred_region
        _
      $region20: #{discriminator_s_forward.6} parent=11 // pred_fallthru
        _
    $region12: #{discriminator_s_forward.6} parent=5 // pred_fallthru
      _
    %p124 = scmp.lt.s32.totalorder %s9, 4
    // Predicated region
    $region21: #{discriminator_s_forward.6} parent=5 // pred_check
      %p125 = pneg %p124
    $region22: #{discriminator_s_forward.6} parent=5 // pred_check_branch
      %127 = sbr.rel (%p125) target = $region24
    $region23: #{discriminator_s_forward.6} parent=5 // pred_region
      // Predicated region
      $region25: #{discriminator_s_forward.6} parent=23 // pred_check
        %p128 = pneg %p29
      $region26: #{discriminator_s_forward.6} parent=23 // pred_check_branch
        %130 = sbr.rel (%p128) target = $region28
      $region27: #{discriminator_s_forward.6} parent=23 // pred_region
        %s131 = smul.u32 64, %s9
        %p132 = scmp.lt.s32.totalorder %s131, 255
        %s133 = scalar_select %p132, %s131, 255
        %s134 = smul.addr %s133, 4
        %s135 = scalar_lea.vmem %s0, %s134
        %s136 = smul.u32 64, %s9
      $region28: #{discriminator_s_forward.6} parent=23 // pred_fallthru
        _
    $region24: #{discriminator_s_forward.6} parent=5 // pred_fallthru
      _
    %p137 = scmp.le.s32.totalorder 1, %s9
    %p138 = scmp.lt.s32.totalorder %s9, 5
    %p139 = pnand %p137, %p138
    %p140 = pneg %p139
    // Predicated region
    $region29: #{discriminator_s_forward.6} parent=5 // pred_check
      _
    $region30: #{discriminator_s_forward.6} parent=5 // pred_check_branch
      %142 = sbr.rel (%p139) target = $region32
    $region31: #{discriminator_s_forward.6} parent=5 // pred_region
      %s143 = ssub.s32 %s9, 1
      %s144 = smul.u32 64, %s14
      %p145 = scmp.lt.s32.totalorder %s144, 255
      %s146 = scalar_select %p145, %s144, 255
      %s147 = smul.addr %s146, 4
      %s148 = scalar_lea.vmem %s0, %s147
      %p149 = pneg %p35
      %p150 = pneg %p32
      %p151 = pneg %p56
      %p152 = pneg %p53
      %p153 = pneg %p77
      %p154 = pneg %p74
      %p155 = pneg %p103
      %p156 = pneg %p100
      %s157 = smul.u32 64, %s14
      %p158 = scmp.lt.s32.totalorder %s157, 255
      %s159 = scalar_select %p158, %s157, 255
      %s160 = smul.addr %s159, 4
      %s161 = scalar_lea.vmem %s3, %s160
      %s162 = smul.u32 64, %s14
      %p163 = scmp.lt.s32.totalorder %s162, 255
      %s164 = scalar_select %p163, %s162, 255
      %s165 = smul.addr %s164, 4
      %s166 = scalar_lea.vmem %s0, %s165
      %s167 = smul.u32 64, %s14
      %s168 = smul.u32 64, %s14
      %p169 = scmp.lt.s32.totalorder %s168, 255
      %s170 = scalar_select %p169, %s168, 255
      %s171 = smul.addr %s170, 4
      %s172 = scalar_lea.vmem %s3, %s171
      %s173 = smul.u32 64, %s14
      %v175 = vld [vmem:[%s166] sm:$0xf]
      %v176 = vld [vmem:[%s166 + $0x4] sm:$0xf]
      %v177 = vld [vmem:[%s166 + $0x8] sm:$0xf]
      %v178 = vld [vmem:[%s166 + $0xc] sm:$0xf]
      %v179 = vld [vmem:[%s166 + $0x10] sm:$0xf]
      %v180 = vld [vmem:[%s166 + $0x14] sm:$0xf]
      %v181 = vld [vmem:[%s166 + $0x18] sm:$0xf]
      %v182 = vld [vmem:[%s166 + $0x1c] sm:$0xf]
      %v183 = vld [vmem:[%s166 + $0x20] sm:$0xf]
      %v184 = vld [vmem:[%s166 + $0x24] sm:$0xf]
      %v185 = vld [vmem:[%s166 + $0x28] sm:$0xf]
      %v186 = vld [vmem:[%s166 + $0x2c] sm:$0xf]
      %v187 = vld [vmem:[%s166 + $0x30] sm:$0xf]
      %v188 = vld [vmem:[%s166 + $0x34] sm:$0xf]
      %v189 = vld [vmem:[%s166 + $0x38] sm:$0xf]
      %v190 = vld [vmem:[%s166 + $0x3c] sm:$0xf]
      %v191 = vld [vmem:[%s166 + $0x40] sm:$0xf]
      %v192 = vld [vmem:[%s166 + $0x44] sm:$0xf]
      %v193 = vld [vmem:[%s166 + $0x48] sm:$0xf]
      %v194 = vld [vmem:[%s166 + $0x4c] sm:$0xf]
      %v195 = vld [vmem:[%s166 + $0x50] sm:$0xf]
      %v196 = vld [vmem:[%s166 + $0x54] sm:$0xf]
      %v197 = vld [vmem:[%s166 + $0x58] sm:$0xf]
      %v198 = vld [vmem:[%s166 + $0x5c] sm:$0xf]
      %v199 = vld [vmem:[%s166 + $0x60] sm:$0xf]
      %v200 = vld [vmem:[%s166 + $0x64] sm:$0xf]
      %v201 = vld [vmem:[%s166 + $0x68] sm:$0xf]
      %v202 = vld [vmem:[%s166 + $0x6c] sm:$0xf]
      %v203 = vld [vmem:[%s166 + $0x70] sm:$0xf]
      %v204 = vld [vmem:[%s166 + $0x74] sm:$0xf]
      %v205 = vld [vmem:[%s166 + $0x78] sm:$0xf]
      %v206 = vld [vmem:[%s166 + $0x7c] sm:$0xf]
      %v207 = vld [vmem:[%s166 + $0x80] sm:$0xf]
      %v208 = vld [vmem:[%s166 + $0x84] sm:$0xf]
      %v209 = vld [vmem:[%s166 + $0x88] sm:$0xf]
      %v210 = vld [vmem:[%s166 + $0x8c] sm:$0xf]
      %v211 = vld [vmem:[%s166 + $0x90] sm:$0xf]
      %v212 = vld [vmem:[%s166 + $0x94] sm:$0xf]
      %v213 = vld [vmem:[%s166 + $0x98] sm:$0xf]
      %v214 = vld [vmem:[%s166 + $0x9c] sm:$0xf]
      %v215 = vld [vmem:[%s166 + $0xa0] sm:$0xf]
      %v216 = vld [vmem:[%s166 + $0xa4] sm:$0xf]
      %v217 = vld [vmem:[%s166 + $0xa8] sm:$0xf]
      %v218 = vld [vmem:[%s166 + $0xac] sm:$0xf]
      %v219 = vld [vmem:[%s166 + $0xb0] sm:$0xf]
      %v220 = vld [vmem:[%s166 + $0xb4] sm:$0xf]
      %v221 = vld [vmem:[%s166 + $0xb8] sm:$0xf]
      %v222 = vld [vmem:[%s166 + $0xbc] sm:$0xf]
      %v223 = vld [vmem:[%s166 + $0xc0] sm:$0xf]
      %v224 = vld [vmem:[%s166 + $0xc4] sm:$0xf]
      %v225 = vld [vmem:[%s166 + $0xc8] sm:$0xf]
      %v226 = vld [vmem:[%s166 + $0xcc] sm:$0xf]
      %v227 = vld [vmem:[%s166 + $0xd0] sm:$0xf]
      %v228 = vld [vmem:[%s166 + $0xd4] sm:$0xf]
      %v229 = vld [vmem:[%s166 + $0xd8] sm:$0xf]
      %v230 = vld [vmem:[%s166 + $0xdc] sm:$0xf]
      %v231 = vld [vmem:[%s166 + $0xe0] sm:$0xf]
      %v232 = vld [vmem:[%s166 + $0xe4] sm:$0xf]
      %v233 = vld [vmem:[%s166 + $0xe8] sm:$0xf]
      %v234 = vld [vmem:[%s166 + $0xec] sm:$0xf]
      %v235 = vld [vmem:[%s166 + $0xf0] sm:$0xf]
      %v236 = vld [vmem:[%s166 + $0xf4] sm:$0xf]
      %v237 = vld [vmem:[%s166 + $0xf8] sm:$0xf]
      %v238 = vld [vmem:[%s166 + $0xfc] sm:$0xf]
      %v239 = vld [vmem:[%s1] sm:$0xf]
      %v240 = vld [vmem:[%s1 + $0x4] sm:$0xf]
      %v241 = vld [vmem:[%s1 + $0x8] sm:$0xf]
      %v242 = vld [vmem:[%s1 + $0xc] sm:$0xf]
      %v243 = vld [vmem:[%s1 + $0x10] sm:$0xf]
      %v244 = vld [vmem:[%s1 + $0x14] sm:$0xf]
      %v245 = vld [vmem:[%s1 + $0x18] sm:$0xf]
      %v246 = vld [vmem:[%s1 + $0x1c] sm:$0xf]
      %v247 = vld [vmem:[%s1 + $0x20] sm:$0xf]
      %v248 = vld [vmem:[%s1 + $0x24] sm:$0xf]
      %v249 = vld [vmem:[%s1 + $0x28] sm:$0xf]
      %v250 = vld [vmem:[%s1 + $0x2c] sm:$0xf]
      %v251 = vld [vmem:[%s1 + $0x30] sm:$0xf]
      %v252 = vld [vmem:[%s1 + $0x34] sm:$0xf]
      %v253 = vld [vmem:[%s1 + $0x38] sm:$0xf]
      %v254 = vld [vmem:[%s1 + $0x3c] sm:$0xf]
      %v255 = vld [vmem:[%s2] sm:$0x1]
      %v257 = vlaneseq
      %v258 = vshrl.u32 %v257, 7
      %v259 = vsub.s32 0, %v258
      %v260 = vrot.slane %v255, %v259
      %v326 = vunpack.c.l.b16 %v175
      %v327 = vunpack.c.l.b16 %v176
      %v328 = vunpack.c.l.b16 %v177
      %v329 = vunpack.c.l.b16 %v178
      %v330 = vunpack.c.l.b16 %v179
      %v331 = vunpack.c.l.b16 %v180
      %v332 = vunpack.c.l.b16 %v181
      %v333 = vunpack.c.l.b16 %v182
      %v334 = vunpack.c.l.b16 %v183
      %v335 = vunpack.c.l.b16 %v184
      %v336 = vunpack.c.l.b16 %v185
      %v337 = vunpack.c.l.b16 %v186
      %v338 = vunpack.c.l.b16 %v187
      %v339 = vunpack.c.l.b16 %v188
      %v340 = vunpack.c.l.b16 %v189
      %v341 = vunpack.c.l.b16 %v190
      %v342 = vunpack.c.l.b16 %v191
      %v343 = vunpack.c.l.b16 %v192
      %v344 = vunpack.c.l.b16 %v193
      %v345 = vunpack.c.l.b16 %v194
      %v346 = vunpack.c.l.b16 %v195
      %v347 = vunpack.c.l.b16 %v196
      %v348 = vunpack.c.l.b16 %v197
      %v349 = vunpack.c.l.b16 %v198
      %v350 = vunpack.c.l.b16 %v199
      %v351 = vunpack.c.l.b16 %v200
      %v352 = vunpack.c.l.b16 %v201
      %v353 = vunpack.c.l.b16 %v202
      %v354 = vunpack.c.l.b16 %v203
      %v355 = vunpack.c.l.b16 %v204
      %v356 = vunpack.c.l.b16 %v205
      %v357 = vunpack.c.l.b16 %v206
      %v358 = vunpack.c.l.b16 %v207
      %v359 = vunpack.c.l.b16 %v208
      %v360 = vunpack.c.l.b16 %v209
      %v361 = vunpack.c.l.b16 %v210
      %v362 = vunpack.c.l.b16 %v211
      %v363 = vunpack.c.l.b16 %v212
      %v364 = vunpack.c.l.b16 %v213
      %v365 = vunpack.c.l.b16 %v214
      %v366 = vunpack.c.l.b16 %v215
      %v367 = vunpack.c.l.b16 %v216
      %v368 = vunpack.c.l.b16 %v217
      %v369 = vunpack.c.l.b16 %v218
      %v370 = vunpack.c.l.b16 %v219
      %v371 = vunpack.c.l.b16 %v220
      %v372 = vunpack.c.l.b16 %v221
      %v373 = vunpack.c.l.b16 %v222
      %v374 = vunpack.c.l.b16 %v223
      %v375 = vunpack.c.l.b16 %v224
      %v376 = vunpack.c.l.b16 %v225
      %v377 = vunpack.c.l.b16 %v226
      %v378 = vunpack.c.l.b16 %v227
      %v379 = vunpack.c.l.b16 %v228
      %v380 = vunpack.c.l.b16 %v229
      %v381 = vunpack.c.l.b16 %v230
      %v382 = vunpack.c.l.b16 %v231
      %v383 = vunpack.c.l.b16 %v232
      %v384 = vunpack.c.l.b16 %v233
      %v385 = vunpack.c.l.b16 %v234
      %v386 = vunpack.c.l.b16 %v235
      %v387 = vunpack.c.l.b16 %v236
      %v388 = vunpack.c.l.b16 %v237
      %v389 = vunpack.c.l.b16 %v238
      %v390 = vpack.c.b16 %v327, %v326
      %v391 = vpack.c.b16 %v329, %v328
      %v392 = vpack.c.b16 %v331, %v330
      %v393 = vpack.c.b16 %v333, %v332
      %v394 = vpack.c.b16 %v335, %v334
      %v395 = vpack.c.b16 %v337, %v336
      %v396 = vpack.c.b16 %v339, %v338
      %v397 = vpack.c.b16 %v341, %v340
      %v398 = vpack.c.b16 %v343, %v342
      %v399 = vpack.c.b16 %v345, %v344
      %v400 = vpack.c.b16 %v347, %v346
      %v401 = vpack.c.b16 %v349, %v348
      %v402 = vpack.c.b16 %v351, %v350
      %v403 = vpack.c.b16 %v353, %v352
      %v404 = vpack.c.b16 %v355, %v354
      %v405 = vpack.c.b16 %v357, %v356
      %v406 = vpack.c.b16 %v359, %v358
      %v407 = vpack.c.b16 %v361, %v360
      %v408 = vpack.c.b16 %v363, %v362
      %v409 = vpack.c.b16 %v365, %v364
      %v410 = vpack.c.b16 %v367, %v366
      %v411 = vpack.c.b16 %v369, %v368
      %v412 = vpack.c.b16 %v371, %v370
      %v413 = vpack.c.b16 %v373, %v372
      %v414 = vpack.c.b16 %v375, %v374
      %v415 = vpack.c.b16 %v377, %v376
      %v416 = vpack.c.b16 %v379, %v378
      %v417 = vpack.c.b16 %v381, %v380
      %v418 = vpack.c.b16 %v383, %v382
      %v419 = vpack.c.b16 %v385, %v384
      %v420 = vpack.c.b16 %v387, %v386
      %v421 = vpack.c.b16 %v389, %v388
      %v470 = vunpack.c.l.b16 %v239
      %v471 = vunpack.c.l.b16 %v240
      %v472 = vunpack.c.l.b16 %v241
      %v473 = vunpack.c.l.b16 %v242
      %v474 = vunpack.c.l.b16 %v243
      %v475 = vunpack.c.l.b16 %v244
      %v476 = vunpack.c.l.b16 %v245
      %v477 = vunpack.c.l.b16 %v246
      %v478 = vunpack.c.l.b16 %v247
      %v479 = vunpack.c.l.b16 %v248
      %v480 = vunpack.c.l.b16 %v249
      %v481 = vunpack.c.l.b16 %v250
      %v482 = vunpack.c.l.b16 %v251
      %v483 = vunpack.c.l.b16 %v252
      %v484 = vunpack.c.l.b16 %v253
      %v485 = vunpack.c.l.b16 %v254
      %v486 = vpack.c.b16 %v471, %v470
      %v487 = vpack.c.b16 %v473, %v472
      %v488 = vpack.c.b16 %v475, %v474
      %v489 = vpack.c.b16 %v477, %v476
      %v490 = vpack.c.b16 %v479, %v478
      %v491 = vpack.c.b16 %v481, %v480
      %v492 = vpack.c.b16 %v483, %v482
      %v493 = vpack.c.b16 %v485, %v484
      %502 = vmatprep.subr.bf16.mxu0 0
      %503 = vmatpush1.bf16.msra.mxu0 %v493
      %504 = vmatprep.subr.bf16.mxu0 0
      %505 = vmatpush1.bf16.msra.mxu0 %v492
      %506 = vmatprep.subr.bf16.mxu0 0
      %507 = vmatpush1.bf16.msra.mxu0 %v491
      %508 = vmatprep.subr.bf16.mxu0 0
      %509 = vmatpush1.bf16.msra.mxu0 %v490
      %510 = vmatprep.subr.bf16.mxu0 0
      %511 = vmatpush1.bf16.msra.mxu0 %v489
      %512 = vmatprep.subr.bf16.mxu0 0
      %513 = vmatpush1.bf16.msra.mxu0 %v488
      %514 = vmatprep.subr.bf16.mxu0 0
      %515 = vmatpush1.bf16.msra.mxu0 %v487
      %516 = vmatprep.subr.bf16.mxu0 0
      %517 = vmatpush1.bf16.msra.mxu0 %v486
      %518 = vmatprep.subr.bf16.mxu0 0
      %519 = vmatpush2.bf16.msra.mxu0 0
      %520 = vmatprep.subr.bf16.mxu0 0
      %521 = vmatpush2.bf16.msra.mxu0 0
      %522 = vmatprep.subr.bf16.mxu0 0
      %523 = vmatpush2.bf16.msra.mxu0 0
      %524 = vmatprep.subr.bf16.mxu0 0
      %525 = vmatpush2.bf16.msra.mxu0 0
      %526 = vmatprep.subr.bf16.mxu0 0
      %527 = vmatpush2.bf16.msra.mxu0 0
      %528 = vmatprep.subr.bf16.mxu0 0
      %529 = vmatpush2.bf16.msra.mxu0 0
      %530 = vmatprep.subr.bf16.mxu0 0
      %531 = vmatpush2.bf16.msra.mxu0 0
      %532 = vmatprep.subr.bf16.mxu0 0
      %533 = vmatpush2.bf16.msra.mxu0 0
      %534 = vmatprep.mubr.bf16.mxu0 0
      %535 = vmatmul.mubr.bf16.gmra.mxu0 %v390
      %v536 = vpop.f32.mrf.mxu0
      %v537 = vadd.f32 %v260, %v536
      %v538 = vpop.f32.mrf.mxu0
      %v539 = vpop.f32.mrf.mxu0
      %v540 = vadd.f32 %v260, %v539
      %v541 = vpop.f32.mrf.mxu0
      %542 = vmatprep.mubr.bf16.mxu0 0
      %543 = vmatmul.mubr.bf16.gmra.mxu0 %v391
      %v544 = vpop.f32.mrf.mxu0
      %v545 = vadd.f32 %v260, %v544
      %v546 = vpop.f32.mrf.mxu0
      %v547 = vpop.f32.mrf.mxu0
      %v548 = vadd.f32 %v260, %v547
      %v549 = vpop.f32.mrf.mxu0
      %550 = vmatprep.mubr.bf16.mxu0 0
      %551 = vmatmul.mubr.bf16.gmra.mxu0 %v392
      %v552 = vpop.f32.mrf.mxu0
      %v553 = vadd.f32 %v260, %v552
      %v554 = vpop.f32.mrf.mxu0
      %v555 = vpop.f32.mrf.mxu0
      %v556 = vadd.f32 %v260, %v555
      %v557 = vpop.f32.mrf.mxu0
      %558 = vmatprep.mubr.bf16.mxu0 0
      %559 = vmatmul.mubr.bf16.gmra.mxu0 %v393
      %v560 = vpop.f32.mrf.mxu0
      %v561 = vadd.f32 %v260, %v560
      %v562 = vpop.f32.mrf.mxu0
      %v563 = vpop.f32.mrf.mxu0
      %v564 = vadd.f32 %v260, %v563
      %v565 = vpop.f32.mrf.mxu0
      %566 = vmatprep.mubr.bf16.mxu0 0
      %567 = vmatmul.mubr.bf16.gmra.mxu0 %v394
      %v568 = vpop.f32.mrf.mxu0
      %v569 = vadd.f32 %v260, %v568
      %v570 = vpop.f32.mrf.mxu0
      %v571 = vpop.f32.mrf.mxu0
      %v572 = vadd.f32 %v260, %v571
      %v573 = vpop.f32.mrf.mxu0
      %574 = vmatprep.mubr.bf16.mxu0 0
      %575 = vmatmul.mubr.bf16.gmra.mxu0 %v395
      %v576 = vpop.f32.mrf.mxu0
      %v577 = vadd.f32 %v260, %v576
      %v578 = vpop.f32.mrf.mxu0
      %v579 = vpop.f32.mrf.mxu0
      %v580 = vadd.f32 %v260, %v579
      %v581 = vpop.f32.mrf.mxu0
      %582 = vmatprep.mubr.bf16.mxu0 0
      %583 = vmatmul.mubr.bf16.gmra.mxu0 %v396
      %v584 = vpop.f32.mrf.mxu0
      %v585 = vadd.f32 %v260, %v584
      %v586 = vpop.f32.mrf.mxu0
      %v587 = vpop.f32.mrf.mxu0
      %v588 = vadd.f32 %v260, %v587
      %v589 = vpop.f32.mrf.mxu0
      %590 = vmatprep.mubr.bf16.mxu0 0
      %591 = vmatmul.mubr.bf16.gmra.mxu0 %v397
      %v592 = vpop.f32.mrf.mxu0
      %v593 = vadd.f32 %v260, %v592
      %v594 = vpop.f32.mrf.mxu0
      %v595 = vpop.f32.mrf.mxu0
      %v596 = vadd.f32 %v260, %v595
      %v597 = vpop.f32.mrf.mxu0
      %598 = vmatprep.mubr.bf16.mxu0 0
      %599 = vmatmul.mubr.bf16.gmra.mxu0 %v398
      %v600 = vpop.f32.mrf.mxu0
      %v601 = vadd.f32 %v260, %v600
      %v602 = vpop.f32.mrf.mxu0
      %v603 = vpop.f32.mrf.mxu0
      %v604 = vadd.f32 %v260, %v603
      %v605 = vpop.f32.mrf.mxu0
      %606 = vmatprep.mubr.bf16.mxu0 0
      %607 = vmatmul.mubr.bf16.gmra.mxu0 %v399
      %v608 = vpop.f32.mrf.mxu0
      %v609 = vadd.f32 %v260, %v608
      %v610 = vpop.f32.mrf.mxu0
      %v611 = vpop.f32.mrf.mxu0
      %v612 = vadd.f32 %v260, %v611
      %v613 = vpop.f32.mrf.mxu0
      %614 = vmatprep.mubr.bf16.mxu0 0
      %615 = vmatmul.mubr.bf16.gmra.mxu0 %v400
      %v616 = vpop.f32.mrf.mxu0
      %v617 = vadd.f32 %v260, %v616
      %v618 = vpop.f32.mrf.mxu0
      %v619 = vpop.f32.mrf.mxu0
      %v620 = vadd.f32 %v260, %v619
      %v621 = vpop.f32.mrf.mxu0
      %622 = vmatprep.mubr.bf16.mxu0 0
      %623 = vmatmul.mubr.bf16.gmra.mxu0 %v401
      %v624 = vpop.f32.mrf.mxu0
      %v625 = vadd.f32 %v260, %v624
      %v626 = vpop.f32.mrf.mxu0
      %v627 = vpop.f32.mrf.mxu0
      %v628 = vadd.f32 %v260, %v627
      %v629 = vpop.f32.mrf.mxu0
      %630 = vmatprep.mubr.bf16.mxu0 0
      %631 = vmatmul.mubr.bf16.gmra.mxu0 %v402
      %v632 = vpop.f32.mrf.mxu0
      %v633 = vadd.f32 %v260, %v632
      %v634 = vpop.f32.mrf.mxu0
      %v635 = vpop.f32.mrf.mxu0
      %v636 = vadd.f32 %v260, %v635
      %v637 = vpop.f32.mrf.mxu0
      %638 = vmatprep.mubr.bf16.mxu0 0
      %639 = vmatmul.mubr.bf16.gmra.mxu0 %v403
      %v640 = vpop.f32.mrf.mxu0
      %v641 = vadd.f32 %v260, %v640
      %v642 = vpop.f32.mrf.mxu0
      %v643 = vpop.f32.mrf.mxu0
      %v644 = vadd.f32 %v260, %v643
      %v645 = vpop.f32.mrf.mxu0
      %646 = vmatprep.mubr.bf16.mxu0 0
      %647 = vmatmul.mubr.bf16.gmra.mxu0 %v404
      %v648 = vpop.f32.mrf.mxu0
      %v649 = vadd.f32 %v260, %v648
      %v650 = vpop.f32.mrf.mxu0
      %v651 = vpop.f32.mrf.mxu0
      %v652 = vadd.f32 %v260, %v651
      %v653 = vpop.f32.mrf.mxu0
      %654 = vmatprep.mubr.bf16.mxu0 0
      %655 = vmatmul.mubr.bf16.gmra.mxu0 %v405
      %v656 = vpop.f32.mrf.mxu0
      %v657 = vadd.f32 %v260, %v656
      %v658 = vpop.f32.mrf.mxu0
      %v659 = vpop.f32.mrf.mxu0
      %v660 = vadd.f32 %v260, %v659
      %v661 = vpop.f32.mrf.mxu0
      %662 = vmatprep.mubr.bf16.mxu0 0
      %663 = vmatmul.mubr.bf16.gmra.mxu0 %v406
      %v664 = vpop.f32.mrf.mxu0
      %v665 = vadd.f32 %v260, %v664
      %v666 = vpop.f32.mrf.mxu0
      %v667 = vpop.f32.mrf.mxu0
      %v668 = vadd.f32 %v260, %v667
      %v669 = vpop.f32.mrf.mxu0
      %670 = vmatprep.mubr.bf16.mxu0 0
      %671 = vmatmul.mubr.bf16.gmra.mxu0 %v407
      %v672 = vpop.f32.mrf.mxu0
      %v673 = vadd.f32 %v260, %v672
      %v674 = vpop.f32.mrf.mxu0
      %v675 = vpop.f32.mrf.mxu0
      %v676 = vadd.f32 %v260, %v675
      %v677 = vpop.f32.mrf.mxu0
      %678 = vmatprep.mubr.bf16.mxu0 0
      %679 = vmatmul.mubr.bf16.gmra.mxu0 %v408
      %v680 = vpop.f32.mrf.mxu0
      %v681 = vadd.f32 %v260, %v680
      %v682 = vpop.f32.mrf.mxu0
      %v683 = vpop.f32.mrf.mxu0
      %v684 = vadd.f32 %v260, %v683
      %v685 = vpop.f32.mrf.mxu0
      %686 = vmatprep.mubr.bf16.mxu0 0
      %687 = vmatmul.mubr.bf16.gmra.mxu0 %v409
      %v688 = vpop.f32.mrf.mxu0
      %v689 = vadd.f32 %v260, %v688
      %v690 = vpop.f32.mrf.mxu0
      %v691 = vpop.f32.mrf.mxu0
      %v692 = vadd.f32 %v260, %v691
      %v693 = vpop.f32.mrf.mxu0
      %694 = vmatprep.mubr.bf16.mxu0 0
      %695 = vmatmul.mubr.bf16.gmra.mxu0 %v410
      %v696 = vpop.f32.mrf.mxu0
      %v697 = vadd.f32 %v260, %v696
      %v698 = vpop.f32.mrf.mxu0
      %v699 = vpop.f32.mrf.mxu0
      %v700 = vadd.f32 %v260, %v699
      %v701 = vpop.f32.mrf.mxu0
      %702 = vmatprep.mubr.bf16.mxu0 0
      %703 = vmatmul.mubr.bf16.gmra.mxu0 %v411
      %v704 = vpop.f32.mrf.mxu0
      %v705 = vadd.f32 %v260, %v704
      %v706 = vpop.f32.mrf.mxu0
      %v707 = vpop.f32.mrf.mxu0
      %v708 = vadd.f32 %v260, %v707
      %v709 = vpop.f32.mrf.mxu0
      %710 = vmatprep.mubr.bf16.mxu0 0
      %711 = vmatmul.mubr.bf16.gmra.mxu0 %v412
      %v712 = vpop.f32.mrf.mxu0
      %v713 = vadd.f32 %v260, %v712
      %v714 = vpop.f32.mrf.mxu0
      %v715 = vpop.f32.mrf.mxu0
      %v716 = vadd.f32 %v260, %v715
      %v717 = vpop.f32.mrf.mxu0
      %718 = vmatprep.mubr.bf16.mxu0 0
      %719 = vmatmul.mubr.bf16.gmra.mxu0 %v413
      %v720 = vpop.f32.mrf.mxu0
      %v721 = vadd.f32 %v260, %v720
      %v722 = vpop.f32.mrf.mxu0
      %v723 = vpop.f32.mrf.mxu0
      %v724 = vadd.f32 %v260, %v723
      %v725 = vpop.f32.mrf.mxu0
      %726 = vmatprep.mubr.bf16.mxu0 0
      %727 = vmatmul.mubr.bf16.gmra.mxu0 %v414
      %v728 = vpop.f32.mrf.mxu0
      %v729 = vadd.f32 %v260, %v728
      %v730 = vpop.f32.mrf.mxu0
      %v731 = vpop.f32.mrf.mxu0
      %v732 = vadd.f32 %v260, %v731
      %v733 = vpop.f32.mrf.mxu0
      %734 = vmatprep.mubr.bf16.mxu0 0
      %735 = vmatmul.mubr.bf16.gmra.mxu0 %v415
      %v736 = vpop.f32.mrf.mxu0
      %v737 = vadd.f32 %v260, %v736
      %v738 = vpop.f32.mrf.mxu0
      %v739 = vpop.f32.mrf.mxu0
      %v740 = vadd.f32 %v260, %v739
      %v741 = vpop.f32.mrf.mxu0
      %742 = vmatprep.mubr.bf16.mxu0 0
      %743 = vmatmul.mubr.bf16.gmra.mxu0 %v416
      %v744 = vpop.f32.mrf.mxu0
      %v745 = vadd.f32 %v260, %v744
      %v746 = vpop.f32.mrf.mxu0
      %v747 = vpop.f32.mrf.mxu0
      %v748 = vadd.f32 %v260, %v747
      %v749 = vpop.f32.mrf.mxu0
      %750 = vmatprep.mubr.bf16.mxu0 0
      %751 = vmatmul.mubr.bf16.gmra.mxu0 %v417
      %v752 = vpop.f32.mrf.mxu0
      %v753 = vadd.f32 %v260, %v752
      %v754 = vpop.f32.mrf.mxu0
      %v755 = vpop.f32.mrf.mxu0
      %v756 = vadd.f32 %v260, %v755
      %v757 = vpop.f32.mrf.mxu0
      %758 = vmatprep.mubr.bf16.mxu0 0
      %759 = vmatmul.mubr.bf16.gmra.mxu0 %v418
      %v760 = vpop.f32.mrf.mxu0
      %v761 = vadd.f32 %v260, %v760
      %v762 = vpop.f32.mrf.mxu0
      %v763 = vpop.f32.mrf.mxu0
      %v764 = vadd.f32 %v260, %v763
      %v765 = vpop.f32.mrf.mxu0
      %766 = vmatprep.mubr.bf16.mxu0 0
      %767 = vmatmul.mubr.bf16.gmra.mxu0 %v419
      %v768 = vpop.f32.mrf.mxu0
      %v769 = vadd.f32 %v260, %v768
      %v770 = vpop.f32.mrf.mxu0
      %v771 = vpop.f32.mrf.mxu0
      %v772 = vadd.f32 %v260, %v771
      %v773 = vpop.f32.mrf.mxu0
      %774 = vmatprep.mubr.bf16.mxu0 0
      %775 = vmatmul.mubr.bf16.gmra.mxu0 %v420
      %v776 = vpop.f32.mrf.mxu0
      %v777 = vadd.f32 %v260, %v776
      %v778 = vpop.f32.mrf.mxu0
      %v779 = vpop.f32.mrf.mxu0
      %v780 = vadd.f32 %v260, %v779
      %v781 = vpop.f32.mrf.mxu0
      %782 = vmatprep.mubr.bf16.mxu0 0
      %783 = vmatmul.mubr.bf16.gmra.mxu0 %v421
      %v784 = vpop.f32.mrf.mxu0
      %v785 = vadd.f32 %v260, %v784
      %v786 = vpop.f32.mrf.mxu0
      %v787 = vpop.f32.mrf.mxu0
      %v788 = vadd.f32 %v260, %v787
      %v789 = vpop.f32.mrf.mxu0
      %790 = vdwg.mxu0
      %vm791 = vcmp.gt.f32.partialorder %v537, 0.0
      %vm792 = vcmp.gt.f32.partialorder %v540, 0.0
      %vm793 = vcmp.gt.f32.partialorder %v545, 0.0
      %vm794 = vcmp.gt.f32.partialorder %v548, 0.0
      %vm795 = vcmp.gt.f32.partialorder %v553, 0.0
      %vm796 = vcmp.gt.f32.partialorder %v556, 0.0
      %vm797 = vcmp.gt.f32.partialorder %v561, 0.0
      %vm798 = vcmp.gt.f32.partialorder %v564, 0.0
      %vm799 = vcmp.gt.f32.partialorder %v569, 0.0
      %vm800 = vcmp.gt.f32.partialorder %v572, 0.0
      %vm801 = vcmp.gt.f32.partialorder %v577, 0.0
      %vm802 = vcmp.gt.f32.partialorder %v580, 0.0
      %vm803 = vcmp.gt.f32.partialorder %v585, 0.0
      %vm804 = vcmp.gt.f32.partialorder %v588, 0.0
      %vm805 = vcmp.gt.f32.partialorder %v593, 0.0
      %vm806 = vcmp.gt.f32.partialorder %v596, 0.0
      %vm807 = vcmp.gt.f32.partialorder %v601, 0.0
      %vm808 = vcmp.gt.f32.partialorder %v604, 0.0
      %vm809 = vcmp.gt.f32.partialorder %v609, 0.0
      %vm810 = vcmp.gt.f32.partialorder %v612, 0.0
      %vm811 = vcmp.gt.f32.partialorder %v617, 0.0
      %vm812 = vcmp.gt.f32.partialorder %v620, 0.0
      %vm813 = vcmp.gt.f32.partialorder %v625, 0.0
      %vm814 = vcmp.gt.f32.partialorder %v628, 0.0
      %vm815 = vcmp.gt.f32.partialorder %v633, 0.0
      %vm816 = vcmp.gt.f32.partialorder %v636, 0.0
      %vm817 = vcmp.gt.f32.partialorder %v641, 0.0
      %vm818 = vcmp.gt.f32.partialorder %v644, 0.0
      %vm819 = vcmp.gt.f32.partialorder %v649, 0.0
      %vm820 = vcmp.gt.f32.partialorder %v652, 0.0
      %vm821 = vcmp.gt.f32.partialorder %v657, 0.0
      %vm822 = vcmp.gt.f32.partialorder %v660, 0.0
      %vm823 = vcmp.gt.f32.partialorder %v665, 0.0
      %vm824 = vcmp.gt.f32.partialorder %v668, 0.0
      %vm825 = vcmp.gt.f32.partialorder %v673, 0.0
      %vm826 = vcmp.gt.f32.partialorder %v676, 0.0
      %vm827 = vcmp.gt.f32.partialorder %v681, 0.0
      %vm828 = vcmp.gt.f32.partialorder %v684, 0.0
      %vm829 = vcmp.gt.f32.partialorder %v689, 0.0
      %vm830 = vcmp.gt.f32.partialorder %v692, 0.0
      %vm831 = vcmp.gt.f32.partialorder %v697, 0.0
      %vm832 = vcmp.gt.f32.partialorder %v700, 0.0
      %vm833 = vcmp.gt.f32.partialorder %v705, 0.0
      %vm834 = vcmp.gt.f32.partialorder %v708, 0.0
      %vm835 = vcmp.gt.f32.partialorder %v713, 0.0
      %vm836 = vcmp.gt.f32.partialorder %v716, 0.0
      %vm837 = vcmp.gt.f32.partialorder %v721, 0.0
      %vm838 = vcmp.gt.f32.partialorder %v724, 0.0
      %vm839 = vcmp.gt.f32.partialorder %v729, 0.0
      %vm840 = vcmp.gt.f32.partialorder %v732, 0.0
      %vm841 = vcmp.gt.f32.partialorder %v737, 0.0
      %vm842 = vcmp.gt.f32.partialorder %v740, 0.0
      %vm843 = vcmp.gt.f32.partialorder %v745, 0.0
      %vm844 = vcmp.gt.f32.partialorder %v748, 0.0
      %vm845 = vcmp.gt.f32.partialorder %v753, 0.0
      %vm846 = vcmp.gt.f32.partialorder %v756, 0.0
      %vm847 = vcmp.gt.f32.partialorder %v761, 0.0
      %vm848 = vcmp.gt.f32.partialorder %v764, 0.0
      %vm849 = vcmp.gt.f32.partialorder %v769, 0.0
      %vm850 = vcmp.gt.f32.partialorder %v772, 0.0
      %vm851 = vcmp.gt.f32.partialorder %v777, 0.0
      %vm852 = vcmp.gt.f32.partialorder %v780, 0.0
      %vm853 = vcmp.gt.f32.partialorder %v785, 0.0
      %vm854 = vcmp.gt.f32.partialorder %v788, 0.0
      %v855 = vmul.f32 %v537, 0.2
      %v856 = vmul.f32 %v540, 0.2
      %v857 = vmul.f32 %v545, 0.2
      %v858 = vmul.f32 %v548, 0.2
      %v859 = vmul.f32 %v553, 0.2
      %v860 = vmul.f32 %v556, 0.2
      %v861 = vmul.f32 %v561, 0.2
      %v862 = vmul.f32 %v564, 0.2
      %v863 = vmul.f32 %v569, 0.2
      %v864 = vmul.f32 %v572, 0.2
      %v865 = vmul.f32 %v577, 0.2
      %v866 = vmul.f32 %v580, 0.2
      %v867 = vmul.f32 %v585, 0.2
      %v868 = vmul.f32 %v588, 0.2
      %v869 = vmul.f32 %v593, 0.2
      %v870 = vmul.f32 %v596, 0.2
      %v871 = vmul.f32 %v601, 0.2
      %v872 = vmul.f32 %v604, 0.2
      %v873 = vmul.f32 %v609, 0.2
      %v874 = vmul.f32 %v612, 0.2
      %v875 = vmul.f32 %v617, 0.2
      %v876 = vmul.f32 %v620, 0.2
      %v877 = vmul.f32 %v625, 0.2
      %v878 = vmul.f32 %v628, 0.2
      %v879 = vmul.f32 %v633, 0.2
      %v880 = vmul.f32 %v636, 0.2
      %v881 = vmul.f32 %v641, 0.2
      %v882 = vmul.f32 %v644, 0.2
      %v883 = vmul.f32 %v649, 0.2
      %v884 = vmul.f32 %v652, 0.2
      %v885 = vmul.f32 %v657, 0.2
      %v886 = vmul.f32 %v660, 0.2
      %v887 = vmul.f32 %v665, 0.2
      %v888 = vmul.f32 %v668, 0.2
      %v889 = vmul.f32 %v673, 0.2
      %v890 = vmul.f32 %v676, 0.2
      %v891 = vmul.f32 %v681, 0.2
      %v892 = vmul.f32 %v684, 0.2
      %v893 = vmul.f32 %v689, 0.2
      %v894 = vmul.f32 %v692, 0.2
      %v895 = vmul.f32 %v697, 0.2
      %v896 = vmul.f32 %v700, 0.2
      %v897 = vmul.f32 %v705, 0.2
      %v898 = vmul.f32 %v708, 0.2
      %v899 = vmul.f32 %v713, 0.2
      %v900 = vmul.f32 %v716, 0.2
      %v901 = vmul.f32 %v721, 0.2
      %v902 = vmul.f32 %v724, 0.2
      %v903 = vmul.f32 %v729, 0.2
      %v904 = vmul.f32 %v732, 0.2
      %v905 = vmul.f32 %v737, 0.2
      %v906 = vmul.f32 %v740, 0.2
      %v907 = vmul.f32 %v745, 0.2
      %v908 = vmul.f32 %v748, 0.2
      %v909 = vmul.f32 %v753, 0.2
      %v910 = vmul.f32 %v756, 0.2
      %v911 = vmul.f32 %v761, 0.2
      %v912 = vmul.f32 %v764, 0.2
      %v913 = vmul.f32 %v769, 0.2
      %v914 = vmul.f32 %v772, 0.2
      %v915 = vmul.f32 %v777, 0.2
      %v916 = vmul.f32 %v780, 0.2
      %v917 = vmul.f32 %v785, 0.2
      %v918 = vmul.f32 %v788, 0.2
      %v919 = vsel %vm791, %v537, %v855
      %v920 = vsel %vm792, %v540, %v856
      %v921 = vsel %vm793, %v545, %v857
      %v922 = vsel %vm794, %v548, %v858
      %v923 = vsel %vm795, %v553, %v859
      %v924 = vsel %vm796, %v556, %v860
      %v925 = vsel %vm797, %v561, %v861
      %v926 = vsel %vm798, %v564, %v862
      %v927 = vsel %vm799, %v569, %v863
      %v928 = vsel %vm800, %v572, %v864
      %v929 = vsel %vm801, %v577, %v865
      %v930 = vsel %vm802, %v580, %v866
      %v931 = vsel %vm803, %v585, %v867
      %v932 = vsel %vm804, %v588, %v868
      %v933 = vsel %vm805, %v593, %v869
      %v934 = vsel %vm806, %v596, %v870
      %v935 = vsel %vm807, %v601, %v871
      %v936 = vsel %vm808, %v604, %v872
      %v937 = vsel %vm809, %v609, %v873
      %v938 = vsel %vm810, %v612, %v874
      %v939 = vsel %vm811, %v617, %v875
      %v940 = vsel %vm812, %v620, %v876
      %v941 = vsel %vm813, %v625, %v877
      %v942 = vsel %vm814, %v628, %v878
      %v943 = vsel %vm815, %v633, %v879
      %v944 = vsel %vm816, %v636, %v880
      %v945 = vsel %vm817, %v641, %v881
      %v946 = vsel %vm818, %v644, %v882
      %v947 = vsel %vm819, %v649, %v883
      %v948 = vsel %vm820, %v652, %v884
      %v949 = vsel %vm821, %v657, %v885
      %v950 = vsel %vm822, %v660, %v886
      %v951 = vsel %vm823, %v665, %v887
      %v952 = vsel %vm824, %v668, %v888
      %v953 = vsel %vm825, %v673, %v889
      %v954 = vsel %vm826, %v676, %v890
      %v955 = vsel %vm827, %v681, %v891
      %v956 = vsel %vm828, %v684, %v892
      %v957 = vsel %vm829, %v689, %v893
      %v958 = vsel %vm830, %v692, %v894
      %v959 = vsel %vm831, %v697, %v895
      %v960 = vsel %vm832, %v700, %v896
      %v961 = vsel %vm833, %v705, %v897
      %v962 = vsel %vm834, %v708, %v898
      %v963 = vsel %vm835, %v713, %v899
      %v964 = vsel %vm836, %v716, %v900
      %v965 = vsel %vm837, %v721, %v901
      %v966 = vsel %vm838, %v724, %v902
      %v967 = vsel %vm839, %v729, %v903
      %v968 = vsel %vm840, %v732, %v904
      %v969 = vsel %vm841, %v737, %v905
      %v970 = vsel %vm842, %v740, %v906
      %v971 = vsel %vm843, %v745, %v907
      %v972 = vsel %vm844, %v748, %v908
      %v973 = vsel %vm845, %v753, %v909
      %v974 = vsel %vm846, %v756, %v910
      %v975 = vsel %vm847, %v761, %v911
      %v976 = vsel %vm848, %v764, %v912
      %v977 = vsel %vm849, %v769, %v913
      %v978 = vsel %vm850, %v772, %v914
      %v979 = vsel %vm851, %v777, %v915
      %v980 = vsel %vm852, %v780, %v916
      %v981 = vsel %vm853, %v785, %v917
      %v982 = vsel %vm854, %v788, %v918
      %v983 = vpack.c.bf16 %v920, %v919
      %v984 = vpack.c.bf16 %v922, %v921
      %v985 = vpack.c.bf16 %v924, %v923
      %v986 = vpack.c.bf16 %v926, %v925
      %v987 = vpack.c.bf16 %v928, %v927
      %v988 = vpack.c.bf16 %v930, %v929
      %v989 = vpack.c.bf16 %v932, %v931
      %v990 = vpack.c.bf16 %v934, %v933
      %v991 = vpack.c.bf16 %v936, %v935
      %v992 = vpack.c.bf16 %v938, %v937
      %v993 = vpack.c.bf16 %v940, %v939
      %v994 = vpack.c.bf16 %v942, %v941
      %v995 = vpack.c.bf16 %v944, %v943
      %v996 = vpack.c.bf16 %v946, %v945
      %v997 = vpack.c.bf16 %v948, %v947
      %v998 = vpack.c.bf16 %v950, %v949
      %v999 = vpack.c.bf16 %v952, %v951
      %v1000 = vpack.c.bf16 %v954, %v953
      %v1001 = vpack.c.bf16 %v956, %v955
      %v1002 = vpack.c.bf16 %v958, %v957
      %v1003 = vpack.c.bf16 %v960, %v959
      %v1004 = vpack.c.bf16 %v962, %v961
      %v1005 = vpack.c.bf16 %v964, %v963
      %v1006 = vpack.c.bf16 %v966, %v965
      %v1007 = vpack.c.bf16 %v968, %v967
      %v1008 = vpack.c.bf16 %v970, %v969
      %v1009 = vpack.c.bf16 %v972, %v971
      %v1010 = vpack.c.bf16 %v974, %v973
      %v1011 = vpack.c.bf16 %v976, %v975
      %v1012 = vpack.c.bf16 %v978, %v977
      %v1013 = vpack.c.bf16 %v980, %v979
      %v1014 = vpack.c.bf16 %v982, %v981
      %v1047 = vunpack.c.l.b16 %v983
      %v1048 = vunpack.c.h.b16 %v983
      %v1049 = vunpack.c.l.b16 %v984
      %v1050 = vunpack.c.h.b16 %v984
      %v1051 = vunpack.c.l.b16 %v985
      %v1052 = vunpack.c.h.b16 %v985
      %v1053 = vunpack.c.l.b16 %v986
      %v1054 = vunpack.c.h.b16 %v986
      %v1055 = vunpack.c.l.b16 %v987
      %v1056 = vunpack.c.h.b16 %v987
      %v1057 = vunpack.c.l.b16 %v988
      %v1058 = vunpack.c.h.b16 %v988
      %v1059 = vunpack.c.l.b16 %v989
      %v1060 = vunpack.c.h.b16 %v989
      %v1061 = vunpack.c.l.b16 %v990
      %v1062 = vunpack.c.h.b16 %v990
      %v1063 = vunpack.c.l.b16 %v991
      %v1064 = vunpack.c.h.b16 %v991
      %v1065 = vunpack.c.l.b16 %v992
      %v1066 = vunpack.c.h.b16 %v992
      %v1067 = vunpack.c.l.b16 %v993
      %v1068 = vunpack.c.h.b16 %v993
      %v1069 = vunpack.c.l.b16 %v994
      %v1070 = vunpack.c.h.b16 %v994
      %v1071 = vunpack.c.l.b16 %v995
      %v1072 = vunpack.c.h.b16 %v995
      %v1073 = vunpack.c.l.b16 %v996
      %v1074 = vunpack.c.h.b16 %v996
      %v1075 = vunpack.c.l.b16 %v997
      %v1076 = vunpack.c.h.b16 %v997
      %v1077 = vunpack.c.l.b16 %v998
      %v1078 = vunpack.c.h.b16 %v998
      %v1079 = vunpack.c.l.b16 %v999
      %v1080 = vunpack.c.h.b16 %v999
      %v1081 = vunpack.c.l.b16 %v1000
      %v1082 = vunpack.c.h.b16 %v1000
      %v1083 = vunpack.c.l.b16 %v1001
      %v1084 = vunpack.c.h.b16 %v1001
      %v1085 = vunpack.c.l.b16 %v1002
      %v1086 = vunpack.c.h.b16 %v1002
      %v1087 = vunpack.c.l.b16 %v1003
      %v1088 = vunpack.c.h.b16 %v1003
      %v1089 = vunpack.c.l.b16 %v1004
      %v1090 = vunpack.c.h.b16 %v1004
      %v1091 = vunpack.c.l.b16 %v1005
      %v1092 = vunpack.c.h.b16 %v1005
      %v1093 = vunpack.c.l.b16 %v1006
      %v1094 = vunpack.c.h.b16 %v1006
      %v1095 = vunpack.c.l.b16 %v1007
      %v1096 = vunpack.c.h.b16 %v1007
      %v1097 = vunpack.c.l.b16 %v1008
      %v1098 = vunpack.c.h.b16 %v1008
      %v1099 = vunpack.c.l.b16 %v1009
      %v1100 = vunpack.c.h.b16 %v1009
      %v1101 = vunpack.c.l.b16 %v1010
      %v1102 = vunpack.c.h.b16 %v1010
      %v1103 = vunpack.c.l.b16 %v1011
      %v1104 = vunpack.c.h.b16 %v1011
      %v1105 = vunpack.c.l.b16 %v1012
      %v1106 = vunpack.c.h.b16 %v1012
      %v1107 = vunpack.c.l.b16 %v1013
      %v1108 = vunpack.c.h.b16 %v1013
      %v1109 = vunpack.c.l.b16 %v1014
      %v1110 = vunpack.c.h.b16 %v1014
      %v1111 = vpack.c.b16 %v1047, %v1047
      %v1112 = vpack.c.b16 %v1048, %v1048
      %v1113 = vpack.c.b16 %v1049, %v1049
      %v1114 = vpack.c.b16 %v1050, %v1050
      %v1115 = vpack.c.b16 %v1051, %v1051
      %v1116 = vpack.c.b16 %v1052, %v1052
      %v1117 = vpack.c.b16 %v1053, %v1053
      %v1118 = vpack.c.b16 %v1054, %v1054
      %v1119 = vpack.c.b16 %v1055, %v1055
      %v1120 = vpack.c.b16 %v1056, %v1056
      %v1121 = vpack.c.b16 %v1057, %v1057
      %v1122 = vpack.c.b16 %v1058, %v1058
      %v1123 = vpack.c.b16 %v1059, %v1059
      %v1124 = vpack.c.b16 %v1060, %v1060
      %v1125 = vpack.c.b16 %v1061, %v1061
      %v1126 = vpack.c.b16 %v1062, %v1062
      %v1127 = vpack.c.b16 %v1063, %v1063
      %v1128 = vpack.c.b16 %v1064, %v1064
      %v1129 = vpack.c.b16 %v1065, %v1065
      %v1130 = vpack.c.b16 %v1066, %v1066
      %v1131 = vpack.c.b16 %v1067, %v1067
      %v1132 = vpack.c.b16 %v1068, %v1068
      %v1133 = vpack.c.b16 %v1069, %v1069
      %v1134 = vpack.c.b16 %v1070, %v1070
      %v1135 = vpack.c.b16 %v1071, %v1071
      %v1136 = vpack.c.b16 %v1072, %v1072
      %v1137 = vpack.c.b16 %v1073, %v1073
      %v1138 = vpack.c.b16 %v1074, %v1074
      %v1139 = vpack.c.b16 %v1075, %v1075
      %v1140 = vpack.c.b16 %v1076, %v1076
      %v1141 = vpack.c.b16 %v1077, %v1077
      %v1142 = vpack.c.b16 %v1078, %v1078
      %v1143 = vpack.c.b16 %v1079, %v1079
      %v1144 = vpack.c.b16 %v1080, %v1080
      %v1145 = vpack.c.b16 %v1081, %v1081
      %v1146 = vpack.c.b16 %v1082, %v1082
      %v1147 = vpack.c.b16 %v1083, %v1083
      %v1148 = vpack.c.b16 %v1084, %v1084
      %v1149 = vpack.c.b16 %v1085, %v1085
      %v1150 = vpack.c.b16 %v1086, %v1086
      %v1151 = vpack.c.b16 %v1087, %v1087
      %v1152 = vpack.c.b16 %v1088, %v1088
      %v1153 = vpack.c.b16 %v1089, %v1089
      %v1154 = vpack.c.b16 %v1090, %v1090
      %v1155 = vpack.c.b16 %v1091, %v1091
      %v1156 = vpack.c.b16 %v1092, %v1092
      %v1157 = vpack.c.b16 %v1093, %v1093
      %v1158 = vpack.c.b16 %v1094, %v1094
      %v1159 = vpack.c.b16 %v1095, %v1095
      %v1160 = vpack.c.b16 %v1096, %v1096
      %v1161 = vpack.c.b16 %v1097, %v1097
      %v1162 = vpack.c.b16 %v1098, %v1098
      %v1163 = vpack.c.b16 %v1099, %v1099
      %v1164 = vpack.c.b16 %v1100, %v1100
      %v1165 = vpack.c.b16 %v1101, %v1101
      %v1166 = vpack.c.b16 %v1102, %v1102
      %v1167 = vpack.c.b16 %v1103, %v1103
      %v1168 = vpack.c.b16 %v1104, %v1104
      %v1169 = vpack.c.b16 %v1105, %v1105
      %v1170 = vpack.c.b16 %v1106, %v1106
      %v1171 = vpack.c.b16 %v1107, %v1107
      %v1172 = vpack.c.b16 %v1108, %v1108
      %v1173 = vpack.c.b16 %v1109, %v1109
      %v1174 = vpack.c.b16 %v1110, %v1110
      %1239 = vst [vmem:[%s172] sm:$0xf] %v1111
      %1240 = vst [vmem:[%s172 + $0x4] sm:$0xf] %v1112
      %1241 = vst [vmem:[%s172 + $0x8] sm:$0xf] %v1113
      %1242 = vst [vmem:[%s172 + $0xc] sm:$0xf] %v1114
      %1243 = vst [vmem:[%s172 + $0x10] sm:$0xf] %v1115
      %1244 = vst [vmem:[%s172 + $0x14] sm:$0xf] %v1116
      %1245 = vst [vmem:[%s172 + $0x18] sm:$0xf] %v1117
      %1246 = vst [vmem:[%s172 + $0x1c] sm:$0xf] %v1118
      %1247 = vst [vmem:[%s172 + $0x20] sm:$0xf] %v1119
      %1248 = vst [vmem:[%s172 + $0x24] sm:$0xf] %v1120
      %1249 = vst [vmem:[%s172 + $0x28] sm:$0xf] %v1121
      %1250 = vst [vmem:[%s172 + $0x2c] sm:$0xf] %v1122
      %1251 = vst [vmem:[%s172 + $0x30] sm:$0xf] %v1123
      %1252 = vst [vmem:[%s172 + $0x34] sm:$0xf] %v1124
      %1253 = vst [vmem:[%s172 + $0x38] sm:$0xf] %v1125
      %1254 = vst [vmem:[%s172 + $0x3c] sm:$0xf] %v1126
      %1255 = vst [vmem:[%s172 + $0x40] sm:$0xf] %v1127
      %1256 = vst [vmem:[%s172 + $0x44] sm:$0xf] %v1128
      %1257 = vst [vmem:[%s172 + $0x48] sm:$0xf] %v1129
      %1258 = vst [vmem:[%s172 + $0x4c] sm:$0xf] %v1130
      %1259 = vst [vmem:[%s172 + $0x50] sm:$0xf] %v1131
      %1260 = vst [vmem:[%s172 + $0x54] sm:$0xf] %v1132
      %1261 = vst [vmem:[%s172 + $0x58] sm:$0xf] %v1133
      %1262 = vst [vmem:[%s172 + $0x5c] sm:$0xf] %v1134
      %1263 = vst [vmem:[%s172 + $0x60] sm:$0xf] %v1135
      %1264 = vst [vmem:[%s172 + $0x64] sm:$0xf] %v1136
      %1265 = vst [vmem:[%s172 + $0x68] sm:$0xf] %v1137
      %1266 = vst [vmem:[%s172 + $0x6c] sm:$0xf] %v1138
      %1267 = vst [vmem:[%s172 + $0x70] sm:$0xf] %v1139
      %1268 = vst [vmem:[%s172 + $0x74] sm:$0xf] %v1140
      %1269 = vst [vmem:[%s172 + $0x78] sm:$0xf] %v1141
      %1270 = vst [vmem:[%s172 + $0x7c] sm:$0xf] %v1142
      %1271 = vst [vmem:[%s172 + $0x80] sm:$0xf] %v1143
      %1272 = vst [vmem:[%s172 + $0x84] sm:$0xf] %v1144
      %1273 = vst [vmem:[%s172 + $0x88] sm:$0xf] %v1145
      %1274 = vst [vmem:[%s172 + $0x8c] sm:$0xf] %v1146
      %1275 = vst [vmem:[%s172 + $0x90] sm:$0xf] %v1147
      %1276 = vst [vmem:[%s172 + $0x94] sm:$0xf] %v1148
      %1277 = vst [vmem:[%s172 + $0x98] sm:$0xf] %v1149
      %1278 = vst [vmem:[%s172 + $0x9c] sm:$0xf] %v1150
      %1279 = vst [vmem:[%s172 + $0xa0] sm:$0xf] %v1151
      %1280 = vst [vmem:[%s172 + $0xa4] sm:$0xf] %v1152
      %1281 = vst [vmem:[%s172 + $0xa8] sm:$0xf] %v1153
      %1282 = vst [vmem:[%s172 + $0xac] sm:$0xf] %v1154
      %1283 = vst [vmem:[%s172 + $0xb0] sm:$0xf] %v1155
      %1284 = vst [vmem:[%s172 + $0xb4] sm:$0xf] %v1156
      %1285 = vst [vmem:[%s172 + $0xb8] sm:$0xf] %v1157
      %1286 = vst [vmem:[%s172 + $0xbc] sm:$0xf] %v1158
      %1287 = vst [vmem:[%s172 + $0xc0] sm:$0xf] %v1159
      %1288 = vst [vmem:[%s172 + $0xc4] sm:$0xf] %v1160
      %1289 = vst [vmem:[%s172 + $0xc8] sm:$0xf] %v1161
      %1290 = vst [vmem:[%s172 + $0xcc] sm:$0xf] %v1162
      %1291 = vst [vmem:[%s172 + $0xd0] sm:$0xf] %v1163
      %1292 = vst [vmem:[%s172 + $0xd4] sm:$0xf] %v1164
      %1293 = vst [vmem:[%s172 + $0xd8] sm:$0xf] %v1165
      %1294 = vst [vmem:[%s172 + $0xdc] sm:$0xf] %v1166
      %1295 = vst [vmem:[%s172 + $0xe0] sm:$0xf] %v1167
      %1296 = vst [vmem:[%s172 + $0xe4] sm:$0xf] %v1168
      %1297 = vst [vmem:[%s172 + $0xe8] sm:$0xf] %v1169
      %1298 = vst [vmem:[%s172 + $0xec] sm:$0xf] %v1170
      %1299 = vst [vmem:[%s172 + $0xf0] sm:$0xf] %v1171
      %1300 = vst [vmem:[%s172 + $0xf4] sm:$0xf] %v1172
      %1301 = vst [vmem:[%s172 + $0xf8] sm:$0xf] %v1173
      %1302 = vst [vmem:[%s172 + $0xfc] sm:$0xf] %v1174
      %s1303 = smul.u32 64, %s14
      %p1304 = scmp.lt.s32.totalorder %s1303, 255
      %s1305 = scalar_select %p1304, %s1303, 255
      %s1306 = smul.addr %s1305, 4
      %s1307 = scalar_lea.vmem %s3, %s1306
      // Predicated region
      $region33: #{discriminator_s_forward.6} parent=31 // pred_check
        %p1308 = pneg %p100
      $region34: #{discriminator_s_forward.6} parent=31 // pred_check_branch
        %1310 = sbr.rel (%p1308) target = $region36
      $region35: #{discriminator_s_forward.6} parent=31 // pred_region
        %s1311 = smul.u32 64, %s14
      $region36: #{discriminator_s_forward.6} parent=31 // pred_fallthru
        _
    $region32: #{discriminator_s_forward.6} parent=5 // pred_fallthru
      _
    %p1312 = scmp.le.s32.totalorder 2, %s9
    // Predicated region
    $region37: #{discriminator_s_forward.6} parent=5 // pred_check
      %p1313 = pneg %p1312
    $region38: #{discriminator_s_forward.6} parent=5 // pred_check_branch
      %1315 = sbr.rel (%p1313) target = $region40
    $region39: #{discriminator_s_forward.6} parent=5 // pred_region
      %s1316 = ssub.s32 %s9, 2
      // Predicated region
      $region41: #{discriminator_s_forward.6} parent=39 // pred_check
        %p1317 = pneg %p106
      $region42: #{discriminator_s_forward.6} parent=39 // pred_check_branch
        %1319 = sbr.rel (%p1317) target = $region44
      $region43: #{discriminator_s_forward.6} parent=39 // pred_region
        %s1320 = smul.u32 64, %s15
        %p1321 = scmp.lt.s32.totalorder %s1320, 255
        %s1322 = scalar_select %p1321, %s1320, 255
        %s1323 = smul.addr %s1322, 4
        %s1324 = scalar_lea.vmem %s3, %s1323
      $region44: #{discriminator_s_forward.6} parent=39 // pred_fallthru
        _
    $region40: #{discriminator_s_forward.6} parent=5 // pred_fallthru
      _
  $region6: #{discriminator_s_forward.6} parent=0 // loop_footer
    %s13 = sadd.s32 1, %s9
  $region7: #{discriminator_s_forward.6} parent=0 // loop_footer_branch
    %8 = sbr.rel target = $region3
  $region8: #{discriminator_s_forward.6} parent=0 // loop_exit
    _

// kernel: discriminator_s_forward.7
$region0: #{discriminator_s_forward.7}
  #allocation0 [shape = 'u32[]', space=smem, size = 0x4, offset = 0x4, fixed_abs, tag = 'smem constant byte address 0x4 - core index']
  #allocation1 [shape = 'u32[144,128]{1,0:T(1,128)}', space=vmem, size = 0x12000, scoped, tag = 'internal scratch']
  %s0 = inlined_call_operand.vmem [shape: bf16[512,384], index: 0, kind: input, shape index: {}]
  %s1 = inlined_call_operand.vmem [shape: bf16[384,128], index: 1, kind: input, shape index: {}]
  %s2 = inlined_call_operand.vmem [shape: f32[1,128], index: 2, kind: input, shape index: {}]
  %s3 = inlined_call_operand.vmem [shape: bf16[512,128], index: 3, kind: output, shape index: {}]
  %s4 = sld [smem:[#allocation0]]
  $region45: #{discriminator_s_forward.7} parent=0
    _
  %s6 = ssub.s32 1, %s4
  %s7 = scalar_select 0, %s6, %s4
  loop: start=0, step=1, limit=4
  $region2: #{discriminator_s_forward.7} parent=0 // loop_pre_header
    _
  $region3: #{discriminator_s_forward.7} parent=0 // loop_header
    %s9 = sphi 0, %s13
    %p10 = scmp.ge.s32.totalorder %s9, 4
    %s19 = sphi 0, %s21
    %s22 = sphi 0, %s19
    %s23 = sphi 0, %s22
    %s39 = sphi 0, %s23
    %s43 = sphi 0, %s43
    %s45 = sphi 0, %s43
    %s46 = sphi 0, %s45
    %s60 = sphi 0, %s46
    %s64 = sphi 0, %s64
    %s66 = sphi 0, %s64
    %s67 = sphi 0, %s66
    %s81 = sphi 0, %s67
    %s87 = sphi 0, %s89
    %s90 = sphi 0, %s87
    %s91 = sphi 0, %s90
    %s107 = sphi 0, %s91
  $region4: #{discriminator_s_forward.7} parent=0 // loop_header_branch
    %12 = sbr.rel (%p10) target = $region8
  $region5: #{discriminator_s_forward.7} parent=0 // loop_body
    %s14 = ssub.s32 %s9, 1
    %s15 = ssub.s32 %s9, 2
    %s16 = sadd.s32 %s9, 1
    %s17 = ssub.s32 %s9, %s16
    %p18 = scmp.eq.s32.totalorder %s17, 0
    %s20 = sadd.s32 %s19, 1
    %s21 = scalar_select %p18, %s19, %s20
    %p24 = pneg %p18
    %p25 = scmp.eq.s32.totalorder %s9, 1
    %p26 = por %p24, %p25
    %p27 = scmp.ne.s32.totalorder %s19, %s22
    %p28 = scmp.eq.s32.totalorder %s9, 0
    %p29 = por %p27, %p28
    %p30 = scmp.ne.s32.totalorder %s19, %s22
    %p31 = scmp.eq.s32.totalorder %s14, 1
    %p32 = por %p30, %p31
    %p33 = scmp.ne.s32.totalorder %s22, %s23
    %p34 = scmp.eq.s32.totalorder %s14, 0
    %p35 = por %p33, %p34
    %p36 = scmp.ne.s32.totalorder %s22, %s23
    %p37 = scmp.eq.s32.totalorder %s15, 1
    %p38 = por %p36, %p37
    %p40 = scmp.ne.s32.totalorder %s23, %s39
    %p41 = scmp.eq.s32.totalorder %s15, 0
    %p42 = por %p40, %p41
    %s44 = sadd.s32 %s43, 1
    %p47 = scmp.eq.s32.totalorder %s9, 1
    %p48 = scmp.ne.s32.totalorder %s43, %s45
    %p49 = scmp.eq.s32.totalorder %s9, 0
    %p50 = por %p48, %p49
    %p51 = scmp.ne.s32.totalorder %s43, %s45
    %p52 = scmp.eq.s32.totalorder %s14, 1
    %p53 = por %p51, %p52
    %p54 = scmp.ne.s32.totalorder %s45, %s46
    %p55 = scmp.eq.s32.totalorder %s14, 0
    %p56 = por %p54, %p55
    %p57 = scmp.ne.s32.totalorder %s45, %s46
    %p58 = scmp.eq.s32.totalorder %s15, 1
    %p59 = por %p57, %p58
    %p61 = scmp.ne.s32.totalorder %s46, %s60
    %p62 = scmp.eq.s32.totalorder %s15, 0
    %p63 = por %p61, %p62
    %s65 = sadd.s32 %s64, 1
    %p68 = scmp.eq.s32.totalorder %s9, 1
    %p69 = scmp.ne.s32.totalorder %s64, %s66
    %p70 = scmp.eq.s32.totalorder %s9, 0
    %p71 = por %p69, %p70
    %p72 = scmp.ne.s32.totalorder %s64, %s66
    %p73 = scmp.eq.s32.totalorder %s14, 1
    %p74 = por %p72, %p73
    %p75 = scmp.ne.s32.totalorder %s66, %s67
    %p76 = scmp.eq.s32.totalorder %s14, 0
    %p77 = por %p75, %p76
    %p78 = scmp.ne.s32.totalorder %s66, %s67
    %p79 = scmp.eq.s32.totalorder %s15, 1
    %p80 = por %p78, %p79
    %p82 = scmp.ne.s32.totalorder %s67, %s81
    %p83 = scmp.eq.s32.totalorder %s15, 0
    %p84 = por %p82, %p83
    %s85 = ssub.s32 %s9, %s16
    %p86 = scmp.eq.s32.totalorder %s85, 0
    %s88 = sadd.s32 %s87, 1
    %s89 = scalar_select %p86, %s87, %s88
    %p92 = pneg %p86
    %p93 = scmp.eq.s32.totalorder %s9, 1
    %p94 = por %p92, %p93
    %p95 = scmp.ne.s32.totalorder %s87, %s90
    %p96 = scmp.eq.s32.totalorder %s9, 0
    %p97 = por %p95, %p96
    %p98 = scmp.ne.s32.totalorder %s87, %s90
    %p99 = scmp.eq.s32.totalorder %s14, 1
    %p100 = por %p98, %p99
    %p101 = scmp.ne.s32.totalorder %s90, %s91
    %p102 = scmp.eq.s32.totalorder %s14, 0
    %p103 = por %p101, %p102
    %p104 = scmp.ne.s32.totalorder %s90, %s91
    %p105 = scmp.eq.s32.totalorder %s15, 1
    %p106 = por %p104, %p105
    %p108 = scmp.ne.s32.totalorder %s91, %s107
    %p109 = scmp.eq.s32.totalorder %s15, 0
    %p110 = por %p108, %p109
    %p111 = scmp.le.s32.totalorder 1, %s9
    %p112 = scmp.lt.s32.totalorder %s9, 3
    %p113 = pnand %p111, %p112
    %p114 = pneg %p113
    // Predicated region
    $region9: #{discriminator_s_forward.7} parent=5 // pred_check
      _
    $region10: #{discriminator_s_forward.7} parent=5 // pred_check_branch
      %116 = sbr.rel (%p113) target = $region12
    $region11: #{discriminator_s_forward.7} parent=5 // pred_region
      %s117 = ssub.s32 %s9, 1
      // Predicated region
      $region13: #{discriminator_s_forward.7} parent=11 // pred_check
        %p118 = pneg %p56
      $region14: #{discriminator_s_forward.7} parent=11 // pred_check_branch
        %120 = sbr.rel (%p118) target = $region16
      $region15: #{discriminator_s_forward.7} parent=11 // pred_region
        _
      $region16: #{discriminator_s_forward.7} parent=11 // pred_fallthru
        _
      // Predicated region
      $region17: #{discriminator_s_forward.7} parent=11 // pred_check
        %p121 = pneg %p77
      $region18: #{discriminator_s_forward.7} parent=11 // pred_check_branch
        %123 = sbr.rel (%p121) target = $region20
      $region19: #{discriminator_s_forward.7} parent=11 // pred_region
        _
      $region20: #{discriminator_s_forward.7} parent=11 // pred_fallthru
        _
    $region12: #{discriminator_s_forward.7} parent=5 // pred_fallthru
      _
    %p124 = scmp.lt.s32.totalorder %s9, 2
    // Predicated region
    $region21: #{discriminator_s_forward.7} parent=5 // pred_check
      %p125 = pneg %p124
    $region22: #{discriminator_s_forward.7} parent=5 // pred_check_branch
      %127 = sbr.rel (%p125) target = $region24
    $region23: #{discriminator_s_forward.7} parent=5 // pred_region
      // Predicated region
      $region25: #{discriminator_s_forward.7} parent=23 // pred_check
        %p128 = pneg %p29
      $region26: #{discriminator_s_forward.7} parent=23 // pred_check_branch
        %130 = sbr.rel (%p128) target = $region28
      $region27: #{discriminator_s_forward.7} parent=23 // pred_region
        %s131 = smul.u32 32, %s9
        %p132 = scmp.lt.s32.totalorder %s131, 63
        %s133 = scalar_select %p132, %s131, 63
        %s134 = smul.addr %s133, 3
        %s135 = smul.addr %s134, 4
        %s136 = scalar_lea.vmem %s0, %s135
        %s137 = smul.u32 32, %s9
      $region28: #{discriminator_s_forward.7} parent=23 // pred_fallthru
        _
    $region24: #{discriminator_s_forward.7} parent=5 // pred_fallthru
      _
    %p138 = scmp.le.s32.totalorder 1, %s9
    %p139 = scmp.lt.s32.totalorder %s9, 3
    %p140 = pnand %p138, %p139
    %p141 = pneg %p140
    // Predicated region
    $region29: #{discriminator_s_forward.7} parent=5 // pred_check
      _
    $region30: #{discriminator_s_forward.7} parent=5 // pred_check_branch
      %143 = sbr.rel (%p140) target = $region32
    $region31: #{discriminator_s_forward.7} parent=5 // pred_region
      %s144 = ssub.s32 %s9, 1
      %s145 = smul.u32 32, %s14
      %p146 = scmp.lt.s32.totalorder %s145, 63
      %s147 = scalar_select %p146, %s145, 63
      %s148 = smul.addr %s147, 3
      %s149 = smul.addr %s148, 4
      %s150 = scalar_lea.vmem %s0, %s149
      %p151 = pneg %p35
      %p152 = pneg %p32
      %p153 = pneg %p56
      %p154 = pneg %p53
      %p155 = pneg %p77
      %p156 = pneg %p74
      %p157 = pneg %p103
      %p158 = pneg %p100
      %s159 = smul.u32 32, %s14
      %p160 = scmp.lt.s32.totalorder %s159, 63
      %s161 = scalar_select %p160, %s159, 63
      %s162 = smul.addr %s161, 4
      %s163 = scalar_lea.vmem %s3, %s162
      %s164 = smul.u32 32, %s14
      %p165 = scmp.lt.s32.totalorder %s164, 63
      %s166 = scalar_select %p165, %s164, 63
      %s167 = smul.addr %s166, 3
      %s168 = smul.addr %s167, 4
      %s169 = scalar_lea.vmem %s0, %s168
      %s170 = smul.u32 32, %s14
      %s171 = smul.u32 32, %s14
      %p172 = scmp.lt.s32.totalorder %s171, 63
      %s173 = scalar_select %p172, %s171, 63
      %s174 = smul.addr %s173, 4
      %s175 = scalar_lea.vmem %s3, %s174
      %s176 = smul.u32 32, %s14
      %v178 = vld [vmem:[%s169] sm:$0xff]
      %v179 = vld [vmem:[%s169 + $0x8] sm:$0xf]
      %v180 = vld [vmem:[%s169 + $0xc] sm:$0xff]
      %v181 = vld [vmem:[%s169 + $0x14] sm:$0xf]
      %v182 = vld [vmem:[%s169 + $0x18] sm:$0xff]
      %v183 = vld [vmem:[%s169 + $0x20] sm:$0xf]
      %v184 = vld [vmem:[%s169 + $0x24] sm:$0xff]
      %v185 = vld [vmem:[%s169 + $0x2c] sm:$0xf]
      %v186 = vld [vmem:[%s169 + $0x30] sm:$0xff]
      %v187 = vld [vmem:[%s169 + $0x38] sm:$0xf]
      %v188 = vld [vmem:[%s169 + $0x3c] sm:$0xff]
      %v189 = vld [vmem:[%s169 + $0x44] sm:$0xf]
      %v190 = vld [vmem:[%s169 + $0x48] sm:$0xff]
      %v191 = vld [vmem:[%s169 + $0x50] sm:$0xf]
      %v192 = vld [vmem:[%s169 + $0x54] sm:$0xff]
      %v193 = vld [vmem:[%s169 + $0x5c] sm:$0xf]
      %v194 = vld [vmem:[%s169 + $0x60] sm:$0xff]
      %v195 = vld [vmem:[%s169 + $0x68] sm:$0xf]
      %v196 = vld [vmem:[%s169 + $0x6c] sm:$0xff]
      %v197 = vld [vmem:[%s169 + $0x74] sm:$0xf]
      %v198 = vld [vmem:[%s169 + $0x78] sm:$0xff]
      %v199 = vld [vmem:[%s169 + $0x80] sm:$0xf]
      %v200 = vld [vmem:[%s169 + $0x84] sm:$0xff]
      %v201 = vld [vmem:[%s169 + $0x8c] sm:$0xf]
      %v202 = vld [vmem:[%s169 + $0x90] sm:$0xff]
      %v203 = vld [vmem:[%s169 + $0x98] sm:$0xf]
      %v204 = vld [vmem:[%s169 + $0x9c] sm:$0xff]
      %v205 = vld [vmem:[%s169 + $0xa4] sm:$0xf]
      %v206 = vld [vmem:[%s169 + $0xa8] sm:$0xff]
      %v207 = vld [vmem:[%s169 + $0xb0] sm:$0xf]
      %v208 = vld [vmem:[%s169 + $0xb4] sm:$0xff]
      %v209 = vld [vmem:[%s169 + $0xbc] sm:$0xf]
      %v210 = vld [vmem:[%s169 + $0xc0] sm:$0xff]
      %v211 = vld [vmem:[%s169 + $0xc8] sm:$0xf]
      %v212 = vld [vmem:[%s169 + $0xcc] sm:$0xff]
      %v213 = vld [vmem:[%s169 + $0xd4] sm:$0xf]
      %v214 = vld [vmem:[%s169 + $0xd8] sm:$0xff]
      %v215 = vld [vmem:[%s169 + $0xe0] sm:$0xf]
      %v216 = vld [vmem:[%s169 + $0xe4] sm:$0xff]
      %v217 = vld [vmem:[%s169 + $0xec] sm:$0xf]
      %v218 = vld [vmem:[%s169 + $0xf0] sm:$0xff]
      %v219 = vld [vmem:[%s169 + $0xf8] sm:$0xf]
      %v220 = vld [vmem:[%s169 + $0xfc] sm:$0xff]
      %v221 = vld [vmem:[%s169 + $0x104] sm:$0xf]
      %v222 = vld [vmem:[%s169 + $0x108] sm:$0xff]
      %v223 = vld [vmem:[%s169 + $0x110] sm:$0xf]
      %v224 = vld [vmem:[%s169 + $0x114] sm:$0xff]
      %v225 = vld [vmem:[%s169 + $0x11c] sm:$0xf]
      %v226 = vld [vmem:[%s169 + $0x120] sm:$0xff]
      %v227 = vld [vmem:[%s169 + $0x128] sm:$0xf]
      %v228 = vld [vmem:[%s169 + $0x12c] sm:$0xff]
      %v229 = vld [vmem:[%s169 + $0x134] sm:$0xf]
      %v230 = vld [vmem:[%s169 + $0x138] sm:$0xff]
      %v231 = vld [vmem:[%s169 + $0x140] sm:$0xf]
      %v232 = vld [vmem:[%s169 + $0x144] sm:$0xff]
      %v233 = vld [vmem:[%s169 + $0x14c] sm:$0xf]
      %v234 = vld [vmem:[%s169 + $0x150] sm:$0xff]
      %v235 = vld [vmem:[%s169 + $0x158] sm:$0xf]
      %v236 = vld [vmem:[%s169 + $0x15c] sm:$0xff]
      %v237 = vld [vmem:[%s169 + $0x164] sm:$0xf]
      %v238 = vld [vmem:[%s169 + $0x168] sm:$0xff]
      %v239 = vld [vmem:[%s169 + $0x170] sm:$0xf]
      %v240 = vld [vmem:[%s169 + $0x174] sm:$0xff]
      %v241 = vld [vmem:[%s169 + $0x17c] sm:$0xf]
      %v242 = vld [vmem:[%s1] sm:$0xf]
      %v243 = vld [vmem:[%s1 + $0x4] sm:$0xf]
      %v244 = vld [vmem:[%s1 + $0x8] sm:$0xf]
      %v245 = vld [vmem:[%s1 + $0xc] sm:$0xf]
      %v246 = vld [vmem:[%s1 + $0x10] sm:$0xf]
      %v247 = vld [vmem:[%s1 + $0x14] sm:$0xf]
      %v248 = vld [vmem:[%s1 + $0x18] sm:$0xf]
      %v249 = vld [vmem:[%s1 + $0x1c] sm:$0xf]
      %v250 = vld [vmem:[%s1 + $0x20] sm:$0xf]
      %v251 = vld [vmem:[%s1 + $0x24] sm:$0xf]
      %v252 = vld [vmem:[%s1 + $0x28] sm:$0xf]
      %v253 = vld [vmem:[%s1 + $0x2c] sm:$0xf]
      %v254 = vld [vmem:[%s1 + $0x30] sm:$0xf]
      %v255 = vld [vmem:[%s1 + $0x34] sm:$0xf]
      %v256 = vld [vmem:[%s1 + $0x38] sm:$0xf]
      %v257 = vld [vmem:[%s1 + $0x3c] sm:$0xf]
      %v258 = vld [vmem:[%s1 + $0x40] sm:$0xf]
      %v259 = vld [vmem:[%s1 + $0x44] sm:$0xf]
      %v260 = vld [vmem:[%s1 + $0x48] sm:$0xf]
      %v261 = vld [vmem:[%s1 + $0x4c] sm:$0xf]
      %v262 = vld [vmem:[%s1 + $0x50] sm:$0xf]
      %v263 = vld [vmem:[%s1 + $0x54] sm:$0xf]
      %v264 = vld [vmem:[%s1 + $0x58] sm:$0xf]
      %v265 = vld [vmem:[%s1 + $0x5c] sm:$0xf]
      %v266 = vld [vmem:[%s1 + $0x60] sm:$0xf]
      %v267 = vld [vmem:[%s1 + $0x64] sm:$0xf]
      %v268 = vld [vmem:[%s1 + $0x68] sm:$0xf]
      %v269 = vld [vmem:[%s1 + $0x6c] sm:$0xf]
      %v270 = vld [vmem:[%s1 + $0x70] sm:$0xf]
      %v271 = vld [vmem:[%s1 + $0x74] sm:$0xf]
      %v272 = vld [vmem:[%s1 + $0x78] sm:$0xf]
      %v273 = vld [vmem:[%s1 + $0x7c] sm:$0xf]
      %v274 = vld [vmem:[%s1 + $0x80] sm:$0xf]
      %v275 = vld [vmem:[%s1 + $0x84] sm:$0xf]
      %v276 = vld [vmem:[%s1 + $0x88] sm:$0xf]
      %v277 = vld [vmem:[%s1 + $0x8c] sm:$0xf]
      %v278 = vld [vmem:[%s1 + $0x90] sm:$0xf]
      %v279 = vld [vmem:[%s1 + $0x94] sm:$0xf]
      %v280 = vld [vmem:[%s1 + $0x98] sm:$0xf]
      %v281 = vld [vmem:[%s1 + $0x9c] sm:$0xf]
      %v282 = vld [vmem:[%s1 + $0xa0] sm:$0xf]
      %v283 = vld [vmem:[%s1 + $0xa4] sm:$0xf]
      %v284 = vld [vmem:[%s1 + $0xa8] sm:$0xf]
      %v285 = vld [vmem:[%s1 + $0xac] sm:$0xf]
      %v286 = vld [vmem:[%s1 + $0xb0] sm:$0xf]
      %v287 = vld [vmem:[%s1 + $0xb4] sm:$0xf]
      %v288 = vld [vmem:[%s1 + $0xb8] sm:$0xf]
      %v289 = vld [vmem:[%s1 + $0xbc] sm:$0xf]
      %v290 = vld [vmem:[%s2] sm:$0x1]
      %v292 = vlaneseq
      %v293 = vshrl.u32 %v292, 7
      %v294 = vsub.s32 0, %v293
      %v295 = vrot.slane %v290, %v294
      %v361 = vunpack.c.l.b16 %v178
      %v362 = vunpack.c.h.b16 %v178
      %v363 = vunpack.c.l.b16 %v179
      %v364 = vunpack.c.l.b16 %v180
      %v365 = vunpack.c.h.b16 %v180
      %v366 = vunpack.c.l.b16 %v181
      %v367 = vunpack.c.l.b16 %v182
      %v368 = vunpack.c.h.b16 %v182
      %v369 = vunpack.c.l.b16 %v183
      %v370 = vunpack.c.l.b16 %v184
      %v371 = vunpack.c.h.b16 %v184
      %v372 = vunpack.c.l.b16 %v185
      %v373 = vunpack.c.l.b16 %v186
      %v374 = vunpack.c.h.b16 %v186
      %v375 = vunpack.c.l.b16 %v187
      %v376 = vunpack.c.l.b16 %v188
      %v377 = vunpack.c.h.b16 %v188
      %v378 = vunpack.c.l.b16 %v189
      %v379 = vunpack.c.l.b16 %v190
      %v380 = vunpack.c.h.b16 %v190
      %v381 = vunpack.c.l.b16 %v191
      %v382 = vunpack.c.l.b16 %v192
      %v383 = vunpack.c.h.b16 %v192
      %v384 = vunpack.c.l.b16 %v193
      %v385 = vunpack.c.l.b16 %v194
      %v386 = vunpack.c.h.b16 %v194
      %v387 = vunpack.c.l.b16 %v195
      %v388 = vunpack.c.l.b16 %v196
      %v389 = vunpack.c.h.b16 %v196
      %v390 = vunpack.c.l.b16 %v197
      %v391 = vunpack.c.l.b16 %v198
      %v392 = vunpack.c.h.b16 %v198
      %v393 = vunpack.c.l.b16 %v199
      %v394 = vunpack.c.l.b16 %v200
      %v395 = vunpack.c.h.b16 %v200
      %v396 = vunpack.c.l.b16 %v201
      %v397 = vunpack.c.l.b16 %v202
      %v398 = vunpack.c.h.b16 %v202
      %v399 = vunpack.c.l.b16 %v203
      %v400 = vunpack.c.l.b16 %v204
      %v401 = vunpack.c.h.b16 %v204
      %v402 = vunpack.c.l.b16 %v205
      %v403 = vunpack.c.l.b16 %v206
      %v404 = vunpack.c.h.b16 %v206
      %v405 = vunpack.c.l.b16 %v207
      %v406 = vunpack.c.l.b16 %v208
      %v407 = vunpack.c.h.b16 %v208
      %v408 = vunpack.c.l.b16 %v209
      %v409 = vunpack.c.l.b16 %v210
      %v410 = vunpack.c.h.b16 %v210
      %v411 = vunpack.c.l.b16 %v211
      %v412 = vunpack.c.l.b16 %v212
      %v413 = vunpack.c.h.b16 %v212
      %v414 = vunpack.c.l.b16 %v213
      %v415 = vunpack.c.l.b16 %v214
      %v416 = vunpack.c.h.b16 %v214
      %v417 = vunpack.c.l.b16 %v215
      %v418 = vunpack.c.l.b16 %v216
      %v419 = vunpack.c.h.b16 %v216
      %v420 = vunpack.c.l.b16 %v217
      %v421 = vunpack.c.l.b16 %v218
      %v422 = vunpack.c.h.b16 %v218
      %v423 = vunpack.c.l.b16 %v219
      %v424 = vunpack.c.l.b16 %v220
      %v425 = vunpack.c.h.b16 %v220
      %v426 = vunpack.c.l.b16 %v221
      %v427 = vunpack.c.l.b16 %v222
      %v428 = vunpack.c.h.b16 %v222
      %v429 = vunpack.c.l.b16 %v223
      %v430 = vunpack.c.l.b16 %v224
      %v431 = vunpack.c.h.b16 %v224
      %v432 = vunpack.c.l.b16 %v225
      %v433 = vunpack.c.l.b16 %v226
      %v434 = vunpack.c.h.b16 %v226
      %v435 = vunpack.c.l.b16 %v227
      %v436 = vunpack.c.l.b16 %v228
      %v437 = vunpack.c.h.b16 %v228
      %v438 = vunpack.c.l.b16 %v229
      %v439 = vunpack.c.l.b16 %v230
      %v440 = vunpack.c.h.b16 %v230
      %v441 = vunpack.c.l.b16 %v231
      %v442 = vunpack.c.l.b16 %v232
      %v443 = vunpack.c.h.b16 %v232
      %v444 = vunpack.c.l.b16 %v233
      %v445 = vunpack.c.l.b16 %v234
      %v446 = vunpack.c.h.b16 %v234
      %v447 = vunpack.c.l.b16 %v235
      %v448 = vunpack.c.l.b16 %v236
      %v449 = vunpack.c.h.b16 %v236
      %v450 = vunpack.c.l.b16 %v237
      %v451 = vunpack.c.l.b16 %v238
      %v452 = vunpack.c.h.b16 %v238
      %v453 = vunpack.c.l.b16 %v239
      %v454 = vunpack.c.l.b16 %v240
      %v455 = vunpack.c.h.b16 %v240
      %v456 = vunpack.c.l.b16 %v241
      %v457 = vpack.c.b16 %v364, %v361
      %v458 = vpack.c.b16 %v365, %v362
      %v459 = vpack.c.b16 %v366, %v363
      %v460 = vpack.c.b16 %v370, %v367
      %v461 = vpack.c.b16 %v371, %v368
      %v462 = vpack.c.b16 %v372, %v369
      %v463 = vpack.c.b16 %v376, %v373
      %v464 = vpack.c.b16 %v377, %v374
      %v465 = vpack.c.b16 %v378, %v375
      %v466 = vpack.c.b16 %v382, %v379
      %v467 = vpack.c.b16 %v383, %v380
      %v468 = vpack.c.b16 %v384, %v381
      %v469 = vpack.c.b16 %v388, %v385
      %v470 = vpack.c.b16 %v389, %v386
      %v471 = vpack.c.b16 %v390, %v387
      %v472 = vpack.c.b16 %v394, %v391
      %v473 = vpack.c.b16 %v395, %v392
      %v474 = vpack.c.b16 %v396, %v393
      %v475 = vpack.c.b16 %v400, %v397
      %v476 = vpack.c.b16 %v401, %v398
      %v477 = vpack.c.b16 %v402, %v399
      %v478 = vpack.c.b16 %v406, %v403
      %v479 = vpack.c.b16 %v407, %v404
      %v480 = vpack.c.b16 %v408, %v405
      %v481 = vpack.c.b16 %v412, %v409
      %v482 = vpack.c.b16 %v413, %v410
      %v483 = vpack.c.b16 %v414, %v411
      %v484 = vpack.c.b16 %v418, %v415
      %v485 = vpack.c.b16 %v419, %v416
      %v486 = vpack.c.b16 %v420, %v417
      %v487 = vpack.c.b16 %v424, %v421
      %v488 = vpack.c.b16 %v425, %v422
      %v489 = vpack.c.b16 %v426, %v423
      %v490 = vpack.c.b16 %v430, %v427
      %v491 = vpack.c.b16 %v431, %v428
      %v492 = vpack.c.b16 %v432, %v429
      %v493 = vpack.c.b16 %v436, %v433
      %v494 = vpack.c.b16 %v437, %v434
      %v495 = vpack.c.b16 %v438, %v435
      %v496 = vpack.c.b16 %v442, %v439
      %v497 = vpack.c.b16 %v443, %v440
      %v498 = vpack.c.b16 %v444, %v441
      %v499 = vpack.c.b16 %v448, %v445
      %v500 = vpack.c.b16 %v449, %v446
      %v501 = vpack.c.b16 %v450, %v447
      %v502 = vpack.c.b16 %v454, %v451
      %v503 = vpack.c.b16 %v455, %v452
      %v504 = vpack.c.b16 %v456, %v453
      %v601 = vunpack.c.l.b16 %v242
      %v602 = vunpack.c.l.b16 %v243
      %v603 = vunpack.c.l.b16 %v244
      %v604 = vunpack.c.l.b16 %v245
      %v605 = vunpack.c.l.b16 %v246
      %v606 = vunpack.c.l.b16 %v247
      %v607 = vunpack.c.l.b16 %v248
      %v608 = vunpack.c.l.b16 %v249
      %v609 = vunpack.c.l.b16 %v250
      %v610 = vunpack.c.l.b16 %v251
      %v611 = vunpack.c.l.b16 %v252
      %v612 = vunpack.c.l.b16 %v253
      %v613 = vunpack.c.l.b16 %v254
      %v614 = vunpack.c.l.b16 %v255
      %v615 = vunpack.c.l.b16 %v256
      %v616 = vunpack.c.l.b16 %v257
      %v617 = vunpack.c.l.b16 %v258
      %v618 = vunpack.c.l.b16 %v259
      %v619 = vunpack.c.l.b16 %v260
      %v620 = vunpack.c.l.b16 %v261
      %v621 = vunpack.c.l.b16 %v262
      %v622 = vunpack.c.l.b16 %v263
      %v623 = vunpack.c.l.b16 %v264
      %v624 = vunpack.c.l.b16 %v265
      %v625 = vunpack.c.l.b16 %v266
      %v626 = vunpack.c.l.b16 %v267
      %v627 = vunpack.c.l.b16 %v268
      %v628 = vunpack.c.l.b16 %v269
      %v629 = vunpack.c.l.b16 %v270
      %v630 = vunpack.c.l.b16 %v271
      %v631 = vunpack.c.l.b16 %v272
      %v632 = vunpack.c.l.b16 %v273
      %v633 = vunpack.c.l.b16 %v274
      %v634 = vunpack.c.l.b16 %v275
      %v635 = vunpack.c.l.b16 %v276
      %v636 = vunpack.c.l.b16 %v277
      %v637 = vunpack.c.l.b16 %v278
      %v638 = vunpack.c.l.b16 %v279
      %v639 = vunpack.c.l.b16 %v280
      %v640 = vunpack.c.l.b16 %v281
      %v641 = vunpack.c.l.b16 %v282
      %v642 = vunpack.c.l.b16 %v283
      %v643 = vunpack.c.l.b16 %v284
      %v644 = vunpack.c.l.b16 %v285
      %v645 = vunpack.c.l.b16 %v286
      %v646 = vunpack.c.l.b16 %v287
      %v647 = vunpack.c.l.b16 %v288
      %v648 = vunpack.c.l.b16 %v289
      %v649 = vpack.c.b16 %v602, %v601
      %v650 = vpack.c.b16 %v604, %v603
      %v651 = vpack.c.b16 %v606, %v605
      %v652 = vpack.c.b16 %v608, %v607
      %v653 = vpack.c.b16 %v610, %v609
      %v654 = vpack.c.b16 %v612, %v611
      %v655 = vpack.c.b16 %v614, %v613
      %v656 = vpack.c.b16 %v616, %v615
      %v657 = vpack.c.b16 %v618, %v617
      %v658 = vpack.c.b16 %v620, %v619
      %v659 = vpack.c.b16 %v622, %v621
      %v660 = vpack.c.b16 %v624, %v623
      %v661 = vpack.c.b16 %v626, %v625
      %v662 = vpack.c.b16 %v628, %v627
      %v663 = vpack.c.b16 %v630, %v629
      %v664 = vpack.c.b16 %v632, %v631
      %v665 = vpack.c.b16 %v634, %v633
      %v666 = vpack.c.b16 %v636, %v635
      %v667 = vpack.c.b16 %v638, %v637
      %v668 = vpack.c.b16 %v640, %v639
      %v669 = vpack.c.b16 %v642, %v641
      %v670 = vpack.c.b16 %v644, %v643
      %v671 = vpack.c.b16 %v646, %v645
      %v672 = vpack.c.b16 %v648, %v647
      %697 = vmatprep.subr.bf16.mxu0 0
      %698 = vmatpush1.bf16.msra.mxu0 %v656
      %699 = vmatprep.subr.bf16.mxu0 0
      %700 = vmatpush1.bf16.msra.mxu0 %v655
      %701 = vmatprep.subr.bf16.mxu0 0
      %702 = vmatpush1.bf16.msra.mxu0 %v654
      %703 = vmatprep.subr.bf16.mxu0 0
      %704 = vmatpush1.bf16.msra.mxu0 %v653
      %705 = vmatprep.subr.bf16.mxu0 0
      %706 = vmatpush1.bf16.msra.mxu0 %v652
      %707 = vmatprep.subr.bf16.mxu0 0
      %708 = vmatpush1.bf16.msra.mxu0 %v651
      %709 = vmatprep.subr.bf16.mxu0 0
      %710 = vmatpush1.bf16.msra.mxu0 %v650
      %711 = vmatprep.subr.bf16.mxu0 0
      %712 = vmatpush1.bf16.msra.mxu0 %v649
      %713 = vmatprep.subr.bf16.mxu0 0
      %714 = vmatpush2.bf16.msra.mxu0 %v664
      %715 = vmatprep.subr.bf16.mxu0 0
      %716 = vmatpush2.bf16.msra.mxu0 %v663
      %717 = vmatprep.subr.bf16.mxu0 0
      %718 = vmatpush2.bf16.msra.mxu0 %v662
      %719 = vmatprep.subr.bf16.mxu0 0
      %720 = vmatpush2.bf16.msra.mxu0 %v661
      %721 = vmatprep.subr.bf16.mxu0 0
      %722 = vmatpush2.bf16.msra.mxu0 %v660
      %723 = vmatprep.subr.bf16.mxu0 0
      %724 = vmatpush2.bf16.msra.mxu0 %v659
      %725 = vmatprep.subr.bf16.mxu0 0
      %726 = vmatpush2.bf16.msra.mxu0 %v658
      %727 = vmatprep.subr.bf16.mxu0 0
      %728 = vmatpush2.bf16.msra.mxu0 %v657
      %729 = vmatprep.mubr.bf16.mxu0 %v458
      %730 = vmatmul.mubr.bf16.gmra.mxu0 %v457
      %v731 = vpop.f32.mrf.mxu0
      %v732 = vadd.f32 %v295, %v731
      %v733 = vpop.f32.mrf.mxu0
      %v734 = vpop.f32.mrf.mxu0
      %v735 = vadd.f32 %v295, %v734
      %v736 = vpop.f32.mrf.mxu0
      %737 = vmatprep.mubr.bf16.mxu0 %v461
      %738 = vmatmul.mubr.bf16.gmra.mxu0 %v460
      %v739 = vpop.f32.mrf.mxu0
      %v740 = vadd.f32 %v295, %v739
      %v741 = vpop.f32.mrf.mxu0
      %v742 = vpop.f32.mrf.mxu0
      %v743 = vadd.f32 %v295, %v742
      %v744 = vpop.f32.mrf.mxu0
      %745 = vmatprep.mubr.bf16.mxu0 %v464
      %746 = vmatmul.mubr.bf16.gmra.mxu0 %v463
      %v747 = vpop.f32.mrf.mxu0
      %v748 = vadd.f32 %v295, %v747
      %v749 = vpop.f32.mrf.mxu0
      %v750 = vpop.f32.mrf.mxu0
      %v751 = vadd.f32 %v295, %v750
      %v752 = vpop.f32.mrf.mxu0
      %753 = vmatprep.mubr.bf16.mxu0 %v467
      %754 = vmatmul.mubr.bf16.gmra.mxu0 %v466
      %v755 = vpop.f32.mrf.mxu0
      %v756 = vadd.f32 %v295, %v755
      %v757 = vpop.f32.mrf.mxu0
      %v758 = vpop.f32.mrf.mxu0
      %v759 = vadd.f32 %v295, %v758
      %v760 = vpop.f32.mrf.mxu0
      %761 = vmatprep.mubr.bf16.mxu0 %v470
      %762 = vmatmul.mubr.bf16.gmra.mxu0 %v469
      %v763 = vpop.f32.mrf.mxu0
      %v764 = vadd.f32 %v295, %v763
      %v765 = vpop.f32.mrf.mxu0
      %v766 = vpop.f32.mrf.mxu0
      %v767 = vadd.f32 %v295, %v766
      %v768 = vpop.f32.mrf.mxu0
      %769 = vmatprep.mubr.bf16.mxu0 %v473
      %770 = vmatmul.mubr.bf16.gmra.mxu0 %v472
      %v771 = vpop.f32.mrf.mxu0
      %v772 = vadd.f32 %v295, %v771
      %v773 = vpop.f32.mrf.mxu0
      %v774 = vpop.f32.mrf.mxu0
      %v775 = vadd.f32 %v295, %v774
      %v776 = vpop.f32.mrf.mxu0
      %777 = vmatprep.mubr.bf16.mxu0 %v476
      %778 = vmatmul.mubr.bf16.gmra.mxu0 %v475
      %v779 = vpop.f32.mrf.mxu0
      %v780 = vadd.f32 %v295, %v779
      %v781 = vpop.f32.mrf.mxu0
      %v782 = vpop.f32.mrf.mxu0
      %v783 = vadd.f32 %v295, %v782
      %v784 = vpop.f32.mrf.mxu0
      %785 = vmatprep.mubr.bf16.mxu0 %v479
      %786 = vmatmul.mubr.bf16.gmra.mxu0 %v478
      %v787 = vpop.f32.mrf.mxu0
      %v788 = vadd.f32 %v295, %v787
      %v789 = vpop.f32.mrf.mxu0
      %v790 = vpop.f32.mrf.mxu0
      %v791 = vadd.f32 %v295, %v790
      %v792 = vpop.f32.mrf.mxu0
      %793 = vmatprep.mubr.bf16.mxu0 %v482
      %794 = vmatmul.mubr.bf16.gmra.mxu0 %v481
      %v795 = vpop.f32.mrf.mxu0
      %v796 = vadd.f32 %v295, %v795
      %v797 = vpop.f32.mrf.mxu0
      %v798 = vpop.f32.mrf.mxu0
      %v799 = vadd.f32 %v295, %v798
      %v800 = vpop.f32.mrf.mxu0
      %801 = vmatprep.mubr.bf16.mxu0 %v485
      %802 = vmatmul.mubr.bf16.gmra.mxu0 %v484
      %v803 = vpop.f32.mrf.mxu0
      %v804 = vadd.f32 %v295, %v803
      %v805 = vpop.f32.mrf.mxu0
      %v806 = vpop.f32.mrf.mxu0
      %v807 = vadd.f32 %v295, %v806
      %v808 = vpop.f32.mrf.mxu0
      %809 = vmatprep.mubr.bf16.mxu0 %v488
      %810 = vmatmul.mubr.bf16.gmra.mxu0 %v487
      %v811 = vpop.f32.mrf.mxu0
      %v812 = vadd.f32 %v295, %v811
      %v813 = vpop.f32.mrf.mxu0
      %v814 = vpop.f32.mrf.mxu0
      %v815 = vadd.f32 %v295, %v814
      %v816 = vpop.f32.mrf.mxu0
      %817 = vmatprep.mubr.bf16.mxu0 %v491
      %818 = vmatmul.mubr.bf16.gmra.mxu0 %v490
      %v819 = vpop.f32.mrf.mxu0
      %v820 = vadd.f32 %v295, %v819
      %v821 = vpop.f32.mrf.mxu0
      %v822 = vpop.f32.mrf.mxu0
      %v823 = vadd.f32 %v295, %v822
      %v824 = vpop.f32.mrf.mxu0
      %825 = vmatprep.mubr.bf16.mxu0 %v494
      %826 = vmatmul.mubr.bf16.gmra.mxu0 %v493
      %v827 = vpop.f32.mrf.mxu0
      %v828 = vadd.f32 %v295, %v827
      %v829 = vpop.f32.mrf.mxu0
      %v830 = vpop.f32.mrf.mxu0
      %v831 = vadd.f32 %v295, %v830
      %v832 = vpop.f32.mrf.mxu0
      %833 = vmatprep.mubr.bf16.mxu0 %v497
      %834 = vmatmul.mubr.bf16.gmra.mxu0 %v496
      %v835 = vpop.f32.mrf.mxu0
      %v836 = vadd.f32 %v295, %v835
      %v837 = vpop.f32.mrf.mxu0
      %v838 = vpop.f32.mrf.mxu0
      %v839 = vadd.f32 %v295, %v838
      %v840 = vpop.f32.mrf.mxu0
      %841 = vmatprep.mubr.bf16.mxu0 %v500
      %842 = vmatmul.mubr.bf16.gmra.mxu0 %v499
      %v843 = vpop.f32.mrf.mxu0
      %v844 = vadd.f32 %v295, %v843
      %v845 = vpop.f32.mrf.mxu0
      %v846 = vpop.f32.mrf.mxu0
      %v847 = vadd.f32 %v295, %v846
      %v848 = vpop.f32.mrf.mxu0
      %849 = vmatprep.mubr.bf16.mxu0 %v503
      %850 = vmatmul.mubr.bf16.gmra.mxu0 %v502
      %v851 = vpop.f32.mrf.mxu0
      %v852 = vadd.f32 %v295, %v851
      %v853 = vpop.f32.mrf.mxu0
      %v854 = vpop.f32.mrf.mxu0
      %v855 = vadd.f32 %v295, %v854
      %v856 = vpop.f32.mrf.mxu0
      %857 = vdwg.mxu0
      %858 = vmatprep.subr.bf16.mxu0 0
      %859 = vmatpush1.bf16.msra.mxu0 %v672
      %860 = vmatprep.subr.bf16.mxu0 0
      %861 = vmatpush1.bf16.msra.mxu0 %v671
      %862 = vmatprep.subr.bf16.mxu0 0
      %863 = vmatpush1.bf16.msra.mxu0 %v670
      %864 = vmatprep.subr.bf16.mxu0 0
      %865 = vmatpush1.bf16.msra.mxu0 %v669
      %866 = vmatprep.subr.bf16.mxu0 0
      %867 = vmatpush1.bf16.msra.mxu0 %v668
      %868 = vmatprep.subr.bf16.mxu0 0
      %869 = vmatpush1.bf16.msra.mxu0 %v667
      %870 = vmatprep.subr.bf16.mxu0 0
      %871 = vmatpush1.bf16.msra.mxu0 %v666
      %872 = vmatprep.subr.bf16.mxu0 0
      %873 = vmatpush1.bf16.msra.mxu0 %v665
      %874 = vmatprep.subr.bf16.mxu0 0
      %875 = vmatpush2.bf16.msra.mxu0 0
      %876 = vmatprep.subr.bf16.mxu0 0
      %877 = vmatpush2.bf16.msra.mxu0 0
      %878 = vmatprep.subr.bf16.mxu0 0
      %879 = vmatpush2.bf16.msra.mxu0 0
      %880 = vmatprep.subr.bf16.mxu0 0
      %881 = vmatpush2.bf16.msra.mxu0 0
      %882 = vmatprep.subr.bf16.mxu0 0
      %883 = vmatpush2.bf16.msra.mxu0 0
      %884 = vmatprep.subr.bf16.mxu0 0
      %885 = vmatpush2.bf16.msra.mxu0 0
      %886 = vmatprep.subr.bf16.mxu0 0
      %887 = vmatpush2.bf16.msra.mxu0 0
      %888 = vmatprep.subr.bf16.mxu0 0
      %889 = vmatpush2.bf16.msra.mxu0 0
      %890 = vmatprep.mubr.bf16.mxu0 0
      %891 = vmatmul.mubr.bf16.gmra.mxu0 %v459
      %v892 = vpop.f32.mrf.mxu0
      %v893 = vadd.f32 %v732, %v892
      %v894 = vpop.f32.mrf.mxu0
      %v895 = vpop.f32.mrf.mxu0
      %v896 = vadd.f32 %v735, %v895
      %v897 = vpop.f32.mrf.mxu0
      %898 = vmatprep.mubr.bf16.mxu0 0
      %899 = vmatmul.mubr.bf16.gmra.mxu0 %v462
      %v900 = vpop.f32.mrf.mxu0
      %v901 = vadd.f32 %v740, %v900
      %v902 = vpop.f32.mrf.mxu0
      %v903 = vpop.f32.mrf.mxu0
      %v904 = vadd.f32 %v743, %v903
      %v905 = vpop.f32.mrf.mxu0
      %906 = vmatprep.mubr.bf16.mxu0 0
      %907 = vmatmul.mubr.bf16.gmra.mxu0 %v465
      %v908 = vpop.f32.mrf.mxu0
      %v909 = vadd.f32 %v748, %v908
      %v910 = vpop.f32.mrf.mxu0
      %v911 = vpop.f32.mrf.mxu0
      %v912 = vadd.f32 %v751, %v911
      %v913 = vpop.f32.mrf.mxu0
      %914 = vmatprep.mubr.bf16.mxu0 0
      %915 = vmatmul.mubr.bf16.gmra.mxu0 %v468
      %v916 = vpop.f32.mrf.mxu0
      %v917 = vadd.f32 %v756, %v916
      %v918 = vpop.f32.mrf.mxu0
      %v919 = vpop.f32.mrf.mxu0
      %v920 = vadd.f32 %v759, %v919
      %v921 = vpop.f32.mrf.mxu0
      %922 = vmatprep.mubr.bf16.mxu0 0
      %923 = vmatmul.mubr.bf16.gmra.mxu0 %v471
      %v924 = vpop.f32.mrf.mxu0
      %v925 = vadd.f32 %v764, %v924
      %v926 = vpop.f32.mrf.mxu0
      %v927 = vpop.f32.mrf.mxu0
      %v928 = vadd.f32 %v767, %v927
      %v929 = vpop.f32.mrf.mxu0
      %930 = vmatprep.mubr.bf16.mxu0 0
      %931 = vmatmul.mubr.bf16.gmra.mxu0 %v474
      %v932 = vpop.f32.mrf.mxu0
      %v933 = vadd.f32 %v772, %v932
      %v934 = vpop.f32.mrf.mxu0
      %v935 = vpop.f32.mrf.mxu0
      %v936 = vadd.f32 %v775, %v935
      %v937 = vpop.f32.mrf.mxu0
      %938 = vmatprep.mubr.bf16.mxu0 0
      %939 = vmatmul.mubr.bf16.gmra.mxu0 %v477
      %v940 = vpop.f32.mrf.mxu0
      %v941 = vadd.f32 %v780, %v940
      %v942 = vpop.f32.mrf.mxu0
      %v943 = vpop.f32.mrf.mxu0
      %v944 = vadd.f32 %v783, %v943
      %v945 = vpop.f32.mrf.mxu0
      %946 = vmatprep.mubr.bf16.mxu0 0
      %947 = vmatmul.mubr.bf16.gmra.mxu0 %v480
      %v948 = vpop.f32.mrf.mxu0
      %v949 = vadd.f32 %v788, %v948
      %v950 = vpop.f32.mrf.mxu0
      %v951 = vpop.f32.mrf.mxu0
      %v952 = vadd.f32 %v791, %v951
      %v953 = vpop.f32.mrf.mxu0
      %954 = vmatprep.mubr.bf16.mxu0 0
      %955 = vmatmul.mubr.bf16.gmra.mxu0 %v483
      %v956 = vpop.f32.mrf.mxu0
      %v957 = vadd.f32 %v796, %v956
      %v958 = vpop.f32.mrf.mxu0
      %v959 = vpop.f32.mrf.mxu0
      %v960 = vadd.f32 %v799, %v959
      %v961 = vpop.f32.mrf.mxu0
      %962 = vmatprep.mubr.bf16.mxu0 0
      %963 = vmatmul.mubr.bf16.gmra.mxu0 %v486
      %v964 = vpop.f32.mrf.mxu0
      %v965 = vadd.f32 %v804, %v964
      %v966 = vpop.f32.mrf.mxu0
      %v967 = vpop.f32.mrf.mxu0
      %v968 = vadd.f32 %v807, %v967
      %v969 = vpop.f32.mrf.mxu0
      %970 = vmatprep.mubr.bf16.mxu0 0
      %971 = vmatmul.mubr.bf16.gmra.mxu0 %v489
      %v972 = vpop.f32.mrf.mxu0
      %v973 = vadd.f32 %v812, %v972
      %v974 = vpop.f32.mrf.mxu0
      %v975 = vpop.f32.mrf.mxu0
      %v976 = vadd.f32 %v815, %v975
      %v977 = vpop.f32.mrf.mxu0
      %978 = vmatprep.mubr.bf16.mxu0 0
      %979 = vmatmul.mubr.bf16.gmra.mxu0 %v492
      %v980 = vpop.f32.mrf.mxu0
      %v981 = vadd.f32 %v820, %v980
      %v982 = vpop.f32.mrf.mxu0
      %v983 = vpop.f32.mrf.mxu0
      %v984 = vadd.f32 %v823, %v983
      %v985 = vpop.f32.mrf.mxu0
      %986 = vmatprep.mubr.bf16.mxu0 0
      %987 = vmatmul.mubr.bf16.gmra.mxu0 %v495
      %v988 = vpop.f32.mrf.mxu0
      %v989 = vadd.f32 %v828, %v988
      %v990 = vpop.f32.mrf.mxu0
      %v991 = vpop.f32.mrf.mxu0
      %v992 = vadd.f32 %v831, %v991
      %v993 = vpop.f32.mrf.mxu0
      %994 = vmatprep.mubr.bf16.mxu0 0
      %995 = vmatmul.mubr.bf16.gmra.mxu0 %v498
      %v996 = vpop.f32.mrf.mxu0
      %v997 = vadd.f32 %v836, %v996
      %v998 = vpop.f32.mrf.mxu0
      %v999 = vpop.f32.mrf.mxu0
      %v1000 = vadd.f32 %v839, %v999
      %v1001 = vpop.f32.mrf.mxu0
      %1002 = vmatprep.mubr.bf16.mxu0 0
      %1003 = vmatmul.mubr.bf16.gmra.mxu0 %v501
      %v1004 = vpop.f32.mrf.mxu0
      %v1005 = vadd.f32 %v844, %v1004
      %v1006 = vpop.f32.mrf.mxu0
      %v1007 = vpop.f32.mrf.mxu0
      %v1008 = vadd.f32 %v847, %v1007
      %v1009 = vpop.f32.mrf.mxu0
      %1010 = vmatprep.mubr.bf16.mxu0 0
      %1011 = vmatmul.mubr.bf16.gmra.mxu0 %v504
      %v1012 = vpop.f32.mrf.mxu0
      %v1013 = vadd.f32 %v852, %v1012
      %v1014 = vpop.f32.mrf.mxu0
      %v1015 = vpop.f32.mrf.mxu0
      %v1016 = vadd.f32 %v855, %v1015
      %v1017 = vpop.f32.mrf.mxu0
      %1018 = vdwg.mxu0
      %vm1019 = vcmp.gt.f32.partialorder %v893, 0.0
      %vm1020 = vcmp.gt.f32.partialorder %v896, 0.0
      %vm1021 = vcmp.gt.f32.partialorder %v901, 0.0
      %vm1022 = vcmp.gt.f32.partialorder %v904, 0.0
      %vm1023 = vcmp.gt.f32.partialorder %v909, 0.0
      %vm1024 = vcmp.gt.f32.partialorder %v912, 0.0
      %vm1025 = vcmp.gt.f32.partialorder %v917, 0.0
      %vm1026 = vcmp.gt.f32.partialorder %v920, 0.0
      %vm1027 = vcmp.gt.f32.partialorder %v925, 0.0
      %vm1028 = vcmp.gt.f32.partialorder %v928, 0.0
      %vm1029 = vcmp.gt.f32.partialorder %v933, 0.0
      %vm1030 = vcmp.gt.f32.partialorder %v936, 0.0
      %vm1031 = vcmp.gt.f32.partialorder %v941, 0.0
      %vm1032 = vcmp.gt.f32.partialorder %v944, 0.0
      %vm1033 = vcmp.gt.f32.partialorder %v949, 0.0
      %vm1034 = vcmp.gt.f32.partialorder %v952, 0.0
      %vm1035 = vcmp.gt.f32.partialorder %v957, 0.0
      %vm1036 = vcmp.gt.f32.partialorder %v960, 0.0
      %vm1037 = vcmp.gt.f32.partialorder %v965, 0.0
      %vm1038 = vcmp.gt.f32.partialorder %v968, 0.0
      %vm1039 = vcmp.gt.f32.partialorder %v973, 0.0
      %vm1040 = vcmp.gt.f32.partialorder %v976, 0.0
      %vm1041 = vcmp.gt.f32.partialorder %v981, 0.0
      %vm1042 = vcmp.gt.f32.partialorder %v984, 0.0
      %vm1043 = vcmp.gt.f32.partialorder %v989, 0.0
      %vm1044 = vcmp.gt.f32.partialorder %v992, 0.0
      %vm1045 = vcmp.gt.f32.partialorder %v997, 0.0
      %vm1046 = vcmp.gt.f32.partialorder %v1000, 0.0
      %vm1047 = vcmp.gt.f32.partialorder %v1005, 0.0
      %vm1048 = vcmp.gt.f32.partialorder %v1008, 0.0
      %vm1049 = vcmp.gt.f32.partialorder %v1013, 0.0
      %vm1050 = vcmp.gt.f32.partialorder %v1016, 0.0
      %v1051 = vmul.f32 %v893, 0.2
      %v1052 = vmul.f32 %v896, 0.2
      %v1053 = vmul.f32 %v901, 0.2
      %v1054 = vmul.f32 %v904, 0.2
      %v1055 = vmul.f32 %v909, 0.2
      %v1056 = vmul.f32 %v912, 0.2
      %v1057 = vmul.f32 %v917, 0.2
      %v1058 = vmul.f32 %v920, 0.2
      %v1059 = vmul.f32 %v925, 0.2
      %v1060 = vmul.f32 %v928, 0.2
      %v1061 = vmul.f32 %v933, 0.2
      %v1062 = vmul.f32 %v936, 0.2
      %v1063 = vmul.f32 %v941, 0.2
      %v1064 = vmul.f32 %v944, 0.2
      %v1065 = vmul.f32 %v949, 0.2
      %v1066 = vmul.f32 %v952, 0.2
      %v1067 = vmul.f32 %v957, 0.2
      %v1068 = vmul.f32 %v960, 0.2
      %v1069 = vmul.f32 %v965, 0.2
      %v1070 = vmul.f32 %v968, 0.2
      %v1071 = vmul.f32 %v973, 0.2
      %v1072 = vmul.f32 %v976, 0.2
      %v1073 = vmul.f32 %v981, 0.2
      %v1074 = vmul.f32 %v984, 0.2
      %v1075 = vmul.f32 %v989, 0.2
      %v1076 = vmul.f32 %v992, 0.2
      %v1077 = vmul.f32 %v997, 0.2
      %v1078 = vmul.f32 %v1000, 0.2
      %v1079 = vmul.f32 %v1005, 0.2
      %v1080 = vmul.f32 %v1008, 0.2
      %v1081 = vmul.f32 %v1013, 0.2
      %v1082 = vmul.f32 %v1016, 0.2
      %v1083 = vsel %vm1019, %v893, %v1051
      %v1084 = vsel %vm1020, %v896, %v1052
      %v1085 = vsel %vm1021, %v901, %v1053
      %v1086 = vsel %vm1022, %v904, %v1054
      %v1087 = vsel %vm1023, %v909, %v1055
      %v1088 = vsel %vm1024, %v912, %v1056
      %v1089 = vsel %vm1025, %v917, %v1057
      %v1090 = vsel %vm1026, %v920, %v1058
      %v1091 = vsel %vm1027, %v925, %v1059
      %v1092 = vsel %vm1028, %v928, %v1060
      %v1093 = vsel %vm1029, %v933, %v1061
      %v1094 = vsel %vm1030, %v936, %v1062
      %v1095 = vsel %vm1031, %v941, %v1063
      %v1096 = vsel %vm1032, %v944, %v1064
      %v1097 = vsel %vm1033, %v949, %v1065
      %v1098 = vsel %vm1034, %v952, %v1066
      %v1099 = vsel %vm1035, %v957, %v1067
      %v1100 = vsel %vm1036, %v960, %v1068
      %v1101 = vsel %vm1037, %v965, %v1069
      %v1102 = vsel %vm1038, %v968, %v1070
      %v1103 = vsel %vm1039, %v973, %v1071
      %v1104 = vsel %vm1040, %v976, %v1072
      %v1105 = vsel %vm1041, %v981, %v1073
      %v1106 = vsel %vm1042, %v984, %v1074
      %v1107 = vsel %vm1043, %v989, %v1075
      %v1108 = vsel %vm1044, %v992, %v1076
      %v1109 = vsel %vm1045, %v997, %v1077
      %v1110 = vsel %vm1046, %v1000, %v1078
      %v1111 = vsel %vm1047, %v1005, %v1079
      %v1112 = vsel %vm1048, %v1008, %v1080
      %v1113 = vsel %vm1049, %v1013, %v1081
      %v1114 = vsel %vm1050, %v1016, %v1082
      %v1115 = vpack.c.bf16 %v1084, %v1083
      %v1116 = vpack.c.bf16 %v1086, %v1085
      %v1117 = vpack.c.bf16 %v1088, %v1087
      %v1118 = vpack.c.bf16 %v1090, %v1089
      %v1119 = vpack.c.bf16 %v1092, %v1091
      %v1120 = vpack.c.bf16 %v1094, %v1093
      %v1121 = vpack.c.bf16 %v1096, %v1095
      %v1122 = vpack.c.bf16 %v1098, %v1097
      %v1123 = vpack.c.bf16 %v1100, %v1099
      %v1124 = vpack.c.bf16 %v1102, %v1101
      %v1125 = vpack.c.bf16 %v1104, %v1103
      %v1126 = vpack.c.bf16 %v1106, %v1105
      %v1127 = vpack.c.bf16 %v1108, %v1107
      %v1128 = vpack.c.bf16 %v1110, %v1109
      %v1129 = vpack.c.bf16 %v1112, %v1111
      %v1130 = vpack.c.bf16 %v1114, %v1113
      %v1147 = vunpack.c.l.b16 %v1115
      %v1148 = vunpack.c.h.b16 %v1115
      %v1149 = vunpack.c.l.b16 %v1116
      %v1150 = vunpack.c.h.b16 %v1116
      %v1151 = vunpack.c.l.b16 %v1117
      %v1152 = vunpack.c.h.b16 %v1117
      %v1153 = vunpack.c.l.b16 %v1118
      %v1154 = vunpack.c.h.b16 %v1118
      %v1155 = vunpack.c.l.b16 %v1119
      %v1156 = vunpack.c.h.b16 %v1119
      %v1157 = vunpack.c.l.b16 %v1120
      %v1158 = vunpack.c.h.b16 %v1120
      %v1159 = vunpack.c.l.b16 %v1121
      %v1160 = vunpack.c.h.b16 %v1121
      %v1161 = vunpack.c.l.b16 %v1122
      %v1162 = vunpack.c.h.b16 %v1122
      %v1163 = vunpack.c.l.b16 %v1123
      %v1164 = vunpack.c.h.b16 %v1123
      %v1165 = vunpack.c.l.b16 %v1124
      %v1166 = vunpack.c.h.b16 %v1124
      %v1167 = vunpack.c.l.b16 %v1125
      %v1168 = vunpack.c.h.b16 %v1125
      %v1169 = vunpack.c.l.b16 %v1126
      %v1170 = vunpack.c.h.b16 %v1126
      %v1171 = vunpack.c.l.b16 %v1127
      %v1172 = vunpack.c.h.b16 %v1127
      %v1173 = vunpack.c.l.b16 %v1128
      %v1174 = vunpack.c.h.b16 %v1128
      %v1175 = vunpack.c.l.b16 %v1129
      %v1176 = vunpack.c.h.b16 %v1129
      %v1177 = vunpack.c.l.b16 %v1130
      %v1178 = vunpack.c.h.b16 %v1130
      %v1179 = vpack.c.b16 %v1147, %v1147
      %v1180 = vpack.c.b16 %v1148, %v1148
      %v1181 = vpack.c.b16 %v1149, %v1149
      %v1182 = vpack.c.b16 %v1150, %v1150
      %v1183 = vpack.c.b16 %v1151, %v1151
      %v1184 = vpack.c.b16 %v1152, %v1152
      %v1185 = vpack.c.b16 %v1153, %v1153
      %v1186 = vpack.c.b16 %v1154, %v1154
      %v1187 = vpack.c.b16 %v1155, %v1155
      %v1188 = vpack.c.b16 %v1156, %v1156
      %v1189 = vpack.c.b16 %v1157, %v1157
      %v1190 = vpack.c.b16 %v1158, %v1158
      %v1191 = vpack.c.b16 %v1159, %v1159
      %v1192 = vpack.c.b16 %v1160, %v1160
      %v1193 = vpack.c.b16 %v1161, %v1161
      %v1194 = vpack.c.b16 %v1162, %v1162
      %v1195 = vpack.c.b16 %v1163, %v1163
      %v1196 = vpack.c.b16 %v1164, %v1164
      %v1197 = vpack.c.b16 %v1165, %v1165
      %v1198 = vpack.c.b16 %v1166, %v1166
      %v1199 = vpack.c.b16 %v1167, %v1167
      %v1200 = vpack.c.b16 %v1168, %v1168
      %v1201 = vpack.c.b16 %v1169, %v1169
      %v1202 = vpack.c.b16 %v1170, %v1170
      %v1203 = vpack.c.b16 %v1171, %v1171
      %v1204 = vpack.c.b16 %v1172, %v1172
      %v1205 = vpack.c.b16 %v1173, %v1173
      %v1206 = vpack.c.b16 %v1174, %v1174
      %v1207 = vpack.c.b16 %v1175, %v1175
      %v1208 = vpack.c.b16 %v1176, %v1176
      %v1209 = vpack.c.b16 %v1177, %v1177
      %v1210 = vpack.c.b16 %v1178, %v1178
      %1243 = vst [vmem:[%s175] sm:$0xf] %v1179
      %1244 = vst [vmem:[%s175 + $0x4] sm:$0xf] %v1180
      %1245 = vst [vmem:[%s175 + $0x8] sm:$0xf] %v1181
      %1246 = vst [vmem:[%s175 + $0xc] sm:$0xf] %v1182
      %1247 = vst [vmem:[%s175 + $0x10] sm:$0xf] %v1183
      %1248 = vst [vmem:[%s175 + $0x14] sm:$0xf] %v1184
      %1249 = vst [vmem:[%s175 + $0x18] sm:$0xf] %v1185
      %1250 = vst [vmem:[%s175 + $0x1c] sm:$0xf] %v1186
      %1251 = vst [vmem:[%s175 + $0x20] sm:$0xf] %v1187
      %1252 = vst [vmem:[%s175 + $0x24] sm:$0xf] %v1188
      %1253 = vst [vmem:[%s175 + $0x28] sm:$0xf] %v1189
      %1254 = vst [vmem:[%s175 + $0x2c] sm:$0xf] %v1190
      %1255 = vst [vmem:[%s175 + $0x30] sm:$0xf] %v1191
      %1256 = vst [vmem:[%s175 + $0x34] sm:$0xf] %v1192
      %1257 = vst [vmem:[%s175 + $0x38] sm:$0xf] %v1193
      %1258 = vst [vmem:[%s175 + $0x3c] sm:$0xf] %v1194
      %1259 = vst [vmem:[%s175 + $0x40] sm:$0xf] %v1195
      %1260 = vst [vmem:[%s175 + $0x44] sm:$0xf] %v1196
      %1261 = vst [vmem:[%s175 + $0x48] sm:$0xf] %v1197
      %1262 = vst [vmem:[%s175 + $0x4c] sm:$0xf] %v1198
      %1263 = vst [vmem:[%s175 + $0x50] sm:$0xf] %v1199
      %1264 = vst [vmem:[%s175 + $0x54] sm:$0xf] %v1200
      %1265 = vst [vmem:[%s175 + $0x58] sm:$0xf] %v1201
      %1266 = vst [vmem:[%s175 + $0x5c] sm:$0xf] %v1202
      %1267 = vst [vmem:[%s175 + $0x60] sm:$0xf] %v1203
      %1268 = vst [vmem:[%s175 + $0x64] sm:$0xf] %v1204
      %1269 = vst [vmem:[%s175 + $0x68] sm:$0xf] %v1205
      %1270 = vst [vmem:[%s175 + $0x6c] sm:$0xf] %v1206
      %1271 = vst [vmem:[%s175 + $0x70] sm:$0xf] %v1207
      %1272 = vst [vmem:[%s175 + $0x74] sm:$0xf] %v1208
      %1273 = vst [vmem:[%s175 + $0x78] sm:$0xf] %v1209
      %1274 = vst [vmem:[%s175 + $0x7c] sm:$0xf] %v1210
      %s1275 = smul.u32 32, %s14
      %p1276 = scmp.lt.s32.totalorder %s1275, 63
      %s1277 = scalar_select %p1276, %s1275, 63
      %s1278 = smul.addr %s1277, 4
      %s1279 = scalar_lea.vmem %s3, %s1278
      // Predicated region
      $region33: #{discriminator_s_forward.7} parent=31 // pred_check
        %p1280 = pneg %p100
      $region34: #{discriminator_s_forward.7} parent=31 // pred_check_branch
        %1282 = sbr.rel (%p1280) target = $region36
      $region35: #{discriminator_s_forward.7} parent=31 // pred_region
        %s1283 = smul.u32 32, %s14
      $region36: #{discriminator_s_forward.7} parent=31 // pred_fallthru
        _
    $region32: #{discriminator_s_forward.7} parent=5 // pred_fallthru
      _
    %p1284 = scmp.le.s32.totalorder 2, %s9
    // Predicated region
    $region37: #{discriminator_s_forward.7} parent=5 // pred_check
      %p1285 = pneg %p1284
    $region38: #{discriminator_s_forward.7} parent=5 // pred_check_branch
      %1287 = sbr.rel (%p1285) target = $region40
    $region39: #{discriminator_s_forward.7} parent=5 // pred_region
      %s1288 = ssub.s32 %s9, 2
      // Predicated region
      $region41: #{discriminator_s_forward.7} parent=39 // pred_check
        %p1289 = pneg %p106
      $region42: #{discriminator_s_forward.7} parent=39 // pred_check_branch
        %1291 = sbr.rel (%p1289) target = $region44
      $region43: #{discriminator_s_forward.7} parent=39 // pred_region
        %s1292 = smul.u32 32, %s15
        %p1293 = scmp.lt.s32.totalorder %s1292, 63
        %s1294 = scalar_select %p1293, %s1292, 63
        %s1295 = smul.addr %s1294, 4
        %s1296 = scalar_lea.vmem %s3, %s1295
      $region44: #{discriminator_s_forward.7} parent=39 // pred_fallthru
        _
    $region40: #{discriminator_s_forward.7} parent=5 // pred_fallthru
      _
  $region6: #{discriminator_s_forward.7} parent=0 // loop_footer
    %s13 = sadd.s32 1, %s9
  $region7: #{discriminator_s_forward.7} parent=0 // loop_footer_branch
    %8 = sbr.rel target = $region3
  $region8: #{discriminator_s_forward.7} parent=0 // loop_exit
    _

// kernel: discriminator_s_forward.8
$region0: #{discriminator_s_forward.8}
  #allocation0 [shape = 'u32[]', space=smem, size = 0x4, offset = 0x4, fixed_abs, tag = 'smem constant byte address 0x4 - core index']
  #allocation1 [shape = 'u32[144,128]{1,0:T(1,128)}', space=vmem, size = 0x12000, scoped, tag = 'internal scratch']
  %s0 = inlined_call_operand.vmem [shape: bf16[128,640], index: 0, kind: input, shape index: {}]
  %s1 = inlined_call_operand.vmem [shape: bf16[640,128], index: 1, kind: input, shape index: {}]
  %s2 = inlined_call_operand.vmem [shape: f32[1,128], index: 2, kind: input, shape index: {}]
  %s3 = inlined_call_operand.vmem [shape: bf16[128,128], index: 3, kind: output, shape index: {}]
  %s4 = sld [smem:[#allocation0]]
  $region22: #{discriminator_s_forward.8} parent=0
    _
  %s6 = ssub.s32 1, %s4
  %s7 = scalar_select 0, %s6, %s4
  // Predicated region
  $region2: #{discriminator_s_forward.8} parent=0 // pred_check
    _
  $region3: #{discriminator_s_forward.8} parent=0 // pred_check_branch
    %9 = sbr.rel (0) target = $region5
  $region4: #{discriminator_s_forward.8} parent=0 // pred_region
    _
  $region5: #{discriminator_s_forward.8} parent=0 // pred_fallthru
    _
  // Predicated region
  $region6: #{discriminator_s_forward.8} parent=0 // pred_check
    _
  $region7: #{discriminator_s_forward.8} parent=0 // pred_check_branch
    %11 = sbr.rel (0) target = $region9
  $region8: #{discriminator_s_forward.8} parent=0 // pred_region
    _
  $region9: #{discriminator_s_forward.8} parent=0 // pred_fallthru
    _
  // Predicated region
  $region10: #{discriminator_s_forward.8} parent=0 // pred_check
    _
  $region11: #{discriminator_s_forward.8} parent=0 // pred_check_branch
    %13 = sbr.rel (0) target = $region13
  $region12: #{discriminator_s_forward.8} parent=0 // pred_region
    _
  $region13: #{discriminator_s_forward.8} parent=0 // pred_fallthru
    _
  %v15 = vld [vmem:[%s0] sm:$0xff]
  %v16 = vld [vmem:[%s0 + $0x8] sm:$0xff]
  %v17 = vld [vmem:[%s0 + $0x10] sm:$0xf]
  %v18 = vld [vmem:[%s0 + $0x14] sm:$0xff]
  %v19 = vld [vmem:[%s0 + $0x1c] sm:$0xff]
  %v20 = vld [vmem:[%s0 + $0x24] sm:$0xf]
  %v21 = vld [vmem:[%s0 + $0x28] sm:$0xff]
  %v22 = vld [vmem:[%s0 + $0x30] sm:$0xff]
  %v23 = vld [vmem:[%s0 + $0x38] sm:$0xf]
  %v24 = vld [vmem:[%s0 + $0x3c] sm:$0xff]
  %v25 = vld [vmem:[%s0 + $0x44] sm:$0xff]
  %v26 = vld [vmem:[%s0 + $0x4c] sm:$0xf]
  %v27 = vld [vmem:[%s0 + $0x50] sm:$0xff]
  %v28 = vld [vmem:[%s0 + $0x58] sm:$0xff]
  %v29 = vld [vmem:[%s0 + $0x60] sm:$0xf]
  %v30 = vld [vmem:[%s0 + $0x64] sm:$0xff]
  %v31 = vld [vmem:[%s0 + $0x6c] sm:$0xff]
  %v32 = vld [vmem:[%s0 + $0x74] sm:$0xf]
  %v33 = vld [vmem:[%s0 + $0x78] sm:$0xff]
  %v34 = vld [vmem:[%s0 + $0x80] sm:$0xff]
  %v35 = vld [vmem:[%s0 + $0x88] sm:$0xf]
  %v36 = vld [vmem:[%s0 + $0x8c] sm:$0xff]
  %v37 = vld [vmem:[%s0 + $0x94] sm:$0xff]
  %v38 = vld [vmem:[%s0 + $0x9c] sm:$0xf]
  %v39 = vld [vmem:[%s0 + $0xa0] sm:$0xff]
  %v40 = vld [vmem:[%s0 + $0xa8] sm:$0xff]
  %v41 = vld [vmem:[%s0 + $0xb0] sm:$0xf]
  %v42 = vld [vmem:[%s0 + $0xb4] sm:$0xff]
  %v43 = vld [vmem:[%s0 + $0xbc] sm:$0xff]
  %v44 = vld [vmem:[%s0 + $0xc4] sm:$0xf]
  %v45 = vld [vmem:[%s0 + $0xc8] sm:$0xff]
  %v46 = vld [vmem:[%s0 + $0xd0] sm:$0xff]
  %v47 = vld [vmem:[%s0 + $0xd8] sm:$0xf]
  %v48 = vld [vmem:[%s0 + $0xdc] sm:$0xff]
  %v49 = vld [vmem:[%s0 + $0xe4] sm:$0xff]
  %v50 = vld [vmem:[%s0 + $0xec] sm:$0xf]
  %v51 = vld [vmem:[%s0 + $0xf0] sm:$0xff]
  %v52 = vld [vmem:[%s0 + $0xf8] sm:$0xff]
  %v53 = vld [vmem:[%s0 + $0x100] sm:$0xf]
  %v54 = vld [vmem:[%s0 + $0x104] sm:$0xff]
  %v55 = vld [vmem:[%s0 + $0x10c] sm:$0xff]
  %v56 = vld [vmem:[%s0 + $0x114] sm:$0xf]
  %v57 = vld [vmem:[%s0 + $0x118] sm:$0xff]
  %v58 = vld [vmem:[%s0 + $0x120] sm:$0xff]
  %v59 = vld [vmem:[%s0 + $0x128] sm:$0xf]
  %v60 = vld [vmem:[%s0 + $0x12c] sm:$0xff]
  %v61 = vld [vmem:[%s0 + $0x134] sm:$0xff]
  %v62 = vld [vmem:[%s0 + $0x13c] sm:$0xf]
  %v63 = vld [vmem:[%s1] sm:$0xf]
  %v64 = vld [vmem:[%s1 + $0x4] sm:$0xf]
  %v65 = vld [vmem:[%s1 + $0x8] sm:$0xf]
  %v66 = vld [vmem:[%s1 + $0xc] sm:$0xf]
  %v67 = vld [vmem:[%s1 + $0x10] sm:$0xf]
  %v68 = vld [vmem:[%s1 + $0x14] sm:$0xf]
  %v69 = vld [vmem:[%s1 + $0x18] sm:$0xf]
  %v70 = vld [vmem:[%s1 + $0x1c] sm:$0xf]
  %v71 = vld [vmem:[%s1 + $0x20] sm:$0xf]
  %v72 = vld [vmem:[%s1 + $0x24] sm:$0xf]
  %v73 = vld [vmem:[%s1 + $0x28] sm:$0xf]
  %v74 = vld [vmem:[%s1 + $0x2c] sm:$0xf]
  %v75 = vld [vmem:[%s1 + $0x30] sm:$0xf]
  %v76 = vld [vmem:[%s1 + $0x34] sm:$0xf]
  %v77 = vld [vmem:[%s1 + $0x38] sm:$0xf]
  %v78 = vld [vmem:[%s1 + $0x3c] sm:$0xf]
  %v79 = vld [vmem:[%s1 + $0x40] sm:$0xf]
  %v80 = vld [vmem:[%s1 + $0x44] sm:$0xf]
  %v81 = vld [vmem:[%s1 + $0x48] sm:$0xf]
  %v82 = vld [vmem:[%s1 + $0x4c] sm:$0xf]
  %v83 = vld [vmem:[%s1 + $0x50] sm:$0xf]
  %v84 = vld [vmem:[%s1 + $0x54] sm:$0xf]
  %v85 = vld [vmem:[%s1 + $0x58] sm:$0xf]
  %v86 = vld [vmem:[%s1 + $0x5c] sm:$0xf]
  %v87 = vld [vmem:[%s1 + $0x60] sm:$0xf]
  %v88 = vld [vmem:[%s1 + $0x64] sm:$0xf]
  %v89 = vld [vmem:[%s1 + $0x68] sm:$0xf]
  %v90 = vld [vmem:[%s1 + $0x6c] sm:$0xf]
  %v91 = vld [vmem:[%s1 + $0x70] sm:$0xf]
  %v92 = vld [vmem:[%s1 + $0x74] sm:$0xf]
  %v93 = vld [vmem:[%s1 + $0x78] sm:$0xf]
  %v94 = vld [vmem:[%s1 + $0x7c] sm:$0xf]
  %v95 = vld [vmem:[%s1 + $0x80] sm:$0xf]
  %v96 = vld [vmem:[%s1 + $0x84] sm:$0xf]
  %v97 = vld [vmem:[%s1 + $0x88] sm:$0xf]
  %v98 = vld [vmem:[%s1 + $0x8c] sm:$0xf]
  %v99 = vld [vmem:[%s1 + $0x90] sm:$0xf]
  %v100 = vld [vmem:[%s1 + $0x94] sm:$0xf]
  %v101 = vld [vmem:[%s1 + $0x98] sm:$0xf]
  %v102 = vld [vmem:[%s1 + $0x9c] sm:$0xf]
  %v103 = vld [vmem:[%s1 + $0xa0] sm:$0xf]
  %v104 = vld [vmem:[%s1 + $0xa4] sm:$0xf]
  %v105 = vld [vmem:[%s1 + $0xa8] sm:$0xf]
  %v106 = vld [vmem:[%s1 + $0xac] sm:$0xf]
  %v107 = vld [vmem:[%s1 + $0xb0] sm:$0xf]
  %v108 = vld [vmem:[%s1 + $0xb4] sm:$0xf]
  %v109 = vld [vmem:[%s1 + $0xb8] sm:$0xf]
  %v110 = vld [vmem:[%s1 + $0xbc] sm:$0xf]
  %v111 = vld [vmem:[%s1 + $0xc0] sm:$0xf]
  %v112 = vld [vmem:[%s1 + $0xc4] sm:$0xf]
  %v113 = vld [vmem:[%s1 + $0xc8] sm:$0xf]
  %v114 = vld [vmem:[%s1 + $0xcc] sm:$0xf]
  %v115 = vld [vmem:[%s1 + $0xd0] sm:$0xf]
  %v116 = vld [vmem:[%s1 + $0xd4] sm:$0xf]
  %v117 = vld [vmem:[%s1 + $0xd8] sm:$0xf]
  %v118 = vld [vmem:[%s1 + $0xdc] sm:$0xf]
  %v119 = vld [vmem:[%s1 + $0xe0] sm:$0xf]
  %v120 = vld [vmem:[%s1 + $0xe4] sm:$0xf]
  %v121 = vld [vmem:[%s1 + $0xe8] sm:$0xf]
  %v122 = vld [vmem:[%s1 + $0xec] sm:$0xf]
  %v123 = vld [vmem:[%s1 + $0xf0] sm:$0xf]
  %v124 = vld [vmem:[%s1 + $0xf4] sm:$0xf]
  %v125 = vld [vmem:[%s1 + $0xf8] sm:$0xf]
  %v126 = vld [vmem:[%s1 + $0xfc] sm:$0xf]
  %v127 = vld [vmem:[%s1 + $0x100] sm:$0xf]
  %v128 = vld [vmem:[%s1 + $0x104] sm:$0xf]
  %v129 = vld [vmem:[%s1 + $0x108] sm:$0xf]
  %v130 = vld [vmem:[%s1 + $0x10c] sm:$0xf]
  %v131 = vld [vmem:[%s1 + $0x110] sm:$0xf]
  %v132 = vld [vmem:[%s1 + $0x114] sm:$0xf]
  %v133 = vld [vmem:[%s1 + $0x118] sm:$0xf]
  %v134 = vld [vmem:[%s1 + $0x11c] sm:$0xf]
  %v135 = vld [vmem:[%s1 + $0x120] sm:$0xf]
  %v136 = vld [vmem:[%s1 + $0x124] sm:$0xf]
  %v137 = vld [vmem:[%s1 + $0x128] sm:$0xf]
  %v138 = vld [vmem:[%s1 + $0x12c] sm:$0xf]
  %v139 = vld [vmem:[%s1 + $0x130] sm:$0xf]
  %v140 = vld [vmem:[%s1 + $0x134] sm:$0xf]
  %v141 = vld [vmem:[%s1 + $0x138] sm:$0xf]
  %v142 = vld [vmem:[%s1 + $0x13c] sm:$0xf]
  %v143 = vld [vmem:[%s2] sm:$0x1]
  %v145 = vlaneseq
  %v146 = vshrl.u32 %v145, 7
  %v147 = vsub.s32 0, %v146
  %v148 = vrot.slane %v143, %v147
  %v198 = vunpack.c.l.b16 %v15
  %v199 = vunpack.c.h.b16 %v15
  %v200 = vunpack.c.l.b16 %v16
  %v201 = vunpack.c.h.b16 %v16
  %v202 = vunpack.c.l.b16 %v17
  %v203 = vunpack.c.l.b16 %v18
  %v204 = vunpack.c.h.b16 %v18
  %v205 = vunpack.c.l.b16 %v19
  %v206 = vunpack.c.h.b16 %v19
  %v207 = vunpack.c.l.b16 %v20
  %v208 = vunpack.c.l.b16 %v21
  %v209 = vunpack.c.h.b16 %v21
  %v210 = vunpack.c.l.b16 %v22
  %v211 = vunpack.c.h.b16 %v22
  %v212 = vunpack.c.l.b16 %v23
  %v213 = vunpack.c.l.b16 %v24
  %v214 = vunpack.c.h.b16 %v24
  %v215 = vunpack.c.l.b16 %v25
  %v216 = vunpack.c.h.b16 %v25
  %v217 = vunpack.c.l.b16 %v26
  %v218 = vunpack.c.l.b16 %v27
  %v219 = vunpack.c.h.b16 %v27
  %v220 = vunpack.c.l.b16 %v28
  %v221 = vunpack.c.h.b16 %v28
  %v222 = vunpack.c.l.b16 %v29
  %v223 = vunpack.c.l.b16 %v30
  %v224 = vunpack.c.h.b16 %v30
  %v225 = vunpack.c.l.b16 %v31
  %v226 = vunpack.c.h.b16 %v31
  %v227 = vunpack.c.l.b16 %v32
  %v228 = vunpack.c.l.b16 %v33
  %v229 = vunpack.c.h.b16 %v33
  %v230 = vunpack.c.l.b16 %v34
  %v231 = vunpack.c.h.b16 %v34
  %v232 = vunpack.c.l.b16 %v35
  %v233 = vunpack.c.l.b16 %v36
  %v234 = vunpack.c.h.b16 %v36
  %v235 = vunpack.c.l.b16 %v37
  %v236 = vunpack.c.h.b16 %v37
  %v237 = vunpack.c.l.b16 %v38
  %v238 = vunpack.c.l.b16 %v39
  %v239 = vunpack.c.h.b16 %v39
  %v240 = vunpack.c.l.b16 %v40
  %v241 = vunpack.c.h.b16 %v40
  %v242 = vunpack.c.l.b16 %v41
  %v243 = vunpack.c.l.b16 %v42
  %v244 = vunpack.c.h.b16 %v42
  %v245 = vunpack.c.l.b16 %v43
  %v246 = vunpack.c.h.b16 %v43
  %v247 = vunpack.c.l.b16 %v44
  %v248 = vunpack.c.l.b16 %v45
  %v249 = vunpack.c.h.b16 %v45
  %v250 = vunpack.c.l.b16 %v46
  %v251 = vunpack.c.h.b16 %v46
  %v252 = vunpack.c.l.b16 %v47
  %v253 = vunpack.c.l.b16 %v48
  %v254 = vunpack.c.h.b16 %v48
  %v255 = vunpack.c.l.b16 %v49
  %v256 = vunpack.c.h.b16 %v49
  %v257 = vunpack.c.l.b16 %v50
  %v258 = vunpack.c.l.b16 %v51
  %v259 = vunpack.c.h.b16 %v51
  %v260 = vunpack.c.l.b16 %v52
  %v261 = vunpack.c.h.b16 %v52
  %v262 = vunpack.c.l.b16 %v53
  %v263 = vunpack.c.l.b16 %v54
  %v264 = vunpack.c.h.b16 %v54
  %v265 = vunpack.c.l.b16 %v55
  %v266 = vunpack.c.h.b16 %v55
  %v267 = vunpack.c.l.b16 %v56
  %v268 = vunpack.c.l.b16 %v57
  %v269 = vunpack.c.h.b16 %v57
  %v270 = vunpack.c.l.b16 %v58
  %v271 = vunpack.c.h.b16 %v58
  %v272 = vunpack.c.l.b16 %v59
  %v273 = vunpack.c.l.b16 %v60
  %v274 = vunpack.c.h.b16 %v60
  %v275 = vunpack.c.l.b16 %v61
  %v276 = vunpack.c.h.b16 %v61
  %v277 = vunpack.c.l.b16 %v62
  %v278 = vpack.c.b16 %v203, %v198
  %v279 = vpack.c.b16 %v204, %v199
  %v280 = vpack.c.b16 %v205, %v200
  %v281 = vpack.c.b16 %v206, %v201
  %v282 = vpack.c.b16 %v207, %v202
  %v283 = vpack.c.b16 %v213, %v208
  %v284 = vpack.c.b16 %v214, %v209
  %v285 = vpack.c.b16 %v215, %v210
  %v286 = vpack.c.b16 %v216, %v211
  %v287 = vpack.c.b16 %v217, %v212
  %v288 = vpack.c.b16 %v223, %v218
  %v289 = vpack.c.b16 %v224, %v219
  %v290 = vpack.c.b16 %v225, %v220
  %v291 = vpack.c.b16 %v226, %v221
  %v292 = vpack.c.b16 %v227, %v222
  %v293 = vpack.c.b16 %v233, %v228
  %v294 = vpack.c.b16 %v234, %v229
  %v295 = vpack.c.b16 %v235, %v230
  %v296 = vpack.c.b16 %v236, %v231
  %v297 = vpack.c.b16 %v237, %v232
  %v298 = vpack.c.b16 %v243, %v238
  %v299 = vpack.c.b16 %v244, %v239
  %v300 = vpack.c.b16 %v245, %v240
  %v301 = vpack.c.b16 %v246, %v241
  %v302 = vpack.c.b16 %v247, %v242
  %v303 = vpack.c.b16 %v253, %v248
  %v304 = vpack.c.b16 %v254, %v249
  %v305 = vpack.c.b16 %v255, %v250
  %v306 = vpack.c.b16 %v256, %v251
  %v307 = vpack.c.b16 %v257, %v252
  %v308 = vpack.c.b16 %v263, %v258
  %v309 = vpack.c.b16 %v264, %v259
  %v310 = vpack.c.b16 %v265, %v260
  %v311 = vpack.c.b16 %v266, %v261
  %v312 = vpack.c.b16 %v267, %v262
  %v313 = vpack.c.b16 %v273, %v268
  %v314 = vpack.c.b16 %v274, %v269
  %v315 = vpack.c.b16 %v275, %v270
  %v316 = vpack.c.b16 %v276, %v271
  %v317 = vpack.c.b16 %v277, %v272
  %v438 = vunpack.c.l.b16 %v63
  %v439 = vunpack.c.l.b16 %v64
  %v440 = vunpack.c.l.b16 %v65
  %v441 = vunpack.c.l.b16 %v66
  %v442 = vunpack.c.l.b16 %v67
  %v443 = vunpack.c.l.b16 %v68
  %v444 = vunpack.c.l.b16 %v69
  %v445 = vunpack.c.l.b16 %v70
  %v446 = vunpack.c.l.b16 %v71
  %v447 = vunpack.c.l.b16 %v72
  %v448 = vunpack.c.l.b16 %v73
  %v449 = vunpack.c.l.b16 %v74
  %v450 = vunpack.c.l.b16 %v75
  %v451 = vunpack.c.l.b16 %v76
  %v452 = vunpack.c.l.b16 %v77
  %v453 = vunpack.c.l.b16 %v78
  %v454 = vunpack.c.l.b16 %v79
  %v455 = vunpack.c.l.b16 %v80
  %v456 = vunpack.c.l.b16 %v81
  %v457 = vunpack.c.l.b16 %v82
  %v458 = vunpack.c.l.b16 %v83
  %v459 = vunpack.c.l.b16 %v84
  %v460 = vunpack.c.l.b16 %v85
  %v461 = vunpack.c.l.b16 %v86
  %v462 = vunpack.c.l.b16 %v87
  %v463 = vunpack.c.l.b16 %v88
  %v464 = vunpack.c.l.b16 %v89
  %v465 = vunpack.c.l.b16 %v90
  %v466 = vunpack.c.l.b16 %v91
  %v467 = vunpack.c.l.b16 %v92
  %v468 = vunpack.c.l.b16 %v93
  %v469 = vunpack.c.l.b16 %v94
  %v470 = vunpack.c.l.b16 %v95
  %v471 = vunpack.c.l.b16 %v96
  %v472 = vunpack.c.l.b16 %v97
  %v473 = vunpack.c.l.b16 %v98
  %v474 = vunpack.c.l.b16 %v99
  %v475 = vunpack.c.l.b16 %v100
  %v476 = vunpack.c.l.b16 %v101
  %v477 = vunpack.c.l.b16 %v102
  %v478 = vunpack.c.l.b16 %v103
  %v479 = vunpack.c.l.b16 %v104
  %v480 = vunpack.c.l.b16 %v105
  %v481 = vunpack.c.l.b16 %v106
  %v482 = vunpack.c.l.b16 %v107
  %v483 = vunpack.c.l.b16 %v108
  %v484 = vunpack.c.l.b16 %v109
  %v485 = vunpack.c.l.b16 %v110
  %v486 = vunpack.c.l.b16 %v111
  %v487 = vunpack.c.l.b16 %v112
  %v488 = vunpack.c.l.b16 %v113
  %v489 = vunpack.c.l.b16 %v114
  %v490 = vunpack.c.l.b16 %v115
  %v491 = vunpack.c.l.b16 %v116
  %v492 = vunpack.c.l.b16 %v117
  %v493 = vunpack.c.l.b16 %v118
  %v494 = vunpack.c.l.b16 %v119
  %v495 = vunpack.c.l.b16 %v120
  %v496 = vunpack.c.l.b16 %v121
  %v497 = vunpack.c.l.b16 %v122
  %v498 = vunpack.c.l.b16 %v123
  %v499 = vunpack.c.l.b16 %v124
  %v500 = vunpack.c.l.b16 %v125
  %v501 = vunpack.c.l.b16 %v126
  %v502 = vunpack.c.l.b16 %v127
  %v503 = vunpack.c.l.b16 %v128
  %v504 = vunpack.c.l.b16 %v129
  %v505 = vunpack.c.l.b16 %v130
  %v506 = vunpack.c.l.b16 %v131
  %v507 = vunpack.c.l.b16 %v132
  %v508 = vunpack.c.l.b16 %v133
  %v509 = vunpack.c.l.b16 %v134
  %v510 = vunpack.c.l.b16 %v135
  %v511 = vunpack.c.l.b16 %v136
  %v512 = vunpack.c.l.b16 %v137
  %v513 = vunpack.c.l.b16 %v138
  %v514 = vunpack.c.l.b16 %v139
  %v515 = vunpack.c.l.b16 %v140
  %v516 = vunpack.c.l.b16 %v141
  %v517 = vunpack.c.l.b16 %v142
  %v518 = vpack.c.b16 %v439, %v438
  %v519 = vpack.c.b16 %v441, %v440
  %v520 = vpack.c.b16 %v443, %v442
  %v521 = vpack.c.b16 %v445, %v444
  %v522 = vpack.c.b16 %v447, %v446
  %v523 = vpack.c.b16 %v449, %v448
  %v524 = vpack.c.b16 %v451, %v450
  %v525 = vpack.c.b16 %v453, %v452
  %v526 = vpack.c.b16 %v455, %v454
  %v527 = vpack.c.b16 %v457, %v456
  %v528 = vpack.c.b16 %v459, %v458
  %v529 = vpack.c.b16 %v461, %v460
  %v530 = vpack.c.b16 %v463, %v462
  %v531 = vpack.c.b16 %v465, %v464
  %v532 = vpack.c.b16 %v467, %v466
  %v533 = vpack.c.b16 %v469, %v468
  %v534 = vpack.c.b16 %v471, %v470
  %v535 = vpack.c.b16 %v473, %v472
  %v536 = vpack.c.b16 %v475, %v474
  %v537 = vpack.c.b16 %v477, %v476
  %v538 = vpack.c.b16 %v479, %v478
  %v539 = vpack.c.b16 %v481, %v480
  %v540 = vpack.c.b16 %v483, %v482
  %v541 = vpack.c.b16 %v485, %v484
  %v542 = vpack.c.b16 %v487, %v486
  %v543 = vpack.c.b16 %v489, %v488
  %v544 = vpack.c.b16 %v491, %v490
  %v545 = vpack.c.b16 %v493, %v492
  %v546 = vpack.c.b16 %v495, %v494
  %v547 = vpack.c.b16 %v497, %v496
  %v548 = vpack.c.b16 %v499, %v498
  %v549 = vpack.c.b16 %v501, %v500
  %v550 = vpack.c.b16 %v503, %v502
  %v551 = vpack.c.b16 %v505, %v504
  %v552 = vpack.c.b16 %v507, %v506
  %v553 = vpack.c.b16 %v509, %v508
  %v554 = vpack.c.b16 %v511, %v510
  %v555 = vpack.c.b16 %v513, %v512
  %v556 = vpack.c.b16 %v515, %v514
  %v557 = vpack.c.b16 %v517, %v516
  %598 = vmatprep.subr.bf16.mxu0 0
  %599 = vmatpush1.bf16.msra.mxu0 %v525
  %600 = vmatprep.subr.bf16.mxu0 0
  %601 = vmatpush1.bf16.msra.mxu0 %v524
  %602 = vmatprep.subr.bf16.mxu0 0
  %603 = vmatpush1.bf16.msra.mxu0 %v523
  %604 = vmatprep.subr.bf16.mxu0 0
  %605 = vmatpush1.bf16.msra.mxu0 %v522
  %606 = vmatprep.subr.bf16.mxu0 0
  %607 = vmatpush1.bf16.msra.mxu0 %v521
  %608 = vmatprep.subr.bf16.mxu0 0
  %609 = vmatpush1.bf16.msra.mxu0 %v520
  %610 = vmatprep.subr.bf16.mxu0 0
  %611 = vmatpush1.bf16.msra.mxu0 %v519
  %612 = vmatprep.subr.bf16.mxu0 0
  %613 = vmatpush1.bf16.msra.mxu0 %v518
  %614 = vmatprep.subr.bf16.mxu0 0
  %615 = vmatpush2.bf16.msra.mxu0 %v533
  %616 = vmatprep.subr.bf16.mxu0 0
  %617 = vmatpush2.bf16.msra.mxu0 %v532
  %618 = vmatprep.subr.bf16.mxu0 0
  %619 = vmatpush2.bf16.msra.mxu0 %v531
  %620 = vmatprep.subr.bf16.mxu0 0
  %621 = vmatpush2.bf16.msra.mxu0 %v530
  %622 = vmatprep.subr.bf16.mxu0 0
  %623 = vmatpush2.bf16.msra.mxu0 %v529
  %624 = vmatprep.subr.bf16.mxu0 0
  %625 = vmatpush2.bf16.msra.mxu0 %v528
  %626 = vmatprep.subr.bf16.mxu0 0
  %627 = vmatpush2.bf16.msra.mxu0 %v527
  %628 = vmatprep.subr.bf16.mxu0 0
  %629 = vmatpush2.bf16.msra.mxu0 %v526
  %630 = vmatprep.mubr.bf16.mxu0 %v279
  %631 = vmatmul.mubr.bf16.gmra.mxu0 %v278
  %v632 = vpop.f32.mrf.mxu0
  %v633 = vadd.f32 %v148, %v632
  %v634 = vpop.f32.mrf.mxu0
  %v635 = vpop.f32.mrf.mxu0
  %v636 = vadd.f32 %v148, %v635
  %v637 = vpop.f32.mrf.mxu0
  %638 = vmatprep.mubr.bf16.mxu0 %v284
  %639 = vmatmul.mubr.bf16.gmra.mxu0 %v283
  %v640 = vpop.f32.mrf.mxu0
  %v641 = vadd.f32 %v148, %v640
  %v642 = vpop.f32.mrf.mxu0
  %v643 = vpop.f32.mrf.mxu0
  %v644 = vadd.f32 %v148, %v643
  %v645 = vpop.f32.mrf.mxu0
  %646 = vmatprep.mubr.bf16.mxu0 %v289
  %647 = vmatmul.mubr.bf16.gmra.mxu0 %v288
  %v648 = vpop.f32.mrf.mxu0
  %v649 = vadd.f32 %v148, %v648
  %v650 = vpop.f32.mrf.mxu0
  %v651 = vpop.f32.mrf.mxu0
  %v652 = vadd.f32 %v148, %v651
  %v653 = vpop.f32.mrf.mxu0
  %654 = vmatprep.mubr.bf16.mxu0 %v294
  %655 = vmatmul.mubr.bf16.gmra.mxu0 %v293
  %v656 = vpop.f32.mrf.mxu0
  %v657 = vadd.f32 %v148, %v656
  %v658 = vpop.f32.mrf.mxu0
  %v659 = vpop.f32.mrf.mxu0
  %v660 = vadd.f32 %v148, %v659
  %v661 = vpop.f32.mrf.mxu0
  %662 = vmatprep.mubr.bf16.mxu0 %v299
  %663 = vmatmul.mubr.bf16.gmra.mxu0 %v298
  %v664 = vpop.f32.mrf.mxu0
  %v665 = vadd.f32 %v148, %v664
  %v666 = vpop.f32.mrf.mxu0
  %v667 = vpop.f32.mrf.mxu0
  %v668 = vadd.f32 %v148, %v667
  %v669 = vpop.f32.mrf.mxu0
  %670 = vmatprep.mubr.bf16.mxu0 %v304
  %671 = vmatmul.mubr.bf16.gmra.mxu0 %v303
  %v672 = vpop.f32.mrf.mxu0
  %v673 = vadd.f32 %v148, %v672
  %v674 = vpop.f32.mrf.mxu0
  %v675 = vpop.f32.mrf.mxu0
  %v676 = vadd.f32 %v148, %v675
  %v677 = vpop.f32.mrf.mxu0
  %678 = vmatprep.mubr.bf16.mxu0 %v309
  %679 = vmatmul.mubr.bf16.gmra.mxu0 %v308
  %v680 = vpop.f32.mrf.mxu0
  %v681 = vadd.f32 %v148, %v680
  %v682 = vpop.f32.mrf.mxu0
  %v683 = vpop.f32.mrf.mxu0
  %v684 = vadd.f32 %v148, %v683
  %v685 = vpop.f32.mrf.mxu0
  %686 = vmatprep.mubr.bf16.mxu0 %v314
  %687 = vmatmul.mubr.bf16.gmra.mxu0 %v313
  %v688 = vpop.f32.mrf.mxu0
  %v689 = vadd.f32 %v148, %v688
  %v690 = vpop.f32.mrf.mxu0
  %v691 = vpop.f32.mrf.mxu0
  %v692 = vadd.f32 %v148, %v691
  %v693 = vpop.f32.mrf.mxu0
  %694 = vdwg.mxu0
  %695 = vmatprep.subr.bf16.mxu0 0
  %696 = vmatpush1.bf16.msra.mxu0 %v541
  %697 = vmatprep.subr.bf16.mxu0 0
  %698 = vmatpush1.bf16.msra.mxu0 %v540
  %699 = vmatprep.subr.bf16.mxu0 0
  %700 = vmatpush1.bf16.msra.mxu0 %v539
  %701 = vmatprep.subr.bf16.mxu0 0
  %702 = vmatpush1.bf16.msra.mxu0 %v538
  %703 = vmatprep.subr.bf16.mxu0 0
  %704 = vmatpush1.bf16.msra.mxu0 %v537
  %705 = vmatprep.subr.bf16.mxu0 0
  %706 = vmatpush1.bf16.msra.mxu0 %v536
  %707 = vmatprep.subr.bf16.mxu0 0
  %708 = vmatpush1.bf16.msra.mxu0 %v535
  %709 = vmatprep.subr.bf16.mxu0 0
  %710 = vmatpush1.bf16.msra.mxu0 %v534
  %711 = vmatprep.subr.bf16.mxu0 0
  %712 = vmatpush2.bf16.msra.mxu0 %v549
  %713 = vmatprep.subr.bf16.mxu0 0
  %714 = vmatpush2.bf16.msra.mxu0 %v548
  %715 = vmatprep.subr.bf16.mxu0 0
  %716 = vmatpush2.bf16.msra.mxu0 %v547
  %717 = vmatprep.subr.bf16.mxu0 0
  %718 = vmatpush2.bf16.msra.mxu0 %v546
  %719 = vmatprep.subr.bf16.mxu0 0
  %720 = vmatpush2.bf16.msra.mxu0 %v545
  %721 = vmatprep.subr.bf16.mxu0 0
  %722 = vmatpush2.bf16.msra.mxu0 %v544
  %723 = vmatprep.subr.bf16.mxu0 0
  %724 = vmatpush2.bf16.msra.mxu0 %v543
  %725 = vmatprep.subr.bf16.mxu0 0
  %726 = vmatpush2.bf16.msra.mxu0 %v542
  %727 = vmatprep.mubr.bf16.mxu0 %v281
  %728 = vmatmul.mubr.bf16.gmra.mxu0 %v280
  %v729 = vpop.f32.mrf.mxu0
  %v730 = vadd.f32 %v633, %v729
  %v731 = vpop.f32.mrf.mxu0
  %v732 = vpop.f32.mrf.mxu0
  %v733 = vadd.f32 %v636, %v732
  %v734 = vpop.f32.mrf.mxu0
  %735 = vmatprep.mubr.bf16.mxu0 %v286
  %736 = vmatmul.mubr.bf16.gmra.mxu0 %v285
  %v737 = vpop.f32.mrf.mxu0
  %v738 = vadd.f32 %v641, %v737
  %v739 = vpop.f32.mrf.mxu0
  %v740 = vpop.f32.mrf.mxu0
  %v741 = vadd.f32 %v644, %v740
  %v742 = vpop.f32.mrf.mxu0
  %743 = vmatprep.mubr.bf16.mxu0 %v291
  %744 = vmatmul.mubr.bf16.gmra.mxu0 %v290
  %v745 = vpop.f32.mrf.mxu0
  %v746 = vadd.f32 %v649, %v745
  %v747 = vpop.f32.mrf.mxu0
  %v748 = vpop.f32.mrf.mxu0
  %v749 = vadd.f32 %v652, %v748
  %v750 = vpop.f32.mrf.mxu0
  %751 = vmatprep.mubr.bf16.mxu0 %v296
  %752 = vmatmul.mubr.bf16.gmra.mxu0 %v295
  %v753 = vpop.f32.mrf.mxu0
  %v754 = vadd.f32 %v657, %v753
  %v755 = vpop.f32.mrf.mxu0
  %v756 = vpop.f32.mrf.mxu0
  %v757 = vadd.f32 %v660, %v756
  %v758 = vpop.f32.mrf.mxu0
  %759 = vmatprep.mubr.bf16.mxu0 %v301
  %760 = vmatmul.mubr.bf16.gmra.mxu0 %v300
  %v761 = vpop.f32.mrf.mxu0
  %v762 = vadd.f32 %v665, %v761
  %v763 = vpop.f32.mrf.mxu0
  %v764 = vpop.f32.mrf.mxu0
  %v765 = vadd.f32 %v668, %v764
  %v766 = vpop.f32.mrf.mxu0
  %767 = vmatprep.mubr.bf16.mxu0 %v306
  %768 = vmatmul.mubr.bf16.gmra.mxu0 %v305
  %v769 = vpop.f32.mrf.mxu0
  %v770 = vadd.f32 %v673, %v769
  %v771 = vpop.f32.mrf.mxu0
  %v772 = vpop.f32.mrf.mxu0
  %v773 = vadd.f32 %v676, %v772
  %v774 = vpop.f32.mrf.mxu0
  %775 = vmatprep.mubr.bf16.mxu0 %v311
  %776 = vmatmul.mubr.bf16.gmra.mxu0 %v310
  %v777 = vpop.f32.mrf.mxu0
  %v778 = vadd.f32 %v681, %v777
  %v779 = vpop.f32.mrf.mxu0
  %v780 = vpop.f32.mrf.mxu0
  %v781 = vadd.f32 %v684, %v780
  %v782 = vpop.f32.mrf.mxu0
  %783 = vmatprep.mubr.bf16.mxu0 %v316
  %784 = vmatmul.mubr.bf16.gmra.mxu0 %v315
  %v785 = vpop.f32.mrf.mxu0
  %v786 = vadd.f32 %v689, %v785
  %v787 = vpop.f32.mrf.mxu0
  %v788 = vpop.f32.mrf.mxu0
  %v789 = vadd.f32 %v692, %v788
  %v790 = vpop.f32.mrf.mxu0
  %791 = vdwg.mxu0
  %792 = vmatprep.subr.bf16.mxu0 0
  %793 = vmatpush1.bf16.msra.mxu0 %v557
  %794 = vmatprep.subr.bf16.mxu0 0
  %795 = vmatpush1.bf16.msra.mxu0 %v556
  %796 = vmatprep.subr.bf16.mxu0 0
  %797 = vmatpush1.bf16.msra.mxu0 %v555
  %798 = vmatprep.subr.bf16.mxu0 0
  %799 = vmatpush1.bf16.msra.mxu0 %v554
  %800 = vmatprep.subr.bf16.mxu0 0
  %801 = vmatpush1.bf16.msra.mxu0 %v553
  %802 = vmatprep.subr.bf16.mxu0 0
  %803 = vmatpush1.bf16.msra.mxu0 %v552
  %804 = vmatprep.subr.bf16.mxu0 0
  %805 = vmatpush1.bf16.msra.mxu0 %v551
  %806 = vmatprep.subr.bf16.mxu0 0
  %807 = vmatpush1.bf16.msra.mxu0 %v550
  %808 = vmatprep.subr.bf16.mxu0 0
  %809 = vmatpush2.bf16.msra.mxu0 0
  %810 = vmatprep.subr.bf16.mxu0 0
  %811 = vmatpush2.bf16.msra.mxu0 0
  %812 = vmatprep.subr.bf16.mxu0 0
  %813 = vmatpush2.bf16.msra.mxu0 0
  %814 = vmatprep.subr.bf16.mxu0 0
  %815 = vmatpush2.bf16.msra.mxu0 0
  %816 = vmatprep.subr.bf16.mxu0 0
  %817 = vmatpush2.bf16.msra.mxu0 0
  %818 = vmatprep.subr.bf16.mxu0 0
  %819 = vmatpush2.bf16.msra.mxu0 0
  %820 = vmatprep.subr.bf16.mxu0 0
  %821 = vmatpush2.bf16.msra.mxu0 0
  %822 = vmatprep.subr.bf16.mxu0 0
  %823 = vmatpush2.bf16.msra.mxu0 0
  %824 = vmatprep.mubr.bf16.mxu0 0
  %825 = vmatmul.mubr.bf16.gmra.mxu0 %v282
  %v826 = vpop.f32.mrf.mxu0
  %v827 = vadd.f32 %v730, %v826
  %v828 = vpop.f32.mrf.mxu0
  %v829 = vpop.f32.mrf.mxu0
  %v830 = vadd.f32 %v733, %v829
  %v831 = vpop.f32.mrf.mxu0
  %832 = vmatprep.mubr.bf16.mxu0 0
  %833 = vmatmul.mubr.bf16.gmra.mxu0 %v287
  %v834 = vpop.f32.mrf.mxu0
  %v835 = vadd.f32 %v738, %v834
  %v836 = vpop.f32.mrf.mxu0
  %v837 = vpop.f32.mrf.mxu0
  %v838 = vadd.f32 %v741, %v837
  %v839 = vpop.f32.mrf.mxu0
  %840 = vmatprep.mubr.bf16.mxu0 0
  %841 = vmatmul.mubr.bf16.gmra.mxu0 %v292
  %v842 = vpop.f32.mrf.mxu0
  %v843 = vadd.f32 %v746, %v842
  %v844 = vpop.f32.mrf.mxu0
  %v845 = vpop.f32.mrf.mxu0
  %v846 = vadd.f32 %v749, %v845
  %v847 = vpop.f32.mrf.mxu0
  %848 = vmatprep.mubr.bf16.mxu0 0
  %849 = vmatmul.mubr.bf16.gmra.mxu0 %v297
  %v850 = vpop.f32.mrf.mxu0
  %v851 = vadd.f32 %v754, %v850
  %v852 = vpop.f32.mrf.mxu0
  %v853 = vpop.f32.mrf.mxu0
  %v854 = vadd.f32 %v757, %v853
  %v855 = vpop.f32.mrf.mxu0
  %856 = vmatprep.mubr.bf16.mxu0 0
  %857 = vmatmul.mubr.bf16.gmra.mxu0 %v302
  %v858 = vpop.f32.mrf.mxu0
  %v859 = vadd.f32 %v762, %v858
  %v860 = vpop.f32.mrf.mxu0
  %v861 = vpop.f32.mrf.mxu0
  %v862 = vadd.f32 %v765, %v861
  %v863 = vpop.f32.mrf.mxu0
  %864 = vmatprep.mubr.bf16.mxu0 0
  %865 = vmatmul.mubr.bf16.gmra.mxu0 %v307
  %v866 = vpop.f32.mrf.mxu0
  %v867 = vadd.f32 %v770, %v866
  %v868 = vpop.f32.mrf.mxu0
  %v869 = vpop.f32.mrf.mxu0
  %v870 = vadd.f32 %v773, %v869
  %v871 = vpop.f32.mrf.mxu0
  %872 = vmatprep.mubr.bf16.mxu0 0
  %873 = vmatmul.mubr.bf16.gmra.mxu0 %v312
  %v874 = vpop.f32.mrf.mxu0
  %v875 = vadd.f32 %v778, %v874
  %v876 = vpop.f32.mrf.mxu0
  %v877 = vpop.f32.mrf.mxu0
  %v878 = vadd.f32 %v781, %v877
  %v879 = vpop.f32.mrf.mxu0
  %880 = vmatprep.mubr.bf16.mxu0 0
  %881 = vmatmul.mubr.bf16.gmra.mxu0 %v317
  %v882 = vpop.f32.mrf.mxu0
  %v883 = vadd.f32 %v786, %v882
  %v884 = vpop.f32.mrf.mxu0
  %v885 = vpop.f32.mrf.mxu0
  %v886 = vadd.f32 %v789, %v885
  %v887 = vpop.f32.mrf.mxu0
  %888 = vdwg.mxu0
  %vm889 = vcmp.gt.f32.partialorder %v827, 0.0
  %vm890 = vcmp.gt.f32.partialorder %v830, 0.0
  %vm891 = vcmp.gt.f32.partialorder %v835, 0.0
  %vm892 = vcmp.gt.f32.partialorder %v838, 0.0
  %vm893 = vcmp.gt.f32.partialorder %v843, 0.0
  %vm894 = vcmp.gt.f32.partialorder %v846, 0.0
  %vm895 = vcmp.gt.f32.partialorder %v851, 0.0
  %vm896 = vcmp.gt.f32.partialorder %v854, 0.0
  %vm897 = vcmp.gt.f32.partialorder %v859, 0.0
  %vm898 = vcmp.gt.f32.partialorder %v862, 0.0
  %vm899 = vcmp.gt.f32.partialorder %v867, 0.0
  %vm900 = vcmp.gt.f32.partialorder %v870, 0.0
  %vm901 = vcmp.gt.f32.partialorder %v875, 0.0
  %vm902 = vcmp.gt.f32.partialorder %v878, 0.0
  %vm903 = vcmp.gt.f32.partialorder %v883, 0.0
  %vm904 = vcmp.gt.f32.partialorder %v886, 0.0
  %v905 = vmul.f32 %v827, 0.2
  %v906 = vmul.f32 %v830, 0.2
  %v907 = vmul.f32 %v835, 0.2
  %v908 = vmul.f32 %v838, 0.2
  %v909 = vmul.f32 %v843, 0.2
  %v910 = vmul.f32 %v846, 0.2
  %v911 = vmul.f32 %v851, 0.2
  %v912 = vmul.f32 %v854, 0.2
  %v913 = vmul.f32 %v859, 0.2
  %v914 = vmul.f32 %v862, 0.2
  %v915 = vmul.f32 %v867, 0.2
  %v916 = vmul.f32 %v870, 0.2
  %v917 = vmul.f32 %v875, 0.2
  %v918 = vmul.f32 %v878, 0.2
  %v919 = vmul.f32 %v883, 0.2
  %v920 = vmul.f32 %v886, 0.2
  %v921 = vsel %vm889, %v827, %v905
  %v922 = vsel %vm890, %v830, %v906
  %v923 = vsel %vm891, %v835, %v907
  %v924 = vsel %vm892, %v838, %v908
  %v925 = vsel %vm893, %v843, %v909
  %v926 = vsel %vm894, %v846, %v910
  %v927 = vsel %vm895, %v851, %v911
  %v928 = vsel %vm896, %v854, %v912
  %v929 = vsel %vm897, %v859, %v913
  %v930 = vsel %vm898, %v862, %v914
  %v931 = vsel %vm899, %v867, %v915
  %v932 = vsel %vm900, %v870, %v916
  %v933 = vsel %vm901, %v875, %v917
  %v934 = vsel %vm902, %v878, %v918
  %v935 = vsel %vm903, %v883, %v919
  %v936 = vsel %vm904, %v886, %v920
  %v937 = vpack.c.bf16 %v922, %v921
  %v938 = vpack.c.bf16 %v924, %v923
  %v939 = vpack.c.bf16 %v926, %v925
  %v940 = vpack.c.bf16 %v928, %v927
  %v941 = vpack.c.bf16 %v930, %v929
  %v942 = vpack.c.bf16 %v932, %v931
  %v943 = vpack.c.bf16 %v934, %v933
  %v944 = vpack.c.bf16 %v936, %v935
  %v953 = vunpack.c.l.b16 %v937
  %v954 = vunpack.c.h.b16 %v937
  %v955 = vunpack.c.l.b16 %v938
  %v956 = vunpack.c.h.b16 %v938
  %v957 = vunpack.c.l.b16 %v939
  %v958 = vunpack.c.h.b16 %v939
  %v959 = vunpack.c.l.b16 %v940
  %v960 = vunpack.c.h.b16 %v940
  %v961 = vunpack.c.l.b16 %v941
  %v962 = vunpack.c.h.b16 %v941
  %v963 = vunpack.c.l.b16 %v942
  %v964 = vunpack.c.h.b16 %v942
  %v965 = vunpack.c.l.b16 %v943
  %v966 = vunpack.c.h.b16 %v943
  %v967 = vunpack.c.l.b16 %v944
  %v968 = vunpack.c.h.b16 %v944
  %v969 = vpack.c.b16 %v953, %v953
  %v970 = vpack.c.b16 %v954, %v954
  %v971 = vpack.c.b16 %v955, %v955
  %v972 = vpack.c.b16 %v956, %v956
  %v973 = vpack.c.b16 %v957, %v957
  %v974 = vpack.c.b16 %v958, %v958
  %v975 = vpack.c.b16 %v959, %v959
  %v976 = vpack.c.b16 %v960, %v960
  %v977 = vpack.c.b16 %v961, %v961
  %v978 = vpack.c.b16 %v962, %v962
  %v979 = vpack.c.b16 %v963, %v963
  %v980 = vpack.c.b16 %v964, %v964
  %v981 = vpack.c.b16 %v965, %v965
  %v982 = vpack.c.b16 %v966, %v966
  %v983 = vpack.c.b16 %v967, %v967
  %v984 = vpack.c.b16 %v968, %v968
  %1001 = vst [vmem:[%s3] sm:$0xf] %v969
  %1002 = vst [vmem:[%s3 + $0x4] sm:$0xf] %v970
  %1003 = vst [vmem:[%s3 + $0x8] sm:$0xf] %v971
  %1004 = vst [vmem:[%s3 + $0xc] sm:$0xf] %v972
  %1005 = vst [vmem:[%s3 + $0x10] sm:$0xf] %v973
  %1006 = vst [vmem:[%s3 + $0x14] sm:$0xf] %v974
  %1007 = vst [vmem:[%s3 + $0x18] sm:$0xf] %v975
  %1008 = vst [vmem:[%s3 + $0x1c] sm:$0xf] %v976
  %1009 = vst [vmem:[%s3 + $0x20] sm:$0xf] %v977
  %1010 = vst [vmem:[%s3 + $0x24] sm:$0xf] %v978
  %1011 = vst [vmem:[%s3 + $0x28] sm:$0xf] %v979
  %1012 = vst [vmem:[%s3 + $0x2c] sm:$0xf] %v980
  %1013 = vst [vmem:[%s3 + $0x30] sm:$0xf] %v981
  %1014 = vst [vmem:[%s3 + $0x34] sm:$0xf] %v982
  %1015 = vst [vmem:[%s3 + $0x38] sm:$0xf] %v983
  %1016 = vst [vmem:[%s3 + $0x3c] sm:$0xf] %v984
  // Predicated region
  $region14: #{discriminator_s_forward.8} parent=0 // pred_check
    _
  $region15: #{discriminator_s_forward.8} parent=0 // pred_check_branch
    %1018 = sbr.rel (0) target = $region17
  $region16: #{discriminator_s_forward.8} parent=0 // pred_region
    _
  $region17: #{discriminator_s_forward.8} parent=0 // pred_fallthru
    _
  // Predicated region
  $region18: #{discriminator_s_forward.8} parent=0 // pred_check
    _
  $region19: #{discriminator_s_forward.8} parent=0 // pred_check_branch
    %1020 = sbr.rel (0) target = $region21
  $region20: #{discriminator_s_forward.8} parent=0 // pred_region
    _
  $region21: #{discriminator_s_forward.8} parent=0 // pred_fallthru
    _

// kernel: discriminator_s_forward.9
$region0: #{discriminator_s_forward.9}
  #allocation0 [shape = 'u32[]', space=smem, size = 0x4, offset = 0x4, fixed_abs, tag = 'smem constant byte address 0x4 - core index']
  #allocation1 [shape = 'u32[144,128]{1,0:T(1,128)}', space=vmem, size = 0x12000, scoped, tag = 'internal scratch']
  %s0 = inlined_call_operand.vmem [shape: bf16[32,896], index: 0, kind: input, shape index: {}]
  %s1 = inlined_call_operand.vmem [shape: bf16[896,128], index: 1, kind: input, shape index: {}]
  %s2 = inlined_call_operand.vmem [shape: f32[1,128], index: 2, kind: input, shape index: {}]
  %s3 = inlined_call_operand.vmem [shape: bf16[32,128], index: 3, kind: output, shape index: {}]
  %s4 = sld [smem:[#allocation0]]
  $region22: #{discriminator_s_forward.9} parent=0
    _
  %s6 = ssub.s32 1, %s4
  %s7 = scalar_select 0, %s6, %s4
  // Predicated region
  $region2: #{discriminator_s_forward.9} parent=0 // pred_check
    _
  $region3: #{discriminator_s_forward.9} parent=0 // pred_check_branch
    %9 = sbr.rel (0) target = $region5
  $region4: #{discriminator_s_forward.9} parent=0 // pred_region
    _
  $region5: #{discriminator_s_forward.9} parent=0 // pred_fallthru
    _
  // Predicated region
  $region6: #{discriminator_s_forward.9} parent=0 // pred_check
    _
  $region7: #{discriminator_s_forward.9} parent=0 // pred_check_branch
    %11 = sbr.rel (0) target = $region9
  $region8: #{discriminator_s_forward.9} parent=0 // pred_region
    _
  $region9: #{discriminator_s_forward.9} parent=0 // pred_fallthru
    _
  // Predicated region
  $region10: #{discriminator_s_forward.9} parent=0 // pred_check
    _
  $region11: #{discriminator_s_forward.9} parent=0 // pred_check_branch
    %13 = sbr.rel (0) target = $region13
  $region12: #{discriminator_s_forward.9} parent=0 // pred_region
    _
  $region13: #{discriminator_s_forward.9} parent=0 // pred_fallthru
    _
  %v15 = vld [vmem:[%s0] sm:$0xff]
  %v16 = vld [vmem:[%s0 + $0x8] sm:$0xff]
  %v17 = vld [vmem:[%s0 + $0x10] sm:$0xff]
  %v18 = vld [vmem:[%s0 + $0x18] sm:$0xf]
  %v19 = vld [vmem:[%s0 + $0x1c] sm:$0xff]
  %v20 = vld [vmem:[%s0 + $0x24] sm:$0xff]
  %v21 = vld [vmem:[%s0 + $0x2c] sm:$0xff]
  %v22 = vld [vmem:[%s0 + $0x34] sm:$0xf]
  %v23 = vld [vmem:[%s0 + $0x38] sm:$0xff]
  %v24 = vld [vmem:[%s0 + $0x40] sm:$0xff]
  %v25 = vld [vmem:[%s0 + $0x48] sm:$0xff]
  %v26 = vld [vmem:[%s0 + $0x50] sm:$0xf]
  %v27 = vld [vmem:[%s0 + $0x54] sm:$0xff]
  %v28 = vld [vmem:[%s0 + $0x5c] sm:$0xff]
  %v29 = vld [vmem:[%s0 + $0x64] sm:$0xff]
  %v30 = vld [vmem:[%s0 + $0x6c] sm:$0xf]
  %v31 = vld [vmem:[%s1] sm:$0xf]
  %v32 = vld [vmem:[%s1 + $0x4] sm:$0xf]
  %v33 = vld [vmem:[%s1 + $0x8] sm:$0xf]
  %v34 = vld [vmem:[%s1 + $0xc] sm:$0xf]
  %v35 = vld [vmem:[%s1 + $0x10] sm:$0xf]
  %v36 = vld [vmem:[%s1 + $0x14] sm:$0xf]
  %v37 = vld [vmem:[%s1 + $0x18] sm:$0xf]
  %v38 = vld [vmem:[%s1 + $0x1c] sm:$0xf]
  %v39 = vld [vmem:[%s1 + $0x20] sm:$0xf]
  %v40 = vld [vmem:[%s1 + $0x24] sm:$0xf]
  %v41 = vld [vmem:[%s1 + $0x28] sm:$0xf]
  %v42 = vld [vmem:[%s1 + $0x2c] sm:$0xf]
  %v43 = vld [vmem:[%s1 + $0x30] sm:$0xf]
  %v44 = vld [vmem:[%s1 + $0x34] sm:$0xf]
  %v45 = vld [vmem:[%s1 + $0x38] sm:$0xf]
  %v46 = vld [vmem:[%s1 + $0x3c] sm:$0xf]
  %v47 = vld [vmem:[%s1 + $0x40] sm:$0xf]
  %v48 = vld [vmem:[%s1 + $0x44] sm:$0xf]
  %v49 = vld [vmem:[%s1 + $0x48] sm:$0xf]
  %v50 = vld [vmem:[%s1 + $0x4c] sm:$0xf]
  %v51 = vld [vmem:[%s1 + $0x50] sm:$0xf]
  %v52 = vld [vmem:[%s1 + $0x54] sm:$0xf]
  %v53 = vld [vmem:[%s1 + $0x58] sm:$0xf]
  %v54 = vld [vmem:[%s1 + $0x5c] sm:$0xf]
  %v55 = vld [vmem:[%s1 + $0x60] sm:$0xf]
  %v56 = vld [vmem:[%s1 + $0x64] sm:$0xf]
  %v57 = vld [vmem:[%s1 + $0x68] sm:$0xf]
  %v58 = vld [vmem:[%s1 + $0x6c] sm:$0xf]
  %v59 = vld [vmem:[%s1 + $0x70] sm:$0xf]
  %v60 = vld [vmem:[%s1 + $0x74] sm:$0xf]
  %v61 = vld [vmem:[%s1 + $0x78] sm:$0xf]
  %v62 = vld [vmem:[%s1 + $0x7c] sm:$0xf]
  %v63 = vld [vmem:[%s1 + $0x80] sm:$0xf]
  %v64 = vld [vmem:[%s1 + $0x84] sm:$0xf]
  %v65 = vld [vmem:[%s1 + $0x88] sm:$0xf]
  %v66 = vld [vmem:[%s1 + $0x8c] sm:$0xf]
  %v67 = vld [vmem:[%s1 + $0x90] sm:$0xf]
  %v68 = vld [vmem:[%s1 + $0x94] sm:$0xf]
  %v69 = vld [vmem:[%s1 + $0x98] sm:$0xf]
  %v70 = vld [vmem:[%s1 + $0x9c] sm:$0xf]
  %v71 = vld [vmem:[%s1 + $0xa0] sm:$0xf]
  %v72 = vld [vmem:[%s1 + $0xa4] sm:$0xf]
  %v73 = vld [vmem:[%s1 + $0xa8] sm:$0xf]
  %v74 = vld [vmem:[%s1 + $0xac] sm:$0xf]
  %v75 = vld [vmem:[%s1 + $0xb0] sm:$0xf]
  %v76 = vld [vmem:[%s1 + $0xb4] sm:$0xf]
  %v77 = vld [vmem:[%s1 + $0xb8] sm:$0xf]
  %v78 = vld [vmem:[%s1 + $0xbc] sm:$0xf]
  %v79 = vld [vmem:[%s1 + $0xc0] sm:$0xf]
  %v80 = vld [vmem:[%s1 + $0xc4] sm:$0xf]
  %v81 = vld [vmem:[%s1 + $0xc8] sm:$0xf]
  %v82 = vld [vmem:[%s1 + $0xcc] sm:$0xf]
  %v83 = vld [vmem:[%s1 + $0xd0] sm:$0xf]
  %v84 = vld [vmem:[%s1 + $0xd4] sm:$0xf]
  %v85 = vld [vmem:[%s1 + $0xd8] sm:$0xf]
  %v86 = vld [vmem:[%s1 + $0xdc] sm:$0xf]
  %v87 = vld [vmem:[%s1 + $0xe0] sm:$0xf]
  %v88 = vld [vmem:[%s1 + $0xe4] sm:$0xf]
  %v89 = vld [vmem:[%s1 + $0xe8] sm:$0xf]
  %v90 = vld [vmem:[%s1 + $0xec] sm:$0xf]
  %v91 = vld [vmem:[%s1 + $0xf0] sm:$0xf]
  %v92 = vld [vmem:[%s1 + $0xf4] sm:$0xf]
  %v93 = vld [vmem:[%s1 + $0xf8] sm:$0xf]
  %v94 = vld [vmem:[%s1 + $0xfc] sm:$0xf]
  %v95 = vld [vmem:[%s1 + $0x100] sm:$0xf]
  %v96 = vld [vmem:[%s1 + $0x104] sm:$0xf]
  %v97 = vld [vmem:[%s1 + $0x108] sm:$0xf]
  %v98 = vld [vmem:[%s1 + $0x10c] sm:$0xf]
  %v99 = vld [vmem:[%s1 + $0x110] sm:$0xf]
  %v100 = vld [vmem:[%s1 + $0x114] sm:$0xf]
  %v101 = vld [vmem:[%s1 + $0x118] sm:$0xf]
  %v102 = vld [vmem:[%s1 + $0x11c] sm:$0xf]
  %v103 = vld [vmem:[%s1 + $0x120] sm:$0xf]
  %v104 = vld [vmem:[%s1 + $0x124] sm:$0xf]
  %v105 = vld [vmem:[%s1 + $0x128] sm:$0xf]
  %v106 = vld [vmem:[%s1 + $0x12c] sm:$0xf]
  %v107 = vld [vmem:[%s1 + $0x130] sm:$0xf]
  %v108 = vld [vmem:[%s1 + $0x134] sm:$0xf]
  %v109 = vld [vmem:[%s1 + $0x138] sm:$0xf]
  %v110 = vld [vmem:[%s1 + $0x13c] sm:$0xf]
  %v111 = vld [vmem:[%s1 + $0x140] sm:$0xf]
  %v112 = vld [vmem:[%s1 + $0x144] sm:$0xf]
  %v113 = vld [vmem:[%s1 + $0x148] sm:$0xf]
  %v114 = vld [vmem:[%s1 + $0x14c] sm:$0xf]
  %v115 = vld [vmem:[%s1 + $0x150] sm:$0xf]
  %v116 = vld [vmem:[%s1 + $0x154] sm:$0xf]
  %v117 = vld [vmem:[%s1 + $0x158] sm:$0xf]
  %v118 = vld [vmem:[%s1 + $0x15c] sm:$0xf]
  %v119 = vld [vmem:[%s1 + $0x160] sm:$0xf]
  %v120 = vld [vmem:[%s1 + $0x164] sm:$0xf]
  %v121 = vld [vmem:[%s1 + $0x168] sm:$0xf]
  %v122 = vld [vmem:[%s1 + $0x16c] sm:$0xf]
  %v123 = vld [vmem:[%s1 + $0x170] sm:$0xf]
  %v124 = vld [vmem:[%s1 + $0x174] sm:$0xf]
  %v125 = vld [vmem:[%s1 + $0x178] sm:$0xf]
  %v126 = vld [vmem:[%s1 + $0x17c] sm:$0xf]
  %v127 = vld [vmem:[%s1 + $0x180] sm:$0xf]
  %v128 = vld [vmem:[%s1 + $0x184] sm:$0xf]
  %v129 = vld [vmem:[%s1 + $0x188] sm:$0xf]
  %v130 = vld [vmem:[%s1 + $0x18c] sm:$0xf]
  %v131 = vld [vmem:[%s1 + $0x190] sm:$0xf]
  %v132 = vld [vmem:[%s1 + $0x194] sm:$0xf]
  %v133 = vld [vmem:[%s1 + $0x198] sm:$0xf]
  %v134 = vld [vmem:[%s1 + $0x19c] sm:$0xf]
  %v135 = vld [vmem:[%s1 + $0x1a0] sm:$0xf]
  %v136 = vld [vmem:[%s1 + $0x1a4] sm:$0xf]
  %v137 = vld [vmem:[%s1 + $0x1a8] sm:$0xf]
  %v138 = vld [vmem:[%s1 + $0x1ac] sm:$0xf]
  %v139 = vld [vmem:[%s1 + $0x1b0] sm:$0xf]
  %v140 = vld [vmem:[%s1 + $0x1b4] sm:$0xf]
  %v141 = vld [vmem:[%s1 + $0x1b8] sm:$0xf]
  %v142 = vld [vmem:[%s1 + $0x1bc] sm:$0xf]
  %v143 = vld [vmem:[%s2] sm:$0x1]
  %v145 = vlaneseq
  %v146 = vshrl.u32 %v145, 7
  %v147 = vsub.s32 0, %v146
  %v148 = vrot.slane %v143, %v147
  %v166 = vunpack.c.l.b16 %v15
  %v167 = vunpack.c.h.b16 %v15
  %v168 = vunpack.c.l.b16 %v16
  %v169 = vunpack.c.h.b16 %v16
  %v170 = vunpack.c.l.b16 %v17
  %v171 = vunpack.c.h.b16 %v17
  %v172 = vunpack.c.l.b16 %v18
  %v173 = vunpack.c.l.b16 %v19
  %v174 = vunpack.c.h.b16 %v19
  %v175 = vunpack.c.l.b16 %v20
  %v176 = vunpack.c.h.b16 %v20
  %v177 = vunpack.c.l.b16 %v21
  %v178 = vunpack.c.h.b16 %v21
  %v179 = vunpack.c.l.b16 %v22
  %v180 = vunpack.c.l.b16 %v23
  %v181 = vunpack.c.h.b16 %v23
  %v182 = vunpack.c.l.b16 %v24
  %v183 = vunpack.c.h.b16 %v24
  %v184 = vunpack.c.l.b16 %v25
  %v185 = vunpack.c.h.b16 %v25
  %v186 = vunpack.c.l.b16 %v26
  %v187 = vunpack.c.l.b16 %v27
  %v188 = vunpack.c.h.b16 %v27
  %v189 = vunpack.c.l.b16 %v28
  %v190 = vunpack.c.h.b16 %v28
  %v191 = vunpack.c.l.b16 %v29
  %v192 = vunpack.c.h.b16 %v29
  %v193 = vunpack.c.l.b16 %v30
  %v194 = vpack.c.b16 %v173, %v166
  %v195 = vpack.c.b16 %v174, %v167
  %v196 = vpack.c.b16 %v175, %v168
  %v197 = vpack.c.b16 %v176, %v169
  %v198 = vpack.c.b16 %v177, %v170
  %v199 = vpack.c.b16 %v178, %v171
  %v200 = vpack.c.b16 %v179, %v172
  %v201 = vpack.c.b16 %v187, %v180
  %v202 = vpack.c.b16 %v188, %v181
  %v203 = vpack.c.b16 %v189, %v182
  %v204 = vpack.c.b16 %v190, %v183
  %v205 = vpack.c.b16 %v191, %v184
  %v206 = vpack.c.b16 %v192, %v185
  %v207 = vpack.c.b16 %v193, %v186
  %v334 = vunpack.c.l.b16 %v31
  %v335 = vunpack.c.l.b16 %v32
  %v336 = vunpack.c.l.b16 %v33
  %v337 = vunpack.c.l.b16 %v34
  %v338 = vunpack.c.l.b16 %v35
  %v339 = vunpack.c.l.b16 %v36
  %v340 = vunpack.c.l.b16 %v37
  %v341 = vunpack.c.l.b16 %v38
  %v342 = vunpack.c.l.b16 %v39
  %v343 = vunpack.c.l.b16 %v40
  %v344 = vunpack.c.l.b16 %v41
  %v345 = vunpack.c.l.b16 %v42
  %v346 = vunpack.c.l.b16 %v43
  %v347 = vunpack.c.l.b16 %v44
  %v348 = vunpack.c.l.b16 %v45
  %v349 = vunpack.c.l.b16 %v46
  %v350 = vunpack.c.l.b16 %v47
  %v351 = vunpack.c.l.b16 %v48
  %v352 = vunpack.c.l.b16 %v49
  %v353 = vunpack.c.l.b16 %v50
  %v354 = vunpack.c.l.b16 %v51
  %v355 = vunpack.c.l.b16 %v52
  %v356 = vunpack.c.l.b16 %v53
  %v357 = vunpack.c.l.b16 %v54
  %v358 = vunpack.c.l.b16 %v55
  %v359 = vunpack.c.l.b16 %v56
  %v360 = vunpack.c.l.b16 %v57
  %v361 = vunpack.c.l.b16 %v58
  %v362 = vunpack.c.l.b16 %v59
  %v363 = vunpack.c.l.b16 %v60
  %v364 = vunpack.c.l.b16 %v61
  %v365 = vunpack.c.l.b16 %v62
  %v366 = vunpack.c.l.b16 %v63
  %v367 = vunpack.c.l.b16 %v64
  %v368 = vunpack.c.l.b16 %v65
  %v369 = vunpack.c.l.b16 %v66
  %v370 = vunpack.c.l.b16 %v67
  %v371 = vunpack.c.l.b16 %v68
  %v372 = vunpack.c.l.b16 %v69
  %v373 = vunpack.c.l.b16 %v70
  %v374 = vunpack.c.l.b16 %v71
  %v375 = vunpack.c.l.b16 %v72
  %v376 = vunpack.c.l.b16 %v73
  %v377 = vunpack.c.l.b16 %v74
  %v378 = vunpack.c.l.b16 %v75
  %v379 = vunpack.c.l.b16 %v76
  %v380 = vunpack.c.l.b16 %v77
  %v381 = vunpack.c.l.b16 %v78
  %v382 = vunpack.c.l.b16 %v79
  %v383 = vunpack.c.l.b16 %v80
  %v384 = vunpack.c.l.b16 %v81
  %v385 = vunpack.c.l.b16 %v82
  %v386 = vunpack.c.l.b16 %v83
  %v387 = vunpack.c.l.b16 %v84
  %v388 = vunpack.c.l.b16 %v85
  %v389 = vunpack.c.l.b16 %v86
  %v390 = vunpack.c.l.b16 %v87
  %v391 = vunpack.c.l.b16 %v88
  %v392 = vunpack.c.l.b16 %v89
  %v393 = vunpack.c.l.b16 %v90
  %v394 = vunpack.c.l.b16 %v91
  %v395 = vunpack.c.l.b16 %v92
  %v396 = vunpack.c.l.b16 %v93
  %v397 = vunpack.c.l.b16 %v94
  %v398 = vunpack.c.l.b16 %v95
  %v399 = vunpack.c.l.b16 %v96
  %v400 = vunpack.c.l.b16 %v97
  %v401 = vunpack.c.l.b16 %v98
  %v402 = vunpack.c.l.b16 %v99
  %v403 = vunpack.c.l.b16 %v100
  %v404 = vunpack.c.l.b16 %v101
  %v405 = vunpack.c.l.b16 %v102
  %v406 = vunpack.c.l.b16 %v103
  %v407 = vunpack.c.l.b16 %v104
  %v408 = vunpack.c.l.b16 %v105
  %v409 = vunpack.c.l.b16 %v106
  %v410 = vunpack.c.l.b16 %v107
  %v411 = vunpack.c.l.b16 %v108
  %v412 = vunpack.c.l.b16 %v109
  %v413 = vunpack.c.l.b16 %v110
  %v414 = vunpack.c.l.b16 %v111
  %v415 = vunpack.c.l.b16 %v112
  %v416 = vunpack.c.l.b16 %v113
  %v417 = vunpack.c.l.b16 %v114
  %v418 = vunpack.c.l.b16 %v115
  %v419 = vunpack.c.l.b16 %v116
  %v420 = vunpack.c.l.b16 %v117
  %v421 = vunpack.c.l.b16 %v118
  %v422 = vunpack.c.l.b16 %v119
  %v423 = vunpack.c.l.b16 %v120
  %v424 = vunpack.c.l.b16 %v121
  %v425 = vunpack.c.l.b16 %v122
  %v426 = vunpack.c.l.b16 %v123
  %v427 = vunpack.c.l.b16 %v124
  %v428 = vunpack.c.l.b16 %v125
  %v429 = vunpack.c.l.b16 %v126
  %v430 = vunpack.c.l.b16 %v127
  %v431 = vunpack.c.l.b16 %v128
  %v432 = vunpack.c.l.b16 %v129
  %v433 = vunpack.c.l.b16 %v130
  %v434 = vunpack.c.l.b16 %v131
  %v435 = vunpack.c.l.b16 %v132
  %v436 = vunpack.c.l.b16 %v133
  %v437 = vunpack.c.l.b16 %v134
  %v438 = vunpack.c.l.b16 %v135
  %v439 = vunpack.c.l.b16 %v136
  %v440 = vunpack.c.l.b16 %v137
  %v441 = vunpack.c.l.b16 %v138
  %v442 = vunpack.c.l.b16 %v139
  %v443 = vunpack.c.l.b16 %v140
  %v444 = vunpack.c.l.b16 %v141
  %v445 = vunpack.c.l.b16 %v142
  %v446 = vpack.c.b16 %v335, %v334
  %v447 = vpack.c.b16 %v337, %v336
  %v448 = vpack.c.b16 %v339, %v338
  %v449 = vpack.c.b16 %v341, %v340
  %v450 = vpack.c.b16 %v343, %v342
  %v451 = vpack.c.b16 %v345, %v344
  %v452 = vpack.c.b16 %v347, %v346
  %v453 = vpack.c.b16 %v349, %v348
  %v454 = vpack.c.b16 %v351, %v350
  %v455 = vpack.c.b16 %v353, %v352
  %v456 = vpack.c.b16 %v355, %v354
  %v457 = vpack.c.b16 %v357, %v356
  %v458 = vpack.c.b16 %v359, %v358
  %v459 = vpack.c.b16 %v361, %v360
  %v460 = vpack.c.b16 %v363, %v362
  %v461 = vpack.c.b16 %v365, %v364
  %v462 = vpack.c.b16 %v367, %v366
  %v463 = vpack.c.b16 %v369, %v368
  %v464 = vpack.c.b16 %v371, %v370
  %v465 = vpack.c.b16 %v373, %v372
  %v466 = vpack.c.b16 %v375, %v374
  %v467 = vpack.c.b16 %v377, %v376
  %v468 = vpack.c.b16 %v379, %v378
  %v469 = vpack.c.b16 %v381, %v380
  %v470 = vpack.c.b16 %v383, %v382
  %v471 = vpack.c.b16 %v385, %v384
  %v472 = vpack.c.b16 %v387, %v386
  %v473 = vpack.c.b16 %v389, %v388
  %v474 = vpack.c.b16 %v391, %v390
  %v475 = vpack.c.b16 %v393, %v392
  %v476 = vpack.c.b16 %v395, %v394
  %v477 = vpack.c.b16 %v397, %v396
  %v478 = vpack.c.b16 %v399, %v398
  %v479 = vpack.c.b16 %v401, %v400
  %v480 = vpack.c.b16 %v403, %v402
  %v481 = vpack.c.b16 %v405, %v404
  %v482 = vpack.c.b16 %v407, %v406
  %v483 = vpack.c.b16 %v409, %v408
  %v484 = vpack.c.b16 %v411, %v410
  %v485 = vpack.c.b16 %v413, %v412
  %v486 = vpack.c.b16 %v415, %v414
  %v487 = vpack.c.b16 %v417, %v416
  %v488 = vpack.c.b16 %v419, %v418
  %v489 = vpack.c.b16 %v421, %v420
  %v490 = vpack.c.b16 %v423, %v422
  %v491 = vpack.c.b16 %v425, %v424
  %v492 = vpack.c.b16 %v427, %v426
  %v493 = vpack.c.b16 %v429, %v428
  %v494 = vpack.c.b16 %v431, %v430
  %v495 = vpack.c.b16 %v433, %v432
  %v496 = vpack.c.b16 %v435, %v434
  %v497 = vpack.c.b16 %v437, %v436
  %v498 = vpack.c.b16 %v439, %v438
  %v499 = vpack.c.b16 %v441, %v440
  %v500 = vpack.c.b16 %v443, %v442
  %v501 = vpack.c.b16 %v445, %v444
  %558 = vmatprep.subr.bf16.mxu0 0
  %559 = vmatpush1.bf16.msra.mxu0 %v453
  %560 = vmatprep.subr.bf16.mxu0 0
  %561 = vmatpush1.bf16.msra.mxu0 %v452
  %562 = vmatprep.subr.bf16.mxu0 0
  %563 = vmatpush1.bf16.msra.mxu0 %v451
  %564 = vmatprep.subr.bf16.mxu0 0
  %565 = vmatpush1.bf16.msra.mxu0 %v450
  %566 = vmatprep.subr.bf16.mxu0 0
  %567 = vmatpush1.bf16.msra.mxu0 %v449
  %568 = vmatprep.subr.bf16.mxu0 0
  %569 = vmatpush1.bf16.msra.mxu0 %v448
  %570 = vmatprep.subr.bf16.mxu0 0
  %571 = vmatpush1.bf16.msra.mxu0 %v447
  %572 = vmatprep.subr.bf16.mxu0 0
  %573 = vmatpush1.bf16.msra.mxu0 %v446
  %574 = vmatprep.subr.bf16.mxu0 0
  %575 = vmatpush2.bf16.msra.mxu0 %v461
  %576 = vmatprep.subr.bf16.mxu0 0
  %577 = vmatpush2.bf16.msra.mxu0 %v460
  %578 = vmatprep.subr.bf16.mxu0 0
  %579 = vmatpush2.bf16.msra.mxu0 %v459
  %580 = vmatprep.subr.bf16.mxu0 0
  %581 = vmatpush2.bf16.msra.mxu0 %v458
  %582 = vmatprep.subr.bf16.mxu0 0
  %583 = vmatpush2.bf16.msra.mxu0 %v457
  %584 = vmatprep.subr.bf16.mxu0 0
  %585 = vmatpush2.bf16.msra.mxu0 %v456
  %586 = vmatprep.subr.bf16.mxu0 0
  %587 = vmatpush2.bf16.msra.mxu0 %v455
  %588 = vmatprep.subr.bf16.mxu0 0
  %589 = vmatpush2.bf16.msra.mxu0 %v454
  %590 = vmatprep.mubr.bf16.mxu0 %v195
  %591 = vmatmul.mubr.bf16.gmra.mxu0 %v194
  %v592 = vpop.f32.mrf.mxu0
  %v593 = vadd.f32 %v148, %v592
  %v594 = vpop.f32.mrf.mxu0
  %v595 = vpop.f32.mrf.mxu0
  %v596 = vadd.f32 %v148, %v595
  %v597 = vpop.f32.mrf.mxu0
  %598 = vmatprep.mubr.bf16.mxu0 %v202
  %599 = vmatmul.mubr.bf16.gmra.mxu0 %v201
  %v600 = vpop.f32.mrf.mxu0
  %v601 = vadd.f32 %v148, %v600
  %v602 = vpop.f32.mrf.mxu0
  %v603 = vpop.f32.mrf.mxu0
  %v604 = vadd.f32 %v148, %v603
  %v605 = vpop.f32.mrf.mxu0
  %606 = vdwg.mxu0
  %607 = vmatprep.subr.bf16.mxu0 0
  %608 = vmatpush1.bf16.msra.mxu0 %v469
  %609 = vmatprep.subr.bf16.mxu0 0
  %610 = vmatpush1.bf16.msra.mxu0 %v468
  %611 = vmatprep.subr.bf16.mxu0 0
  %612 = vmatpush1.bf16.msra.mxu0 %v467
  %613 = vmatprep.subr.bf16.mxu0 0
  %614 = vmatpush1.bf16.msra.mxu0 %v466
  %615 = vmatprep.subr.bf16.mxu0 0
  %616 = vmatpush1.bf16.msra.mxu0 %v465
  %617 = vmatprep.subr.bf16.mxu0 0
  %618 = vmatpush1.bf16.msra.mxu0 %v464
  %619 = vmatprep.subr.bf16.mxu0 0
  %620 = vmatpush1.bf16.msra.mxu0 %v463
  %621 = vmatprep.subr.bf16.mxu0 0
  %622 = vmatpush1.bf16.msra.mxu0 %v462
  %623 = vmatprep.subr.bf16.mxu0 0
  %624 = vmatpush2.bf16.msra.mxu0 %v477
  %625 = vmatprep.subr.bf16.mxu0 0
  %626 = vmatpush2.bf16.msra.mxu0 %v476
  %627 = vmatprep.subr.bf16.mxu0 0
  %628 = vmatpush2.bf16.msra.mxu0 %v475
  %629 = vmatprep.subr.bf16.mxu0 0
  %630 = vmatpush2.bf16.msra.mxu0 %v474
  %631 = vmatprep.subr.bf16.mxu0 0
  %632 = vmatpush2.bf16.msra.mxu0 %v473
  %633 = vmatprep.subr.bf16.mxu0 0
  %634 = vmatpush2.bf16.msra.mxu0 %v472
  %635 = vmatprep.subr.bf16.mxu0 0
  %636 = vmatpush2.bf16.msra.mxu0 %v471
  %637 = vmatprep.subr.bf16.mxu0 0
  %638 = vmatpush2.bf16.msra.mxu0 %v470
  %639 = vmatprep.mubr.bf16.mxu0 %v197
  %640 = vmatmul.mubr.bf16.gmra.mxu0 %v196
  %v641 = vpop.f32.mrf.mxu0
  %v642 = vadd.f32 %v593, %v641
  %v643 = vpop.f32.mrf.mxu0
  %v644 = vpop.f32.mrf.mxu0
  %v645 = vadd.f32 %v596, %v644
  %v646 = vpop.f32.mrf.mxu0
  %647 = vmatprep.mubr.bf16.mxu0 %v204
  %648 = vmatmul.mubr.bf16.gmra.mxu0 %v203
  %v649 = vpop.f32.mrf.mxu0
  %v650 = vadd.f32 %v601, %v649
  %v651 = vpop.f32.mrf.mxu0
  %v652 = vpop.f32.mrf.mxu0
  %v653 = vadd.f32 %v604, %v652
  %v654 = vpop.f32.mrf.mxu0
  %655 = vdwg.mxu0
  %656 = vmatprep.subr.bf16.mxu0 0
  %657 = vmatpush1.bf16.msra.mxu0 %v485
  %658 = vmatprep.subr.bf16.mxu0 0
  %659 = vmatpush1.bf16.msra.mxu0 %v484
  %660 = vmatprep.subr.bf16.mxu0 0
  %661 = vmatpush1.bf16.msra.mxu0 %v483
  %662 = vmatprep.subr.bf16.mxu0 0
  %663 = vmatpush1.bf16.msra.mxu0 %v482
  %664 = vmatprep.subr.bf16.mxu0 0
  %665 = vmatpush1.bf16.msra.mxu0 %v481
  %666 = vmatprep.subr.bf16.mxu0 0
  %667 = vmatpush1.bf16.msra.mxu0 %v480
  %668 = vmatprep.subr.bf16.mxu0 0
  %669 = vmatpush1.bf16.msra.mxu0 %v479
  %670 = vmatprep.subr.bf16.mxu0 0
  %671 = vmatpush1.bf16.msra.mxu0 %v478
  %672 = vmatprep.subr.bf16.mxu0 0
  %673 = vmatpush2.bf16.msra.mxu0 %v493
  %674 = vmatprep.subr.bf16.mxu0 0
  %675 = vmatpush2.bf16.msra.mxu0 %v492
  %676 = vmatprep.subr.bf16.mxu0 0
  %677 = vmatpush2.bf16.msra.mxu0 %v491
  %678 = vmatprep.subr.bf16.mxu0 0
  %679 = vmatpush2.bf16.msra.mxu0 %v490
  %680 = vmatprep.subr.bf16.mxu0 0
  %681 = vmatpush2.bf16.msra.mxu0 %v489
  %682 = vmatprep.subr.bf16.mxu0 0
  %683 = vmatpush2.bf16.msra.mxu0 %v488
  %684 = vmatprep.subr.bf16.mxu0 0
  %685 = vmatpush2.bf16.msra.mxu0 %v487
  %686 = vmatprep.subr.bf16.mxu0 0
  %687 = vmatpush2.bf16.msra.mxu0 %v486
  %688 = vmatprep.mubr.bf16.mxu0 %v199
  %689 = vmatmul.mubr.bf16.gmra.mxu0 %v198
  %v690 = vpop.f32.mrf.mxu0
  %v691 = vadd.f32 %v642, %v690
  %v692 = vpop.f32.mrf.mxu0
  %v693 = vpop.f32.mrf.mxu0
  %v694 = vadd.f32 %v645, %v693
  %v695 = vpop.f32.mrf.mxu0
  %696 = vmatprep.mubr.bf16.mxu0 %v206
  %697 = vmatmul.mubr.bf16.gmra.mxu0 %v205
  %v698 = vpop.f32.mrf.mxu0
  %v699 = vadd.f32 %v650, %v698
  %v700 = vpop.f32.mrf.mxu0
  %v701 = vpop.f32.mrf.mxu0
  %v702 = vadd.f32 %v653, %v701
  %v703 = vpop.f32.mrf.mxu0
  %704 = vdwg.mxu0
  %705 = vmatprep.subr.bf16.mxu0 0
  %706 = vmatpush1.bf16.msra.mxu0 %v501
  %707 = vmatprep.subr.bf16.mxu0 0
  %708 = vmatpush1.bf16.msra.mxu0 %v500
  %709 = vmatprep.subr.bf16.mxu0 0
  %710 = vmatpush1.bf16.msra.mxu0 %v499
  %711 = vmatprep.subr.bf16.mxu0 0
  %712 = vmatpush1.bf16.msra.mxu0 %v498
  %713 = vmatprep.subr.bf16.mxu0 0
  %714 = vmatpush1.bf16.msra.mxu0 %v497
  %715 = vmatprep.subr.bf16.mxu0 0
  %716 = vmatpush1.bf16.msra.mxu0 %v496
  %717 = vmatprep.subr.bf16.mxu0 0
  %718 = vmatpush1.bf16.msra.mxu0 %v495
  %719 = vmatprep.subr.bf16.mxu0 0
  %720 = vmatpush1.bf16.msra.mxu0 %v494
  %721 = vmatprep.subr.bf16.mxu0 0
  %722 = vmatpush2.bf16.msra.mxu0 0
  %723 = vmatprep.subr.bf16.mxu0 0
  %724 = vmatpush2.bf16.msra.mxu0 0
  %725 = vmatprep.subr.bf16.mxu0 0
  %726 = vmatpush2.bf16.msra.mxu0 0
  %727 = vmatprep.subr.bf16.mxu0 0
  %728 = vmatpush2.bf16.msra.mxu0 0
  %729 = vmatprep.subr.bf16.mxu0 0
  %730 = vmatpush2.bf16.msra.mxu0 0
  %731 = vmatprep.subr.bf16.mxu0 0
  %732 = vmatpush2.bf16.msra.mxu0 0
  %733 = vmatprep.subr.bf16.mxu0 0
  %734 = vmatpush2.bf16.msra.mxu0 0
  %735 = vmatprep.subr.bf16.mxu0 0
  %736 = vmatpush2.bf16.msra.mxu0 0
  %737 = vmatprep.mubr.bf16.mxu0 0
  %738 = vmatmul.mubr.bf16.gmra.mxu0 %v200
  %v739 = vpop.f32.mrf.mxu0
  %v740 = vadd.f32 %v691, %v739
  %v741 = vpop.f32.mrf.mxu0
  %v742 = vpop.f32.mrf.mxu0
  %v743 = vadd.f32 %v694, %v742
  %v744 = vpop.f32.mrf.mxu0
  %745 = vmatprep.mubr.bf16.mxu0 0
  %746 = vmatmul.mubr.bf16.gmra.mxu0 %v207
  %v747 = vpop.f32.mrf.mxu0
  %v748 = vadd.f32 %v699, %v747
  %v749 = vpop.f32.mrf.mxu0
  %v750 = vpop.f32.mrf.mxu0
  %v751 = vadd.f32 %v702, %v750
  %v752 = vpop.f32.mrf.mxu0
  %753 = vdwg.mxu0
  %vm754 = vcmp.gt.f32.partialorder %v740, 0.0
  %vm755 = vcmp.gt.f32.partialorder %v743, 0.0
  %vm756 = vcmp.gt.f32.partialorder %v748, 0.0
  %vm757 = vcmp.gt.f32.partialorder %v751, 0.0
  %v758 = vmul.f32 %v740, 0.2
  %v759 = vmul.f32 %v743, 0.2
  %v760 = vmul.f32 %v748, 0.2
  %v761 = vmul.f32 %v751, 0.2
  %v762 = vsel %vm754, %v740, %v758
  %v763 = vsel %vm755, %v743, %v759
  %v764 = vsel %vm756, %v748, %v760
  %v765 = vsel %vm757, %v751, %v761
  %v766 = vpack.c.bf16 %v763, %v762
  %v767 = vpack.c.bf16 %v765, %v764
  %v770 = vunpack.c.l.b16 %v766
  %v771 = vunpack.c.h.b16 %v766
  %v772 = vunpack.c.l.b16 %v767
  %v773 = vunpack.c.h.b16 %v767
  %v774 = vpack.c.b16 %v770, %v770
  %v775 = vpack.c.b16 %v771, %v771
  %v776 = vpack.c.b16 %v772, %v772
  %v777 = vpack.c.b16 %v773, %v773
  %782 = vst [vmem:[%s3] sm:$0xf] %v774
  %783 = vst [vmem:[%s3 + $0x4] sm:$0xf] %v775
  %784 = vst [vmem:[%s3 + $0x8] sm:$0xf] %v776
  %785 = vst [vmem:[%s3 + $0xc] sm:$0xf] %v777
  // Predicated region
  $region14: #{discriminator_s_forward.9} parent=0 // pred_check
    _
  $region15: #{discriminator_s_forward.9} parent=0 // pred_check_branch
    %787 = sbr.rel (0) target = $region17
  $region16: #{discriminator_s_forward.9} parent=0 // pred_region
    _
  $region17: #{discriminator_s_forward.9} parent=0 // pred_fallthru
    _
  // Predicated region
  $region18: #{discriminator_s_forward.9} parent=0 // pred_check
    _
  $region19: #{discriminator_s_forward.9} parent=0 // pred_check_branch
    %789 = sbr.rel (0) target = $region21
  $region20: #{discriminator_s_forward.9} parent=0 // pred_region
    _
  $region21: #{discriminator_s_forward.9} parent=0 // pred_fallthru
    _

// kernel: discriminator_s_forward.11
$region0: #{discriminator_s_forward.11}
  #allocation0 [shape = 'u32[]', space=smem, size = 0x4, offset = 0x4, fixed_abs, tag = 'smem constant byte address 0x4 - core index']
  #allocation1 [shape = 'u32[144,128]{1,0:T(1,128)}', space=vmem, size = 0x12000, scoped, tag = 'internal scratch']
  %s0 = inlined_call_operand.vmem [shape: bf16[32,896], index: 0, kind: input, shape index: {}]
  %s1 = inlined_call_operand.vmem [shape: bf16[896,128], index: 1, kind: input, shape index: {}]
  %s2 = inlined_call_operand.vmem [shape: f32[1,128], index: 2, kind: input, shape index: {}]
  %s3 = inlined_call_operand.vmem [shape: f32[32,128], index: 3, kind: output, shape index: {}]
  %s4 = sld [smem:[#allocation0]]
  $region22: #{discriminator_s_forward.11} parent=0
    _
  %s6 = ssub.s32 1, %s4
  %s7 = scalar_select 0, %s6, %s4
  // Predicated region
  $region2: #{discriminator_s_forward.11} parent=0 // pred_check
    _
  $region3: #{discriminator_s_forward.11} parent=0 // pred_check_branch
    %9 = sbr.rel (0) target = $region5
  $region4: #{discriminator_s_forward.11} parent=0 // pred_region
    _
  $region5: #{discriminator_s_forward.11} parent=0 // pred_fallthru
    _
  // Predicated region
  $region6: #{discriminator_s_forward.11} parent=0 // pred_check
    _
  $region7: #{discriminator_s_forward.11} parent=0 // pred_check_branch
    %11 = sbr.rel (0) target = $region9
  $region8: #{discriminator_s_forward.11} parent=0 // pred_region
    _
  $region9: #{discriminator_s_forward.11} parent=0 // pred_fallthru
    _
  // Predicated region
  $region10: #{discriminator_s_forward.11} parent=0 // pred_check
    _
  $region11: #{discriminator_s_forward.11} parent=0 // pred_check_branch
    %13 = sbr.rel (0) target = $region13
  $region12: #{discriminator_s_forward.11} parent=0 // pred_region
    _
  $region13: #{discriminator_s_forward.11} parent=0 // pred_fallthru
    _
  %v15 = vld [vmem:[%s0] sm:$0xff]
  %v16 = vld [vmem:[%s0 + $0x8] sm:$0xff]
  %v17 = vld [vmem:[%s0 + $0x10] sm:$0xff]
  %v18 = vld [vmem:[%s0 + $0x18] sm:$0xf]
  %v19 = vld [vmem:[%s0 + $0x1c] sm:$0xff]
  %v20 = vld [vmem:[%s0 + $0x24] sm:$0xff]
  %v21 = vld [vmem:[%s0 + $0x2c] sm:$0xff]
  %v22 = vld [vmem:[%s0 + $0x34] sm:$0xf]
  %v23 = vld [vmem:[%s0 + $0x38] sm:$0xff]
  %v24 = vld [vmem:[%s0 + $0x40] sm:$0xff]
  %v25 = vld [vmem:[%s0 + $0x48] sm:$0xff]
  %v26 = vld [vmem:[%s0 + $0x50] sm:$0xf]
  %v27 = vld [vmem:[%s0 + $0x54] sm:$0xff]
  %v28 = vld [vmem:[%s0 + $0x5c] sm:$0xff]
  %v29 = vld [vmem:[%s0 + $0x64] sm:$0xff]
  %v30 = vld [vmem:[%s0 + $0x6c] sm:$0xf]
  %v31 = vld [vmem:[%s1] sm:$0xf]
  %v32 = vld [vmem:[%s1 + $0x4] sm:$0xf]
  %v33 = vld [vmem:[%s1 + $0x8] sm:$0xf]
  %v34 = vld [vmem:[%s1 + $0xc] sm:$0xf]
  %v35 = vld [vmem:[%s1 + $0x10] sm:$0xf]
  %v36 = vld [vmem:[%s1 + $0x14] sm:$0xf]
  %v37 = vld [vmem:[%s1 + $0x18] sm:$0xf]
  %v38 = vld [vmem:[%s1 + $0x1c] sm:$0xf]
  %v39 = vld [vmem:[%s1 + $0x20] sm:$0xf]
  %v40 = vld [vmem:[%s1 + $0x24] sm:$0xf]
  %v41 = vld [vmem:[%s1 + $0x28] sm:$0xf]
  %v42 = vld [vmem:[%s1 + $0x2c] sm:$0xf]
  %v43 = vld [vmem:[%s1 + $0x30] sm:$0xf]
  %v44 = vld [vmem:[%s1 + $0x34] sm:$0xf]
  %v45 = vld [vmem:[%s1 + $0x38] sm:$0xf]
  %v46 = vld [vmem:[%s1 + $0x3c] sm:$0xf]
  %v47 = vld [vmem:[%s1 + $0x40] sm:$0xf]
  %v48 = vld [vmem:[%s1 + $0x44] sm:$0xf]
  %v49 = vld [vmem:[%s1 + $0x48] sm:$0xf]
  %v50 = vld [vmem:[%s1 + $0x4c] sm:$0xf]
  %v51 = vld [vmem:[%s1 + $0x50] sm:$0xf]
  %v52 = vld [vmem:[%s1 + $0x54] sm:$0xf]
  %v53 = vld [vmem:[%s1 + $0x58] sm:$0xf]
  %v54 = vld [vmem:[%s1 + $0x5c] sm:$0xf]
  %v55 = vld [vmem:[%s1 + $0x60] sm:$0xf]
  %v56 = vld [vmem:[%s1 + $0x64] sm:$0xf]
  %v57 = vld [vmem:[%s1 + $0x68] sm:$0xf]
  %v58 = vld [vmem:[%s1 + $0x6c] sm:$0xf]
  %v59 = vld [vmem:[%s1 + $0x70] sm:$0xf]
  %v60 = vld [vmem:[%s1 + $0x74] sm:$0xf]
  %v61 = vld [vmem:[%s1 + $0x78] sm:$0xf]
  %v62 = vld [vmem:[%s1 + $0x7c] sm:$0xf]
  %v63 = vld [vmem:[%s1 + $0x80] sm:$0xf]
  %v64 = vld [vmem:[%s1 + $0x84] sm:$0xf]
  %v65 = vld [vmem:[%s1 + $0x88] sm:$0xf]
  %v66 = vld [vmem:[%s1 + $0x8c] sm:$0xf]
  %v67 = vld [vmem:[%s1 + $0x90] sm:$0xf]
  %v68 = vld [vmem:[%s1 + $0x94] sm:$0xf]
  %v69 = vld [vmem:[%s1 + $0x98] sm:$0xf]
  %v70 = vld [vmem:[%s1 + $0x9c] sm:$0xf]
  %v71 = vld [vmem:[%s1 + $0xa0] sm:$0xf]
  %v72 = vld [vmem:[%s1 + $0xa4] sm:$0xf]
  %v73 = vld [vmem:[%s1 + $0xa8] sm:$0xf]
  %v74 = vld [vmem:[%s1 + $0xac] sm:$0xf]
  %v75 = vld [vmem:[%s1 + $0xb0] sm:$0xf]
  %v76 = vld [vmem:[%s1 + $0xb4] sm:$0xf]
  %v77 = vld [vmem:[%s1 + $0xb8] sm:$0xf]
  %v78 = vld [vmem:[%s1 + $0xbc] sm:$0xf]
  %v79 = vld [vmem:[%s1 + $0xc0] sm:$0xf]
  %v80 = vld [vmem:[%s1 + $0xc4] sm:$0xf]
  %v81 = vld [vmem:[%s1 + $0xc8] sm:$0xf]
  %v82 = vld [vmem:[%s1 + $0xcc] sm:$0xf]
  %v83 = vld [vmem:[%s1 + $0xd0] sm:$0xf]
  %v84 = vld [vmem:[%s1 + $0xd4] sm:$0xf]
  %v85 = vld [vmem:[%s1 + $0xd8] sm:$0xf]
  %v86 = vld [vmem:[%s1 + $0xdc] sm:$0xf]
  %v87 = vld [vmem:[%s1 + $0xe0] sm:$0xf]
  %v88 = vld [vmem:[%s1 + $0xe4] sm:$0xf]
  %v89 = vld [vmem:[%s1 + $0xe8] sm:$0xf]
  %v90 = vld [vmem:[%s1 + $0xec] sm:$0xf]
  %v91 = vld [vmem:[%s1 + $0xf0] sm:$0xf]
  %v92 = vld [vmem:[%s1 + $0xf4] sm:$0xf]
  %v93 = vld [vmem:[%s1 + $0xf8] sm:$0xf]
  %v94 = vld [vmem:[%s1 + $0xfc] sm:$0xf]
  %v95 = vld [vmem:[%s1 + $0x100] sm:$0xf]
  %v96 = vld [vmem:[%s1 + $0x104] sm:$0xf]
  %v97 = vld [vmem:[%s1 + $0x108] sm:$0xf]
  %v98 = vld [vmem:[%s1 + $0x10c] sm:$0xf]
  %v99 = vld [vmem:[%s1 + $0x110] sm:$0xf]
  %v100 = vld [vmem:[%s1 + $0x114] sm:$0xf]
  %v101 = vld [vmem:[%s1 + $0x118] sm:$0xf]
  %v102 = vld [vmem:[%s1 + $0x11c] sm:$0xf]
  %v103 = vld [vmem:[%s1 + $0x120] sm:$0xf]
  %v104 = vld [vmem:[%s1 + $0x124] sm:$0xf]
  %v105 = vld [vmem:[%s1 + $0x128] sm:$0xf]
  %v106 = vld [vmem:[%s1 + $0x12c] sm:$0xf]
  %v107 = vld [vmem:[%s1 + $0x130] sm:$0xf]
  %v108 = vld [vmem:[%s1 + $0x134] sm:$0xf]
  %v109 = vld [vmem:[%s1 + $0x138] sm:$0xf]
  %v110 = vld [vmem:[%s1 + $0x13c] sm:$0xf]
  %v111 = vld [vmem:[%s1 + $0x140] sm:$0xf]
  %v112 = vld [vmem:[%s1 + $0x144] sm:$0xf]
  %v113 = vld [vmem:[%s1 + $0x148] sm:$0xf]
  %v114 = vld [vmem:[%s1 + $0x14c] sm:$0xf]
  %v115 = vld [vmem:[%s1 + $0x150] sm:$0xf]
  %v116 = vld [vmem:[%s1 + $0x154] sm:$0xf]
  %v117 = vld [vmem:[%s1 + $0x158] sm:$0xf]
  %v118 = vld [vmem:[%s1 + $0x15c] sm:$0xf]
  %v119 = vld [vmem:[%s1 + $0x160] sm:$0xf]
  %v120 = vld [vmem:[%s1 + $0x164] sm:$0xf]
  %v121 = vld [vmem:[%s1 + $0x168] sm:$0xf]
  %v122 = vld [vmem:[%s1 + $0x16c] sm:$0xf]
  %v123 = vld [vmem:[%s1 + $0x170] sm:$0xf]
  %v124 = vld [vmem:[%s1 + $0x174] sm:$0xf]
  %v125 = vld [vmem:[%s1 + $0x178] sm:$0xf]
  %v126 = vld [vmem:[%s1 + $0x17c] sm:$0xf]
  %v127 = vld [vmem:[%s1 + $0x180] sm:$0xf]
  %v128 = vld [vmem:[%s1 + $0x184] sm:$0xf]
  %v129 = vld [vmem:[%s1 + $0x188] sm:$0xf]
  %v130 = vld [vmem:[%s1 + $0x18c] sm:$0xf]
  %v131 = vld [vmem:[%s1 + $0x190] sm:$0xf]
  %v132 = vld [vmem:[%s1 + $0x194] sm:$0xf]
  %v133 = vld [vmem:[%s1 + $0x198] sm:$0xf]
  %v134 = vld [vmem:[%s1 + $0x19c] sm:$0xf]
  %v135 = vld [vmem:[%s1 + $0x1a0] sm:$0xf]
  %v136 = vld [vmem:[%s1 + $0x1a4] sm:$0xf]
  %v137 = vld [vmem:[%s1 + $0x1a8] sm:$0xf]
  %v138 = vld [vmem:[%s1 + $0x1ac] sm:$0xf]
  %v139 = vld [vmem:[%s1 + $0x1b0] sm:$0xf]
  %v140 = vld [vmem:[%s1 + $0x1b4] sm:$0xf]
  %v141 = vld [vmem:[%s1 + $0x1b8] sm:$0xf]
  %v142 = vld [vmem:[%s1 + $0x1bc] sm:$0xf]
  %v143 = vld [vmem:[%s2] sm:$0x1]
  %v145 = vlaneseq
  %v146 = vshrl.u32 %v145, 7
  %v147 = vsub.s32 0, %v146
  %v148 = vrot.slane %v143, %v147
  %v166 = vunpack.c.l.b16 %v15
  %v167 = vunpack.c.h.b16 %v15
  %v168 = vunpack.c.l.b16 %v16
  %v169 = vunpack.c.h.b16 %v16
  %v170 = vunpack.c.l.b16 %v17
  %v171 = vunpack.c.h.b16 %v17
  %v172 = vunpack.c.l.b16 %v18
  %v173 = vunpack.c.l.b16 %v19
  %v174 = vunpack.c.h.b16 %v19
  %v175 = vunpack.c.l.b16 %v20
  %v176 = vunpack.c.h.b16 %v20
  %v177 = vunpack.c.l.b16 %v21
  %v178 = vunpack.c.h.b16 %v21
  %v179 = vunpack.c.l.b16 %v22
  %v180 = vunpack.c.l.b16 %v23
  %v181 = vunpack.c.h.b16 %v23
  %v182 = vunpack.c.l.b16 %v24
  %v183 = vunpack.c.h.b16 %v24
  %v184 = vunpack.c.l.b16 %v25
  %v185 = vunpack.c.h.b16 %v25
  %v186 = vunpack.c.l.b16 %v26
  %v187 = vunpack.c.l.b16 %v27
  %v188 = vunpack.c.h.b16 %v27
  %v189 = vunpack.c.l.b16 %v28
  %v190 = vunpack.c.h.b16 %v28
  %v191 = vunpack.c.l.b16 %v29
  %v192 = vunpack.c.h.b16 %v29
  %v193 = vunpack.c.l.b16 %v30
  %v194 = vpack.c.b16 %v173, %v166
  %v195 = vpack.c.b16 %v174, %v167
  %v196 = vpack.c.b16 %v175, %v168
  %v197 = vpack.c.b16 %v176, %v169
  %v198 = vpack.c.b16 %v177, %v170
  %v199 = vpack.c.b16 %v178, %v171
  %v200 = vpack.c.b16 %v179, %v172
  %v201 = vpack.c.b16 %v187, %v180
  %v202 = vpack.c.b16 %v188, %v181
  %v203 = vpack.c.b16 %v189, %v182
  %v204 = vpack.c.b16 %v190, %v183
  %v205 = vpack.c.b16 %v191, %v184
  %v206 = vpack.c.b16 %v192, %v185
  %v207 = vpack.c.b16 %v193, %v186
  %v334 = vunpack.c.l.b16 %v31
  %v335 = vunpack.c.l.b16 %v32
  %v336 = vunpack.c.l.b16 %v33
  %v337 = vunpack.c.l.b16 %v34
  %v338 = vunpack.c.l.b16 %v35
  %v339 = vunpack.c.l.b16 %v36
  %v340 = vunpack.c.l.b16 %v37
  %v341 = vunpack.c.l.b16 %v38
  %v342 = vunpack.c.l.b16 %v39
  %v343 = vunpack.c.l.b16 %v40
  %v344 = vunpack.c.l.b16 %v41
  %v345 = vunpack.c.l.b16 %v42
  %v346 = vunpack.c.l.b16 %v43
  %v347 = vunpack.c.l.b16 %v44
  %v348 = vunpack.c.l.b16 %v45
  %v349 = vunpack.c.l.b16 %v46
  %v350 = vunpack.c.l.b16 %v47
  %v351 = vunpack.c.l.b16 %v48
  %v352 = vunpack.c.l.b16 %v49
  %v353 = vunpack.c.l.b16 %v50
  %v354 = vunpack.c.l.b16 %v51
  %v355 = vunpack.c.l.b16 %v52
  %v356 = vunpack.c.l.b16 %v53
  %v357 = vunpack.c.l.b16 %v54
  %v358 = vunpack.c.l.b16 %v55
  %v359 = vunpack.c.l.b16 %v56
  %v360 = vunpack.c.l.b16 %v57
  %v361 = vunpack.c.l.b16 %v58
  %v362 = vunpack.c.l.b16 %v59
  %v363 = vunpack.c.l.b16 %v60
  %v364 = vunpack.c.l.b16 %v61
  %v365 = vunpack.c.l.b16 %v62
  %v366 = vunpack.c.l.b16 %v63
  %v367 = vunpack.c.l.b16 %v64
  %v368 = vunpack.c.l.b16 %v65
  %v369 = vunpack.c.l.b16 %v66
  %v370 = vunpack.c.l.b16 %v67
  %v371 = vunpack.c.l.b16 %v68
  %v372 = vunpack.c.l.b16 %v69
  %v373 = vunpack.c.l.b16 %v70
  %v374 = vunpack.c.l.b16 %v71
  %v375 = vunpack.c.l.b16 %v72
  %v376 = vunpack.c.l.b16 %v73
  %v377 = vunpack.c.l.b16 %v74
  %v378 = vunpack.c.l.b16 %v75
  %v379 = vunpack.c.l.b16 %v76
  %v380 = vunpack.c.l.b16 %v77
  %v381 = vunpack.c.l.b16 %v78
  %v382 = vunpack.c.l.b16 %v79
  %v383 = vunpack.c.l.b16 %v80
  %v384 = vunpack.c.l.b16 %v81
  %v385 = vunpack.c.l.b16 %v82
  %v386 = vunpack.c.l.b16 %v83
  %v387 = vunpack.c.l.b16 %v84
  %v388 = vunpack.c.l.b16 %v85
  %v389 = vunpack.c.l.b16 %v86
  %v390 = vunpack.c.l.b16 %v87
  %v391 = vunpack.c.l.b16 %v88
  %v392 = vunpack.c.l.b16 %v89
  %v393 = vunpack.c.l.b16 %v90
  %v394 = vunpack.c.l.b16 %v91
  %v395 = vunpack.c.l.b16 %v92
  %v396 = vunpack.c.l.b16 %v93
  %v397 = vunpack.c.l.b16 %v94
  %v398 = vunpack.c.l.b16 %v95
  %v399 = vunpack.c.l.b16 %v96
  %v400 = vunpack.c.l.b16 %v97
  %v401 = vunpack.c.l.b16 %v98
  %v402 = vunpack.c.l.b16 %v99
  %v403 = vunpack.c.l.b16 %v100
  %v404 = vunpack.c.l.b16 %v101
  %v405 = vunpack.c.l.b16 %v102
  %v406 = vunpack.c.l.b16 %v103
  %v407 = vunpack.c.l.b16 %v104
  %v408 = vunpack.c.l.b16 %v105
  %v409 = vunpack.c.l.b16 %v106
  %v410 = vunpack.c.l.b16 %v107
  %v411 = vunpack.c.l.b16 %v108
  %v412 = vunpack.c.l.b16 %v109
  %v413 = vunpack.c.l.b16 %v110
  %v414 = vunpack.c.l.b16 %v111
  %v415 = vunpack.c.l.b16 %v112
  %v416 = vunpack.c.l.b16 %v113
  %v417 = vunpack.c.l.b16 %v114
  %v418 = vunpack.c.l.b16 %v115
  %v419 = vunpack.c.l.b16 %v116
  %v420 = vunpack.c.l.b16 %v117
  %v421 = vunpack.c.l.b16 %v118
  %v422 = vunpack.c.l.b16 %v119
  %v423 = vunpack.c.l.b16 %v120
  %v424 = vunpack.c.l.b16 %v121
  %v425 = vunpack.c.l.b16 %v122
  %v426 = vunpack.c.l.b16 %v123
  %v427 = vunpack.c.l.b16 %v124
  %v428 = vunpack.c.l.b16 %v125
  %v429 = vunpack.c.l.b16 %v126
  %v430 = vunpack.c.l.b16 %v127
  %v431 = vunpack.c.l.b16 %v128
  %v432 = vunpack.c.l.b16 %v129
  %v433 = vunpack.c.l.b16 %v130
  %v434 = vunpack.c.l.b16 %v131
  %v435 = vunpack.c.l.b16 %v132
  %v436 = vunpack.c.l.b16 %v133
  %v437 = vunpack.c.l.b16 %v134
  %v438 = vunpack.c.l.b16 %v135
  %v439 = vunpack.c.l.b16 %v136
  %v440 = vunpack.c.l.b16 %v137
  %v441 = vunpack.c.l.b16 %v138
  %v442 = vunpack.c.l.b16 %v139
  %v443 = vunpack.c.l.b16 %v140
  %v444 = vunpack.c.l.b16 %v141
  %v445 = vunpack.c.l.b16 %v142
  %v446 = vpack.c.b16 %v335, %v334
  %v447 = vpack.c.b16 %v337, %v336
  %v448 = vpack.c.b16 %v339, %v338
  %v449 = vpack.c.b16 %v341, %v340
  %v450 = vpack.c.b16 %v343, %v342
  %v451 = vpack.c.b16 %v345, %v344
  %v452 = vpack.c.b16 %v347, %v346
  %v453 = vpack.c.b16 %v349, %v348
  %v454 = vpack.c.b16 %v351, %v350
  %v455 = vpack.c.b16 %v353, %v352
  %v456 = vpack.c.b16 %v355, %v354
  %v457 = vpack.c.b16 %v357, %v356
  %v458 = vpack.c.b16 %v359, %v358
  %v459 = vpack.c.b16 %v361, %v360
  %v460 = vpack.c.b16 %v363, %v362
  %v461 = vpack.c.b16 %v365, %v364
  %v462 = vpack.c.b16 %v367, %v366
  %v463 = vpack.c.b16 %v369, %v368
  %v464 = vpack.c.b16 %v371, %v370
  %v465 = vpack.c.b16 %v373, %v372
  %v466 = vpack.c.b16 %v375, %v374
  %v467 = vpack.c.b16 %v377, %v376
  %v468 = vpack.c.b16 %v379, %v378
  %v469 = vpack.c.b16 %v381, %v380
  %v470 = vpack.c.b16 %v383, %v382
  %v471 = vpack.c.b16 %v385, %v384
  %v472 = vpack.c.b16 %v387, %v386
  %v473 = vpack.c.b16 %v389, %v388
  %v474 = vpack.c.b16 %v391, %v390
  %v475 = vpack.c.b16 %v393, %v392
  %v476 = vpack.c.b16 %v395, %v394
  %v477 = vpack.c.b16 %v397, %v396
  %v478 = vpack.c.b16 %v399, %v398
  %v479 = vpack.c.b16 %v401, %v400
  %v480 = vpack.c.b16 %v403, %v402
  %v481 = vpack.c.b16 %v405, %v404
  %v482 = vpack.c.b16 %v407, %v406
  %v483 = vpack.c.b16 %v409, %v408
  %v484 = vpack.c.b16 %v411, %v410
  %v485 = vpack.c.b16 %v413, %v412
  %v486 = vpack.c.b16 %v415, %v414
  %v487 = vpack.c.b16 %v417, %v416
  %v488 = vpack.c.b16 %v419, %v418
  %v489 = vpack.c.b16 %v421, %v420
  %v490 = vpack.c.b16 %v423, %v422
  %v491 = vpack.c.b16 %v425, %v424
  %v492 = vpack.c.b16 %v427, %v426
  %v493 = vpack.c.b16 %v429, %v428
  %v494 = vpack.c.b16 %v431, %v430
  %v495 = vpack.c.b16 %v433, %v432
  %v496 = vpack.c.b16 %v435, %v434
  %v497 = vpack.c.b16 %v437, %v436
  %v498 = vpack.c.b16 %v439, %v438
  %v499 = vpack.c.b16 %v441, %v440
  %v500 = vpack.c.b16 %v443, %v442
  %v501 = vpack.c.b16 %v445, %v444
  %558 = vmatprep.subr.bf16.mxu0 0
  %559 = vmatpush1.bf16.msra.mxu0 %v453
  %560 = vmatprep.subr.bf16.mxu0 0
  %561 = vmatpush1.bf16.msra.mxu0 %v452
  %562 = vmatprep.subr.bf16.mxu0 0
  %563 = vmatpush1.bf16.msra.mxu0 %v451
  %564 = vmatprep.subr.bf16.mxu0 0
  %565 = vmatpush1.bf16.msra.mxu0 %v450
  %566 = vmatprep.subr.bf16.mxu0 0
  %567 = vmatpush1.bf16.msra.mxu0 %v449
  %568 = vmatprep.subr.bf16.mxu0 0
  %569 = vmatpush1.bf16.msra.mxu0 %v448
  %570 = vmatprep.subr.bf16.mxu0 0
  %571 = vmatpush1.bf16.msra.mxu0 %v447
  %572 = vmatprep.subr.bf16.mxu0 0
  %573 = vmatpush1.bf16.msra.mxu0 %v446
  %574 = vmatprep.subr.bf16.mxu0 0
  %575 = vmatpush2.bf16.msra.mxu0 %v461
  %576 = vmatprep.subr.bf16.mxu0 0
  %577 = vmatpush2.bf16.msra.mxu0 %v460
  %578 = vmatprep.subr.bf16.mxu0 0
  %579 = vmatpush2.bf16.msra.mxu0 %v459
  %580 = vmatprep.subr.bf16.mxu0 0
  %581 = vmatpush2.bf16.msra.mxu0 %v458
  %582 = vmatprep.subr.bf16.mxu0 0
  %583 = vmatpush2.bf16.msra.mxu0 %v457
  %584 = vmatprep.subr.bf16.mxu0 0
  %585 = vmatpush2.bf16.msra.mxu0 %v456
  %586 = vmatprep.subr.bf16.mxu0 0
  %587 = vmatpush2.bf16.msra.mxu0 %v455
  %588 = vmatprep.subr.bf16.mxu0 0
  %589 = vmatpush2.bf16.msra.mxu0 %v454
  %590 = vmatprep.mubr.bf16.mxu0 %v195
  %591 = vmatmul.mubr.bf16.gmra.mxu0 %v194
  %v592 = vpop.f32.mrf.mxu0
  %v593 = vadd.f32 %v148, %v592
  %v594 = vpop.f32.mrf.mxu0
  %v595 = vpop.f32.mrf.mxu0
  %v596 = vadd.f32 %v148, %v595
  %v597 = vpop.f32.mrf.mxu0
  %598 = vmatprep.mubr.bf16.mxu0 %v202
  %599 = vmatmul.mubr.bf16.gmra.mxu0 %v201
  %v600 = vpop.f32.mrf.mxu0
  %v601 = vadd.f32 %v148, %v600
  %v602 = vpop.f32.mrf.mxu0
  %v603 = vpop.f32.mrf.mxu0
  %v604 = vadd.f32 %v148, %v603
  %v605 = vpop.f32.mrf.mxu0
  %606 = vdwg.mxu0
  %607 = vmatprep.subr.bf16.mxu0 0
  %608 = vmatpush1.bf16.msra.mxu0 %v469
  %609 = vmatprep.subr.bf16.mxu0 0
  %610 = vmatpush1.bf16.msra.mxu0 %v468
  %611 = vmatprep.subr.bf16.mxu0 0
  %612 = vmatpush1.bf16.msra.mxu0 %v467
  %613 = vmatprep.subr.bf16.mxu0 0
  %614 = vmatpush1.bf16.msra.mxu0 %v466
  %615 = vmatprep.subr.bf16.mxu0 0
  %616 = vmatpush1.bf16.msra.mxu0 %v465
  %617 = vmatprep.subr.bf16.mxu0 0
  %618 = vmatpush1.bf16.msra.mxu0 %v464
  %619 = vmatprep.subr.bf16.mxu0 0
  %620 = vmatpush1.bf16.msra.mxu0 %v463
  %621 = vmatprep.subr.bf16.mxu0 0
  %622 = vmatpush1.bf16.msra.mxu0 %v462
  %623 = vmatprep.subr.bf16.mxu0 0
  %624 = vmatpush2.bf16.msra.mxu0 %v477
  %625 = vmatprep.subr.bf16.mxu0 0
  %626 = vmatpush2.bf16.msra.mxu0 %v476
  %627 = vmatprep.subr.bf16.mxu0 0
  %628 = vmatpush2.bf16.msra.mxu0 %v475
  %629 = vmatprep.subr.bf16.mxu0 0
  %630 = vmatpush2.bf16.msra.mxu0 %v474
  %631 = vmatprep.subr.bf16.mxu0 0
  %632 = vmatpush2.bf16.msra.mxu0 %v473
  %633 = vmatprep.subr.bf16.mxu0 0
  %634 = vmatpush2.bf16.msra.mxu0 %v472
  %635 = vmatprep.subr.bf16.mxu0 0
  %636 = vmatpush2.bf16.msra.mxu0 %v471
  %637 = vmatprep.subr.bf16.mxu0 0
  %638 = vmatpush2.bf16.msra.mxu0 %v470
  %639 = vmatprep.mubr.bf16.mxu0 %v197
  %640 = vmatmul.mubr.bf16.gmra.mxu0 %v196
  %v641 = vpop.f32.mrf.mxu0
  %v642 = vadd.f32 %v593, %v641
  %v643 = vpop.f32.mrf.mxu0
  %v644 = vpop.f32.mrf.mxu0
  %v645 = vadd.f32 %v596, %v644
  %v646 = vpop.f32.mrf.mxu0
  %647 = vmatprep.mubr.bf16.mxu0 %v204
  %648 = vmatmul.mubr.bf16.gmra.mxu0 %v203
  %v649 = vpop.f32.mrf.mxu0
  %v650 = vadd.f32 %v601, %v649
  %v651 = vpop.f32.mrf.mxu0
  %v652 = vpop.f32.mrf.mxu0
  %v653 = vadd.f32 %v604, %v652
  %v654 = vpop.f32.mrf.mxu0
  %655 = vdwg.mxu0
  %656 = vmatprep.subr.bf16.mxu0 0
  %657 = vmatpush1.bf16.msra.mxu0 %v485
  %658 = vmatprep.subr.bf16.mxu0 0
  %659 = vmatpush1.bf16.msra.mxu0 %v484
  %660 = vmatprep.subr.bf16.mxu0 0
  %661 = vmatpush1.bf16.msra.mxu0 %v483
  %662 = vmatprep.subr.bf16.mxu0 0
  %663 = vmatpush1.bf16.msra.mxu0 %v482
  %664 = vmatprep.subr.bf16.mxu0 0
  %665 = vmatpush1.bf16.msra.mxu0 %v481
  %666 = vmatprep.subr.bf16.mxu0 0
  %667 = vmatpush1.bf16.msra.mxu0 %v480
  %668 = vmatprep.subr.bf16.mxu0 0
  %669 = vmatpush1.bf16.msra.mxu0 %v479
  %670 = vmatprep.subr.bf16.mxu0 0
  %671 = vmatpush1.bf16.msra.mxu0 %v478
  %672 = vmatprep.subr.bf16.mxu0 0
  %673 = vmatpush2.bf16.msra.mxu0 %v493
  %674 = vmatprep.subr.bf16.mxu0 0
  %675 = vmatpush2.bf16.msra.mxu0 %v492
  %676 = vmatprep.subr.bf16.mxu0 0
  %677 = vmatpush2.bf16.msra.mxu0 %v491
  %678 = vmatprep.subr.bf16.mxu0 0
  %679 = vmatpush2.bf16.msra.mxu0 %v490
  %680 = vmatprep.subr.bf16.mxu0 0
  %681 = vmatpush2.bf16.msra.mxu0 %v489
  %682 = vmatprep.subr.bf16.mxu0 0
  %683 = vmatpush2.bf16.msra.mxu0 %v488
  %684 = vmatprep.subr.bf16.mxu0 0
  %685 = vmatpush2.bf16.msra.mxu0 %v487
  %686 = vmatprep.subr.bf16.mxu0 0
  %687 = vmatpush2.bf16.msra.mxu0 %v486
  %688 = vmatprep.mubr.bf16.mxu0 %v199
  %689 = vmatmul.mubr.bf16.gmra.mxu0 %v198
  %v690 = vpop.f32.mrf.mxu0
  %v691 = vadd.f32 %v642, %v690
  %v692 = vpop.f32.mrf.mxu0
  %v693 = vpop.f32.mrf.mxu0
  %v694 = vadd.f32 %v645, %v693
  %v695 = vpop.f32.mrf.mxu0
  %696 = vmatprep.mubr.bf16.mxu0 %v206
  %697 = vmatmul.mubr.bf16.gmra.mxu0 %v205
  %v698 = vpop.f32.mrf.mxu0
  %v699 = vadd.f32 %v650, %v698
  %v700 = vpop.f32.mrf.mxu0
  %v701 = vpop.f32.mrf.mxu0
  %v702 = vadd.f32 %v653, %v701
  %v703 = vpop.f32.mrf.mxu0
  %704 = vdwg.mxu0
  %705 = vmatprep.subr.bf16.mxu0 0
  %706 = vmatpush1.bf16.msra.mxu0 %v501
  %707 = vmatprep.subr.bf16.mxu0 0
  %708 = vmatpush1.bf16.msra.mxu0 %v500
  %709 = vmatprep.subr.bf16.mxu0 0
  %710 = vmatpush1.bf16.msra.mxu0 %v499
  %711 = vmatprep.subr.bf16.mxu0 0
  %712 = vmatpush1.bf16.msra.mxu0 %v498
  %713 = vmatprep.subr.bf16.mxu0 0
  %714 = vmatpush1.bf16.msra.mxu0 %v497
  %715 = vmatprep.subr.bf16.mxu0 0
  %716 = vmatpush1.bf16.msra.mxu0 %v496
  %717 = vmatprep.subr.bf16.mxu0 0
  %718 = vmatpush1.bf16.msra.mxu0 %v495
  %719 = vmatprep.subr.bf16.mxu0 0
  %720 = vmatpush1.bf16.msra.mxu0 %v494
  %721 = vmatprep.subr.bf16.mxu0 0
  %722 = vmatpush2.bf16.msra.mxu0 0
  %723 = vmatprep.subr.bf16.mxu0 0
  %724 = vmatpush2.bf16.msra.mxu0 0
  %725 = vmatprep.subr.bf16.mxu0 0
  %726 = vmatpush2.bf16.msra.mxu0 0
  %727 = vmatprep.subr.bf16.mxu0 0
  %728 = vmatpush2.bf16.msra.mxu0 0
  %729 = vmatprep.subr.bf16.mxu0 0
  %730 = vmatpush2.bf16.msra.mxu0 0
  %731 = vmatprep.subr.bf16.mxu0 0
  %732 = vmatpush2.bf16.msra.mxu0 0
  %733 = vmatprep.subr.bf16.mxu0 0
  %734 = vmatpush2.bf16.msra.mxu0 0
  %735 = vmatprep.subr.bf16.mxu0 0
  %736 = vmatpush2.bf16.msra.mxu0 0
  %737 = vmatprep.mubr.bf16.mxu0 0
  %738 = vmatmul.mubr.bf16.gmra.mxu0 %v200
  %v739 = vpop.f32.mrf.mxu0
  %v740 = vadd.f32 %v691, %v739
  %v741 = vpop.f32.mrf.mxu0
  %v742 = vpop.f32.mrf.mxu0
  %v743 = vadd.f32 %v694, %v742
  %v744 = vpop.f32.mrf.mxu0
  %745 = vmatprep.mubr.bf16.mxu0 0
  %746 = vmatmul.mubr.bf16.gmra.mxu0 %v207
  %v747 = vpop.f32.mrf.mxu0
  %v748 = vadd.f32 %v699, %v747
  %v749 = vpop.f32.mrf.mxu0
  %v750 = vpop.f32.mrf.mxu0
  %v751 = vadd.f32 %v702, %v750
  %v752 = vpop.f32.mrf.mxu0
  %753 = vdwg.mxu0
  %754 = vst [vmem:[%s3] sm:$0xff] %v740
  %755 = vst [vmem:[%s3 + $0x8] sm:$0xff] %v743
  %756 = vst [vmem:[%s3 + $0x10] sm:$0xff] %v748
  %757 = vst [vmem:[%s3 + $0x18] sm:$0xff] %v751
  // Predicated region
  $region14: #{discriminator_s_forward.11} parent=0 // pred_check
    _
  $region15: #{discriminator_s_forward.11} parent=0 // pred_check_branch
    %759 = sbr.rel (0) target = $region17
  $region16: #{discriminator_s_forward.11} parent=0 // pred_region
    _
  $region17: #{discriminator_s_forward.11} parent=0 // pred_fallthru
    _
  // Predicated region
  $region18: #{discriminator_s_forward.11} parent=0 // pred_check
    _
  $region19: #{discriminator_s_forward.11} parent=0 // pred_check_branch
    %761 = sbr.rel (0) target = $region21
  $region20: #{discriminator_s_forward.11} parent=0 // pred_region
    _
  $region21: #{discriminator_s_forward.11} parent=0 // pred_fallthru
    _

</llo_original>
